<compile_context>
chip_gen: v6e
topology: v6e:2x2x1
jax: 0.10.0
libtpu: 0.0.40
codegen_flags: <defaults>
</compile_context>

<pallas_src>
import functools

import jax
import jax.numpy as jnp
from jax.experimental import pallas as pl
from jax.experimental.pallas import tpu as pltpu

_EPS = 1e-5
_DEPTH = 4                     # DenseBlock depth
_PAD_T = 2 ** (_DEPTH - 1)     # max causal time padding over the dilated layers (=8)


# ----------------------------------------------------------------------------
# The fused kernel (one grid step == one batch element)
# ----------------------------------------------------------------------------

def _mask_decoder_kernel(
    x_ref,                                   # (T, F, C)    input, channels-last
    w1_ref, w2_ref, w3_ref, w4_ref,          # (6, C*(i+1), C)  dense conv taps
    n1_ref, n2_ref, n3_ref, n4_ref,          # (4, C)  [conv bias, gamma, beta, prelu alpha]
    sub_w_ref,                               # (3, C, 2C)   SPConv taps
    sub_b_ref,                               # (1, 2C)      SPConv bias
    c1_w_ref,                                # (2C, 2)      conv1 (1,2) taps (even/odd packed)
    perm_ref,                                # (2F, 2F-1)   even/odd -> interleaved permutation
    alpha_ref,                               # (1, 2F-1)    final per-frequency PReLU alpha
    scal_ref,                                # SMEM (1, 6)  [c1_b, c1_g, c1_beta, c1_a, c2_w, c2_b]
    o_ref,                                   # (T, 2F-1)    output
    skip_ref,                                # VMEM scratch (T+PAD_T, F+2, 4C): padded skip stack
    *, C, T, F, eps,
):
    TF = T * F
    F2 = 2 * F - 1

    # Zero the padded skip stack (the zero top/side padding is re-used by every layer),
    # then place the input at the "oldest" end of the channel stack.
    skip_ref[...] = jnp.zeros_like(skip_ref)
    skip_ref[pl.ds(_PAD_T, T), pl.ds(1, F), pl.ds(3 * C, C)] = x_ref[...]

    w_refs = (w1_ref, w2_ref, w3_ref, w4_ref)
    n_refs = (n1_ref, n2_ref, n3_ref, n4_ref)

    # ---- DenseBlock: 4 dilated (2,3) convs + InstanceNorm(C) + PReLU(C), VMEM resident ----
    for i in range(_DEPTH):
        dil = 2 ** i
        cin = C * (i + 1)
        src = (_DEPTH - 1 - i) * C           # channel offset of this layer's input stack
        acc = jnp.zeros((TF, C), jnp.float32)
        for kt in range(2):
            row0 = _PAD_T - dil + kt * dil   # includes the causal zero padding rows
            for kf in range(3):
                slab = skip_ref[pl.ds(row0, T), pl.ds(kf, F), pl.ds(src, cin)]
                acc = acc + jnp.dot(slab.reshape(TF, cin),
                                    w_refs[i][kt * 3 + kf],
                                    preferred_element_type=jnp.float32)
        prm = n_refs[i][...]                                       # (4, C)
        y = acc + prm[0:1, :]                                      # conv bias
        mean = jnp.mean(y, axis=0, keepdims=True)                  # per-channel stats
        var = jnp.mean((y - mean) ** 2, axis=0, keepdims=True)     # two-pass, biased
        y = (y - mean) * jax.lax.rsqrt(var + eps) * prm[1:2, :] + prm[2:3, :]
        out = jnp.where(y > 0, y, prm[3:4, :] * y)                 # PReLU(C)
        # Append to the skip stack.  The final layer's output overwrites channels
        # [0, C) (no longer needed) so the SPConv below can re-read it freq-padded.
        dst = (_DEPTH - 2 - i) * C if i < _DEPTH - 1 else 0
        skip_ref[pl.ds(_PAD_T, T), pl.ds(1, F), pl.ds(dst, C)] = out.reshape(T, F, C)

    # ---- SPConvTranspose2d(C, C, (1,3), r=2): freq-padded conv to 2C channels ----
    acc = jnp.zeros((TF, 2 * C), jnp.float32)
    for kf in range(3):
        slab = skip_ref[pl.ds(_PAD_T, T), pl.ds(kf, F), pl.ds(0, C)]
        acc = acc + jnp.dot(slab.reshape(TF, C), sub_w_ref[kf],
                            preferred_element_type=jnp.float32)
    ysub = (acc + sub_b_ref[...]).reshape(T, F, 2 * C)   # cols [0,C)=r0, [C,2C)=r1

    # ---- conv1 (C->1, (1,2)) on the sub-pixel-shuffled map, via even/odd taps ----
    cw = c1_w_ref[...]                                   # (2C, 2)
    we = cw[:, 0].reshape(1, 1, 2 * C)                   # even-column taps [w0 ; w1]
    wo = cw[:, 1].reshape(1, 1, 2 * C)                   # odd-column taps  [w1 ; w0]
    ze = jnp.sum(ysub * we, axis=-1)                     # (T, F)
    ro = jnp.concatenate([ysub[:, 1:, :C], ysub[:, :F - 1, C:]], axis=-1)
    zo = jnp.sum(ro * wo, axis=-1)                       # (T, F-1)
    zo = jnp.concatenate([zo, jnp.zeros((T, 1), jnp.float32)], axis=-1)
    z = jnp.dot(jnp.concatenate([ze, zo], axis=-1), perm_ref[...],
                preferred_element_type=jnp.float32)      # (T, 2F-1), interleaved
    z = z + scal_ref[0, 0]                               # conv1 bias

    # ---- InstanceNorm(1) + PReLU(1) + conv2 (1x1) + PReLU(num_features) ----
    mean = jnp.mean(z, keepdims=True)
    var = jnp.mean((z - mean) ** 2, keepdims=True)
    zn = (z - mean) * jax.lax.rsqrt(var + eps) * scal_ref[0, 1] + scal_ref[0, 2]
    zp = jnp.where(zn > 0, zn, scal_ref[0, 3] * zn)      # PReLU(1)
    u = zp * scal_ref[0, 4] + scal_ref[0, 5]             # conv2 (1x1, 1->1)
    o_ref[...] = jnp.where(u > 0, u, alpha_ref[...] * u)  # PReLU over frequency


# ----------------------------------------------------------------------------
# Host-side parameter repacking (tiny, one-time layout glue)
# ----------------------------------------------------------------------------

def _prep_inputs(params, C, F):
    F2 = 2 * F - 1
    dense_w, dense_n = [], []
    for i, lp in enumerate(params["dense"]):
        cin = C * (i + 1)
        # taps[kt*3+kf, ci, co] = w[co, ci, kt, kf]
        dense_w.append(lp["w"].transpose(2, 3, 1, 0).reshape(6, cin, C).astype(jnp.float32))
        dense_n.append(jnp.stack([lp["b"], lp["gamma"], lp["beta"], lp["alpha"]],
                                 axis=0).astype(jnp.float32))                     # (4, C)
    sub_w = params["sub_w"][:, :, 0, :].transpose(2, 1, 0).astype(jnp.float32)    # (3, C, 2C)
    sub_b = params["sub_b"].reshape(1, 2 * C).astype(jnp.float32)

    c1w = params["c1_w"].reshape(C, 2).astype(jnp.float32)
    w0, w1 = c1w[:, 0], c1w[:, 1]
    cw = jnp.stack([jnp.concatenate([w0, w1]), jnp.concatenate([w1, w0])], axis=1)  # (2C, 2)

    # Permutation that interleaves [even | odd] columns into the (2F-1)-wide output.
    jj = jnp.arange(2 * F)[:, None]
    gg = jnp.arange(F2)[None, :]
    perm = (((gg % 2 == 0) & (jj == gg // 2))
            | ((gg % 2 == 1) & (jj == F + gg // 2))).astype(jnp.float32)           # (2F, F2)

    alpha = params["prelu_alpha"].reshape(1, F2).astype(jnp.float32)
    scal = jnp.concatenate([
        params["c1_b"].reshape(1), params["c1_gamma"].reshape(1),
        params["c1_beta"].reshape(1), params["c1_alpha"].reshape(1),
        params["c2_w"].reshape(1), params["c2_b"].reshape(1),
    ]).reshape(1, 6).astype(jnp.float32)
    return dense_w, dense_n, sub_w, sub_b, cw, perm, alpha, scal


# ----------------------------------------------------------------------------
# Forward pass
# ----------------------------------------------------------------------------

def mask_decoder_forward(params, x):
    B, C, T, F = x.shape
    F2 = 2 * F - 1
    assert params["c1_w"].shape[0] == 1, "fused tail assumes out_channel == 1"
    dense_w, dense_n, sub_w, sub_b, cw, perm, alpha, scal = _prep_inputs(params, C, F)
    x_tfc = jnp.transpose(x, (0, 2, 3, 1)).astype(jnp.float32)   # one-time NCHW -> T,F,C

    kernel = functools.partial(_mask_decoder_kernel, C=C, T=T, F=F, eps=_EPS)
    res3 = lambda b: (0, 0, 0)
    res2 = lambda b: (0, 0)
    out = pl.pallas_call(
        kernel,
        out_shape=jax.ShapeDtypeStruct((B, T, F2), jnp.float32),
        grid=(B,),
        in_specs=[
            pl.BlockSpec((None, T, F, C), lambda b: (b, 0, 0, 0)),
            pl.BlockSpec((6, 1 * C, C), res3),
            pl.BlockSpec((6, 2 * C, C), res3),
            pl.BlockSpec((6, 3 * C, C), res3),
            pl.BlockSpec((6, 4 * C, C), res3),
            pl.BlockSpec((4, C), res2),
            pl.BlockSpec((4, C), res2),
            pl.BlockSpec((4, C), res2),
            pl.BlockSpec((4, C), res2),
            pl.BlockSpec((3, C, 2 * C), res3),
            pl.BlockSpec((1, 2 * C), res2),
            pl.BlockSpec((2 * C, 2), res2),
            pl.BlockSpec((2 * F, F2), res2),
            pl.BlockSpec((1, F2), res2),
            pl.BlockSpec(memory_space=pltpu.MemorySpace.SMEM),   # 6 tail scalars
        ],
        out_specs=pl.BlockSpec((None, T, F2), lambda b: (b, 0, 0)),
        scratch_shapes=[pltpu.VMEM((T + _PAD_T, F + 2, _DEPTH * C), jnp.float32)],
        compiler_params=pltpu.CompilerParams(dimension_semantics=("parallel",)),
    )(x_tfc, *dense_w, *dense_n, sub_w, sub_b, cw, perm, alpha, scal)
    return out.reshape(B, 1, T, F2)


# ----------------------------------------------------------------------------
# Parameters (deterministic, synthetic) — same layout/semantics as before
# ----------------------------------------------------------------------------

def init_params(key, C, num_features, out_channel=1):
    keys = iter(jax.random.split(key, 20))
    p = {}
    dense = []
    for i in range(4):
        cin = C * (i + 1)
        dense.append(dict(
            w=0.1 * jax.random.normal(next(keys), (C, cin, 2, 3), jnp.float32),
            b=0.1 * jax.random.normal(next(keys), (C,), jnp.float32),
            gamma=jnp.ones((C,), jnp.float32),          # InstanceNorm2d affine defaults
            beta=jnp.zeros((C,), jnp.float32),
            alpha=jnp.full((C,), 0.25, jnp.float32),    # PReLU default init
        ))
    p["dense"] = dense
    p["sub_w"] = 0.1 * jax.random.normal(next(keys), (2 * C, C, 1, 3), jnp.float32)
    p["sub_b"] = 0.1 * jax.random.normal(next(keys), (2 * C,), jnp.float32)
    p["c1_w"] = 0.1 * jax.random.normal(next(keys), (out_channel, C, 1, 2), jnp.float32)
    p["c1_b"] = 0.1 * jax.random.normal(next(keys), (out_channel,), jnp.float32)
    p["c1_gamma"] = jnp.ones((out_channel,), jnp.float32)
    p["c1_beta"] = jnp.zeros((out_channel,), jnp.float32)
    p["c1_alpha"] = jnp.full((out_channel,), 0.25, jnp.float32)
    p["c2_w"] = 0.1 * jax.random.normal(next(keys), (out_channel, out_channel, 1, 1), jnp.float32)
    p["c2_b"] = 0.1 * jax.random.normal(next(keys), (out_channel,), jnp.float32)
    p["prelu_alpha"] = jnp.full((num_features,), -0.25, jnp.float32)  # nn.PReLU(num_features, init=-0.25)
    return p


# ----------------------------------------------------------------------------
# Pure-JAX reference (PyTorch semantics) for correctness checking
# ----------------------------------------------------------------------------

def _reference_forward(params, x, eps=_EPS):
    hi = jax.lax.Precision.HIGHEST

    def conv(v, w, b, dil, pad):
        y = jax.lax.conv_general_dilated(
            v, w, window_strides=(1, 1), padding=pad, rhs_dilation=dil,
            dimension_numbers=("NCHW", "OIHW", "NCHW"), precision=hi)
        return y + b.reshape(1, -1, 1, 1)

    def inorm(y, g, bt):
        m = y.mean(axis=(2, 3), keepdims=True)
        v = ((y - m) ** 2).mean(axis=(2, 3), keepdims=True)
        return (y - m) / jnp.sqrt(v + eps) * g.reshape(1, -1, 1, 1) + bt.reshape(1, -1, 1, 1)

    def prelu(y, a):
        a = a.reshape(1, -1, 1, 1)
        return jnp.where(y > 0, y, a * y)

    B, C, T, F = x.shape
    skip, out = x, x
    for i, lp in enumerate(params["dense"]):
        dil = 2 ** i
        y = conv(skip, lp["w"], lp["b"], (dil, 1), [(dil, 0), (1, 1)])
        out = prelu(inorm(y, lp["gamma"], lp["beta"]), lp["alpha"])
        skip = jnp.concatenate([out, skip], axis=1)
    y = conv(out, params["sub_w"], params["sub_b"], (1, 1), [(0, 0), (1, 1)])
    y = y.reshape(B, 2, C, T, F).transpose(0, 2, 3, 4, 1).reshape(B, C, T, 2 * F)
    z = conv(y, params["c1_w"], params["c1_b"], (1, 1), [(0, 0), (0, 0)])
    z = prelu(inorm(z, params["c1_gamma"], params["c1_beta"]), params["c1_alpha"])
    u = conv(z, params["c2_w"], params["c2_b"], (1, 1), [(0, 0), (0, 0)])
    u = u[:, 0].transpose(0, 2, 1)                     # (B, F2, T)
    a = params["prelu_alpha"].reshape(1, -1, 1)
    u = jnp.where(u > 0, u, a * u)
    return u.transpose(0, 2, 1)[:, None]               # (B, 1, T, F2)


# ----------------------------------------------------------------------------

if __name__ == "__main__":
    B, C, T, F = 2, 8, 4, 8            # batch, num_channel, time, freq
    num_features = 2 * F - 1           # freq axis size seen by the final PReLU

    key = jax.random.PRNGKey(0)
    kx, kp = jax.random.split(key)
    x = jax.random.normal(kx, (B, C, T, F), jnp.float32)
    params = init_params(kp, C, num_features, out_channel=1)

    fwd = jax.jit(lambda inp: mask_decoder_forward(params, inp))
    out = jax.block_until_ready(fwd(x))

    assert out.shape == (B, 1, T, num_features), out.shape
    assert out.dtype == jnp.float32
    assert bool(jnp.all(jnp.isfinite(out)))

    ref = _reference_forward(params, x)
    max_err = float(jnp.max(jnp.abs(out - ref)))
    assert bool(jnp.allclose(out, ref, atol=2e-3, rtol=2e-3)), max_err
    print("KERNEL_OK")
</pallas_src>

<mosaic_0001>
module attributes {stable_mosaic.version = 11 : i64} {
  func.func @_mask_decoder_kernel(%arg0: i32, %arg1: memref<1x4x8x8xf32, #tpu.memory_space<vmem>>, %arg2: memref<6x8x8xf32, #tpu.memory_space<vmem>>, %arg3: memref<6x16x8xf32, #tpu.memory_space<vmem>>, %arg4: memref<6x24x8xf32, #tpu.memory_space<vmem>>, %arg5: memref<6x32x8xf32, #tpu.memory_space<vmem>>, %arg6: memref<4x8xf32, #tpu.memory_space<vmem>>, %arg7: memref<4x8xf32, #tpu.memory_space<vmem>>, %arg8: memref<4x8xf32, #tpu.memory_space<vmem>>, %arg9: memref<4x8xf32, #tpu.memory_space<vmem>>, %arg10: memref<3x8x16xf32, #tpu.memory_space<vmem>>, %arg11: memref<1x16xf32, #tpu.memory_space<vmem>>, %arg12: memref<16x2xf32, #tpu.memory_space<vmem>>, %arg13: memref<16x15xf32, #tpu.memory_space<vmem>>, %arg14: memref<1x15xf32, #tpu.memory_space<vmem>>, %arg15: memref<1x6xf32, #tpu.memory_space<smem>>, %arg16: memref<1x4x15xf32, #tpu.memory_space<vmem>>, %arg17: memref<12x10x32xf32, #tpu.memory_space<vmem>>) attributes {dimension_semantics = [#tpu.dimension_semantics<parallel>], iteration_bounds = array<i64: 2>, scalar_prefetch = 0 : i64, scratch_operands = 1 : i64, tpu.core_type = #tpu.core_type<tc>, window_params = [{transform_indices = @transform_0, window_bounds = array<i64: 1, 4, 8, 8>}, {pipeline_mode = #tpu.pipeline_mode<synchronous>, transform_indices = @transform_1, window_bounds = array<i64: 6, 8, 8>}, {pipeline_mode = #tpu.pipeline_mode<synchronous>, transform_indices = @transform_2, window_bounds = array<i64: 6, 16, 8>}, {pipeline_mode = #tpu.pipeline_mode<synchronous>, transform_indices = @transform_3, window_bounds = array<i64: 6, 24, 8>}, {pipeline_mode = #tpu.pipeline_mode<synchronous>, transform_indices = @transform_4, window_bounds = array<i64: 6, 32, 8>}, {pipeline_mode = #tpu.pipeline_mode<synchronous>, transform_indices = @transform_5, window_bounds = array<i64: 4, 8>}, {pipeline_mode = #tpu.pipeline_mode<synchronous>, transform_indices = @transform_6, window_bounds = array<i64: 4, 8>}, {pipeline_mode = #tpu.pipeline_mode<synchronous>, transform_indices = @transform_7, window_bounds = array<i64: 4, 8>}, {pipeline_mode = #tpu.pipeline_mode<synchronous>, transform_indices = @transform_8, window_bounds = array<i64: 4, 8>}, {pipeline_mode = #tpu.pipeline_mode<synchronous>, transform_indices = @transform_9, window_bounds = array<i64: 3, 8, 16>}, {pipeline_mode = #tpu.pipeline_mode<synchronous>, transform_indices = @transform_10, window_bounds = array<i64: 1, 16>}, {pipeline_mode = #tpu.pipeline_mode<synchronous>, transform_indices = @transform_11, window_bounds = array<i64: 16, 2>}, {pipeline_mode = #tpu.pipeline_mode<synchronous>, transform_indices = @transform_12, window_bounds = array<i64: 16, 15>}, {pipeline_mode = #tpu.pipeline_mode<synchronous>, transform_indices = @transform_13, window_bounds = array<i64: 1, 15>}, {transform_indices = @transform_14, window_bounds = array<i64: 1, 6>}, {transform_indices = @transform_15, window_bounds = array<i64: 1, 4, 15>}]} {
    %cst = arith.constant 0.000000e+00 : f32
    %0 = vector.broadcast %cst : f32 to vector<12x10x32xf32>
    %c0 = arith.constant 0 : index
    %c0_0 = arith.constant 0 : index
    %c0_1 = arith.constant 0 : index
    %1 = vector.load %arg17[%c0, %c0_0, %c0_1] : memref<12x10x32xf32, #tpu.memory_space<vmem>>, vector<12x10x32xf32>
    tpu.vector_store %arg17[%c0, %c0_0, %c0_1], %0 {strides = array<i32>} : memref<12x10x32xf32, #tpu.memory_space<vmem>>, vector<12x10x32xf32>,
    %c0_2 = arith.constant 0 : index
    %c0_3 = arith.constant 0 : index
    %c0_4 = arith.constant 0 : index
    %c0_5 = arith.constant 0 : index
    %2 = vector.load %arg1[%c0_2, %c0_3, %c0_4, %c0_5] : memref<1x4x8x8xf32, #tpu.memory_space<vmem>>, vector<1x4x8x8xf32>
    %3 = vector.shape_cast %2 : vector<1x4x8x8xf32> to vector<4x8x8xf32>
    %c8 = arith.constant 8 : index
    %c1 = arith.constant 1 : index
    %c24 = arith.constant 24 : index
    %4 = vector.load %arg17[%c8, %c1, %c24] : memref<12x10x32xf32, #tpu.memory_space<vmem>>, vector<4x8x8xf32>
    tpu.vector_store %arg17[%c8, %c1, %c24], %3 {strides = array<i32>} : memref<12x10x32xf32, #tpu.memory_space<vmem>>, vector<4x8x8xf32>,
    %cst_6 = arith.constant 0.000000e+00 : f32
    %5 = vector.broadcast %cst_6 : f32 to vector<32x8xf32>
    %c7 = arith.constant 7 : index
    %c0_7 = arith.constant 0 : index
    %c24_8 = arith.constant 24 : index
    %6 = vector.load %arg17[%c7, %c0_7, %c24_8] : memref<12x10x32xf32, #tpu.memory_space<vmem>>, vector<4x8x8xf32>
    %7 = vector.shape_cast %6 : vector<4x8x8xf32> to vector<32x8xf32>
    %c0_9 = arith.constant 0 : index
    %c0_10 = arith.constant 0 : index
    %c0_11 = arith.constant 0 : index
    %8 = vector.load %arg2[%c0_9, %c0_10, %c0_11] : memref<6x8x8xf32, #tpu.memory_space<vmem>>, vector<1x8x8xf32>
    %9 = vector.shape_cast %8 : vector<1x8x8xf32> to vector<8x8xf32>
    %cst_12 = arith.constant dense<0.000000e+00> : vector<32x8xf32>
    %10 = tpu.matmul %7, %9, %cst_12 {dimension_numbers = #tpu.dot_dimension_numbers<[1], [0], [0], [1], [0, 0, 1, 1], [], []>} : vector<32x8xf32>, vector<8x8xf32>, vector<32x8xf32> -> vector<32x8xf32>
    %11 = arith.addf %5, %10 : vector<32x8xf32>
    %c7_13 = arith.constant 7 : index
    %c1_14 = arith.constant 1 : index
    %c24_15 = arith.constant 24 : index
    %12 = vector.load %arg17[%c7_13, %c1_14, %c24_15] : memref<12x10x32xf32, #tpu.memory_space<vmem>>, vector<4x8x8xf32>
    %13 = vector.shape_cast %12 : vector<4x8x8xf32> to vector<32x8xf32>
    %c1_16 = arith.constant 1 : index
    %c0_17 = arith.constant 0 : index
    %c0_18 = arith.constant 0 : index
    %14 = vector.load %arg2[%c1_16, %c0_17, %c0_18] : memref<6x8x8xf32, #tpu.memory_space<vmem>>, vector<1x8x8xf32>
    %15 = vector.shape_cast %14 : vector<1x8x8xf32> to vector<8x8xf32>
    %cst_19 = arith.constant dense<0.000000e+00> : vector<32x8xf32>
    %16 = tpu.matmul %13, %15, %cst_19 {dimension_numbers = #tpu.dot_dimension_numbers<[1], [0], [0], [1], [0, 0, 1, 1], [], []>} : vector<32x8xf32>, vector<8x8xf32>, vector<32x8xf32> -> vector<32x8xf32>
    %17 = arith.addf %11, %16 : vector<32x8xf32>
    %c7_20 = arith.constant 7 : index
    %c2 = arith.constant 2 : index
    %c24_21 = arith.constant 24 : index
    %18 = vector.load %arg17[%c7_20, %c2, %c24_21] : memref<12x10x32xf32, #tpu.memory_space<vmem>>, vector<4x8x8xf32>
    %19 = vector.shape_cast %18 : vector<4x8x8xf32> to vector<32x8xf32>
    %c2_22 = arith.constant 2 : index
    %c0_23 = arith.constant 0 : index
    %c0_24 = arith.constant 0 : index
    %20 = vector.load %arg2[%c2_22, %c0_23, %c0_24] : memref<6x8x8xf32, #tpu.memory_space<vmem>>, vector<1x8x8xf32>
    %21 = vector.shape_cast %20 : vector<1x8x8xf32> to vector<8x8xf32>
    %cst_25 = arith.constant dense<0.000000e+00> : vector<32x8xf32>
    %22 = tpu.matmul %19, %21, %cst_25 {dimension_numbers = #tpu.dot_dimension_numbers<[1], [0], [0], [1], [0, 0, 1, 1], [], []>} : vector<32x8xf32>, vector<8x8xf32>, vector<32x8xf32> -> vector<32x8xf32>
    %23 = arith.addf %17, %22 : vector<32x8xf32>
    %c8_26 = arith.constant 8 : index
    %c0_27 = arith.constant 0 : index
    %c24_28 = arith.constant 24 : index
    %24 = vector.load %arg17[%c8_26, %c0_27, %c24_28] : memref<12x10x32xf32, #tpu.memory_space<vmem>>, vector<4x8x8xf32>
    %25 = vector.shape_cast %24 : vector<4x8x8xf32> to vector<32x8xf32>
    %c3 = arith.constant 3 : index
    %c0_29 = arith.constant 0 : index
    %c0_30 = arith.constant 0 : index
    %26 = vector.load %arg2[%c3, %c0_29, %c0_30] : memref<6x8x8xf32, #tpu.memory_space<vmem>>, vector<1x8x8xf32>
    %27 = vector.shape_cast %26 : vector<1x8x8xf32> to vector<8x8xf32>
    %cst_31 = arith.constant dense<0.000000e+00> : vector<32x8xf32>
    %28 = tpu.matmul %25, %27, %cst_31 {dimension_numbers = #tpu.dot_dimension_numbers<[1], [0], [0], [1], [0, 0, 1, 1], [], []>} : vector<32x8xf32>, vector<8x8xf32>, vector<32x8xf32> -> vector<32x8xf32>
    %29 = arith.addf %23, %28 : vector<32x8xf32>
    %c8_32 = arith.constant 8 : index
    %c1_33 = arith.constant 1 : index
    %c24_34 = arith.constant 24 : index
    %30 = vector.load %arg17[%c8_32, %c1_33, %c24_34] : memref<12x10x32xf32, #tpu.memory_space<vmem>>, vector<4x8x8xf32>
    %31 = vector.shape_cast %30 : vector<4x8x8xf32> to vector<32x8xf32>
    %c4 = arith.constant 4 : index
    %c0_35 = arith.constant 0 : index
    %c0_36 = arith.constant 0 : index
    %32 = vector.load %arg2[%c4, %c0_35, %c0_36] : memref<6x8x8xf32, #tpu.memory_space<vmem>>, vector<1x8x8xf32>
    %33 = vector.shape_cast %32 : vector<1x8x8xf32> to vector<8x8xf32>
    %cst_37 = arith.constant dense<0.000000e+00> : vector<32x8xf32>
    %34 = tpu.matmul %31, %33, %cst_37 {dimension_numbers = #tpu.dot_dimension_numbers<[1], [0], [0], [1], [0, 0, 1, 1], [], []>} : vector<32x8xf32>, vector<8x8xf32>, vector<32x8xf32> -> vector<32x8xf32>
    %35 = arith.addf %29, %34 : vector<32x8xf32>
    %c8_38 = arith.constant 8 : index
    %c2_39 = arith.constant 2 : index
    %c24_40 = arith.constant 24 : index
    %36 = vector.load %arg17[%c8_38, %c2_39, %c24_40] : memref<12x10x32xf32, #tpu.memory_space<vmem>>, vector<4x8x8xf32>
    %37 = vector.shape_cast %36 : vector<4x8x8xf32> to vector<32x8xf32>
    %c5 = arith.constant 5 : index
    %c0_41 = arith.constant 0 : index
    %c0_42 = arith.constant 0 : index
    %38 = vector.load %arg2[%c5, %c0_41, %c0_42] : memref<6x8x8xf32, #tpu.memory_space<vmem>>, vector<1x8x8xf32>
    %39 = vector.shape_cast %38 : vector<1x8x8xf32> to vector<8x8xf32>
    %cst_43 = arith.constant dense<0.000000e+00> : vector<32x8xf32>
    %40 = tpu.matmul %37, %39, %cst_43 {dimension_numbers = #tpu.dot_dimension_numbers<[1], [0], [0], [1], [0, 0, 1, 1], [], []>} : vector<32x8xf32>, vector<8x8xf32>, vector<32x8xf32> -> vector<32x8xf32>
    %41 = arith.addf %35, %40 : vector<32x8xf32>
    %c0_44 = arith.constant 0 : index
    %c0_45 = arith.constant 0 : index
    %42 = vector.load %arg6[%c0_44, %c0_45] : memref<4x8xf32, #tpu.memory_space<vmem>>, vector<4x8xf32>
    %43 = vector.extract_strided_slice %42 {offsets = [0, 0], sizes = [1, 8], strides = [1, 1]} : vector<4x8xf32> to vector<1x8xf32>
    %44 = vector.broadcast %43 : vector<1x8xf32> to vector<32x8xf32>
    %45 = arith.addf %41, %44 : vector<32x8xf32>
    %cst_46 = arith.constant dense<0.000000e+00> : vector<8xf32>
    %46 = vector.multi_reduction <add>, %45, %cst_46 [0] : vector<32x8xf32> to vector<8xf32>
    %47 = vector.shape_cast %46 : vector<8xf32> to vector<1x8xf32>
    %cst_47 = arith.constant 3.200000e+01 : f32
    %48 = vector.broadcast %cst_47 : f32 to vector<1x8xf32>
    %49 = arith.divf %47, %48 : vector<1x8xf32>
    %50 = vector.broadcast %49 : vector<1x8xf32> to vector<32x8xf32>
    %51 = arith.subf %45, %50 : vector<32x8xf32>
    %52 = arith.mulf %51, %51 : vector<32x8xf32>
    %cst_48 = arith.constant dense<0.000000e+00> : vector<8xf32>
    %53 = vector.multi_reduction <add>, %52, %cst_48 [0] : vector<32x8xf32> to vector<8xf32>
    %54 = vector.shape_cast %53 : vector<8xf32> to vector<1x8xf32>
    %cst_49 = arith.constant 3.200000e+01 : f32
    %55 = vector.broadcast %cst_49 : f32 to vector<1x8xf32>
    %56 = arith.divf %54, %55 : vector<1x8xf32>
    %57 = vector.broadcast %49 : vector<1x8xf32> to vector<32x8xf32>
    %58 = arith.subf %45, %57 : vector<32x8xf32>
    %cst_50 = arith.constant 9.99999974E-6 : f32
    %59 = vector.broadcast %cst_50 : f32 to vector<1x8xf32>
    %60 = arith.addf %56, %59 : vector<1x8xf32>
    %61 = math.rsqrt %60 : vector<1x8xf32>
    %62 = vector.broadcast %61 : vector<1x8xf32> to vector<32x8xf32>
    %63 = arith.mulf %58, %62 : vector<32x8xf32>
    %64 = vector.extract_strided_slice %42 {offsets = [1, 0], sizes = [1, 8], strides = [1, 1]} : vector<4x8xf32> to vector<1x8xf32>
    %65 = vector.broadcast %64 : vector<1x8xf32> to vector<32x8xf32>
    %66 = arith.mulf %63, %65 : vector<32x8xf32>
    %67 = vector.extract_strided_slice %42 {offsets = [2, 0], sizes = [1, 8], strides = [1, 1]} : vector<4x8xf32> to vector<1x8xf32>
    %68 = vector.broadcast %67 : vector<1x8xf32> to vector<32x8xf32>
    %69 = arith.addf %66, %68 : vector<32x8xf32>
    %cst_51 = arith.constant 0.000000e+00 : f32
    %70 = vector.broadcast %cst_51 : f32 to vector<32x8xf32>
    %71 = arith.cmpf ogt, %69, %70 : vector<32x8xf32>
    %72 = vector.extract_strided_slice %42 {offsets = [3, 0], sizes = [1, 8], strides = [1, 1]} : vector<4x8xf32> to vector<1x8xf32>
    %73 = vector.broadcast %72 : vector<1x8xf32> to vector<32x8xf32>
    %74 = arith.mulf %73, %69 : vector<32x8xf32>
    %75 = arith.select %71, %69, %74 : vector<32x8xi1>, vector<32x8xf32>
    %76 = vector.shape_cast %75 : vector<32x8xf32> to vector<4x8x8xf32>
    %c8_52 = arith.constant 8 : index
    %c1_53 = arith.constant 1 : index
    %c16 = arith.constant 16 : index
    %77 = vector.load %arg17[%c8_52, %c1_53, %c16] : memref<12x10x32xf32, #tpu.memory_space<vmem>>, vector<4x8x8xf32>
    tpu.vector_store %arg17[%c8_52, %c1_53, %c16], %76 {strides = array<i32>} : memref<12x10x32xf32, #tpu.memory_space<vmem>>, vector<4x8x8xf32>,
    %cst_54 = arith.constant 0.000000e+00 : f32
    %78 = vector.broadcast %cst_54 : f32 to vector<32x8xf32>
    %c6 = arith.constant 6 : index
    %c0_55 = arith.constant 0 : index
    %c16_56 = arith.constant 16 : index
    %79 = vector.load %arg17[%c6, %c0_55, %c16_56] : memref<12x10x32xf32, #tpu.memory_space<vmem>>, vector<4x8x16xf32>
    %80 = vector.shape_cast %79 : vector<4x8x16xf32> to vector<32x16xf32>
    %c0_57 = arith.constant 0 : index
    %c0_58 = arith.constant 0 : index
    %c0_59 = arith.constant 0 : index
    %81 = vector.load %arg3[%c0_57, %c0_58, %c0_59] : memref<6x16x8xf32, #tpu.memory_space<vmem>>, vector<1x16x8xf32>
    %82 = vector.shape_cast %81 : vector<1x16x8xf32> to vector<16x8xf32>
    %cst_60 = arith.constant dense<0.000000e+00> : vector<32x8xf32>
    %83 = tpu.matmul %80, %82, %cst_60 {dimension_numbers = #tpu.dot_dimension_numbers<[1], [0], [0], [1], [0, 0, 1, 1], [], []>} : vector<32x16xf32>, vector<16x8xf32>, vector<32x8xf32> -> vector<32x8xf32>
    %84 = arith.addf %78, %83 : vector<32x8xf32>
    %c6_61 = arith.constant 6 : index
    %c1_62 = arith.constant 1 : index
    %c16_63 = arith.constant 16 : index
    %85 = vector.load %arg17[%c6_61, %c1_62, %c16_63] : memref<12x10x32xf32, #tpu.memory_space<vmem>>, vector<4x8x16xf32>
    %86 = vector.shape_cast %85 : vector<4x8x16xf32> to vector<32x16xf32>
    %c1_64 = arith.constant 1 : index
    %c0_65 = arith.constant 0 : index
    %c0_66 = arith.constant 0 : index
    %87 = vector.load %arg3[%c1_64, %c0_65, %c0_66] : memref<6x16x8xf32, #tpu.memory_space<vmem>>, vector<1x16x8xf32>
    %88 = vector.shape_cast %87 : vector<1x16x8xf32> to vector<16x8xf32>
    %cst_67 = arith.constant dense<0.000000e+00> : vector<32x8xf32>
    %89 = tpu.matmul %86, %88, %cst_67 {dimension_numbers = #tpu.dot_dimension_numbers<[1], [0], [0], [1], [0, 0, 1, 1], [], []>} : vector<32x16xf32>, vector<16x8xf32>, vector<32x8xf32> -> vector<32x8xf32>
    %90 = arith.addf %84, %89 : vector<32x8xf32>
    %c6_68 = arith.constant 6 : index
    %c2_69 = arith.constant 2 : index
    %c16_70 = arith.constant 16 : index
    %91 = vector.load %arg17[%c6_68, %c2_69, %c16_70] : memref<12x10x32xf32, #tpu.memory_space<vmem>>, vector<4x8x16xf32>
    %92 = vector.shape_cast %91 : vector<4x8x16xf32> to vector<32x16xf32>
    %c2_71 = arith.constant 2 : index
    %c0_72 = arith.constant 0 : index
    %c0_73 = arith.constant 0 : index
    %93 = vector.load %arg3[%c2_71, %c0_72, %c0_73] : memref<6x16x8xf32, #tpu.memory_space<vmem>>, vector<1x16x8xf32>
    %94 = vector.shape_cast %93 : vector<1x16x8xf32> to vector<16x8xf32>
    %cst_74 = arith.constant dense<0.000000e+00> : vector<32x8xf32>
    %95 = tpu.matmul %92, %94, %cst_74 {dimension_numbers = #tpu.dot_dimension_numbers<[1], [0], [0], [1], [0, 0, 1, 1], [], []>} : vector<32x16xf32>, vector<16x8xf32>, vector<32x8xf32> -> vector<32x8xf32>
    %96 = arith.addf %90, %95 : vector<32x8xf32>
    %c8_75 = arith.constant 8 : index
    %c0_76 = arith.constant 0 : index
    %c16_77 = arith.constant 16 : index
    %97 = vector.load %arg17[%c8_75, %c0_76, %c16_77] : memref<12x10x32xf32, #tpu.memory_space<vmem>>, vector<4x8x16xf32>
    %98 = vector.shape_cast %97 : vector<4x8x16xf32> to vector<32x16xf32>
    %c3_78 = arith.constant 3 : index
    %c0_79 = arith.constant 0 : index
    %c0_80 = arith.constant 0 : index
    %99 = vector.load %arg3[%c3_78, %c0_79, %c0_80] : memref<6x16x8xf32, #tpu.memory_space<vmem>>, vector<1x16x8xf32>
    %100 = vector.shape_cast %99 : vector<1x16x8xf32> to vector<16x8xf32>
    %cst_81 = arith.constant dense<0.000000e+00> : vector<32x8xf32>
    %101 = tpu.matmul %98, %100, %cst_81 {dimension_numbers = #tpu.dot_dimension_numbers<[1], [0], [0], [1], [0, 0, 1, 1], [], []>} : vector<32x16xf32>, vector<16x8xf32>, vector<32x8xf32> -> vector<32x8xf32>
    %102 = arith.addf %96, %101 : vector<32x8xf32>
    %c8_82 = arith.constant 8 : index
    %c1_83 = arith.constant 1 : index
    %c16_84 = arith.constant 16 : index
    %103 = vector.load %arg17[%c8_82, %c1_83, %c16_84] : memref<12x10x32xf32, #tpu.memory_space<vmem>>, vector<4x8x16xf32>
    %104 = vector.shape_cast %103 : vector<4x8x16xf32> to vector<32x16xf32>
    %c4_85 = arith.constant 4 : index
    %c0_86 = arith.constant 0 : index
    %c0_87 = arith.constant 0 : index
    %105 = vector.load %arg3[%c4_85, %c0_86, %c0_87] : memref<6x16x8xf32, #tpu.memory_space<vmem>>, vector<1x16x8xf32>
    %106 = vector.shape_cast %105 : vector<1x16x8xf32> to vector<16x8xf32>
    %cst_88 = arith.constant dense<0.000000e+00> : vector<32x8xf32>
    %107 = tpu.matmul %104, %106, %cst_88 {dimension_numbers = #tpu.dot_dimension_numbers<[1], [0], [0], [1], [0, 0, 1, 1], [], []>} : vector<32x16xf32>, vector<16x8xf32>, vector<32x8xf32> -> vector<32x8xf32>
    %108 = arith.addf %102, %107 : vector<32x8xf32>
    %c8_89 = arith.constant 8 : index
    %c2_90 = arith.constant 2 : index
    %c16_91 = arith.constant 16 : index
    %109 = vector.load %arg17[%c8_89, %c2_90, %c16_91] : memref<12x10x32xf32, #tpu.memory_space<vmem>>, vector<4x8x16xf32>
    %110 = vector.shape_cast %109 : vector<4x8x16xf32> to vector<32x16xf32>
    %c5_92 = arith.constant 5 : index
    %c0_93 = arith.constant 0 : index
    %c0_94 = arith.constant 0 : index
    %111 = vector.load %arg3[%c5_92, %c0_93, %c0_94] : memref<6x16x8xf32, #tpu.memory_space<vmem>>, vector<1x16x8xf32>
    %112 = vector.shape_cast %111 : vector<1x16x8xf32> to vector<16x8xf32>
    %cst_95 = arith.constant dense<0.000000e+00> : vector<32x8xf32>
    %113 = tpu.matmul %110, %112, %cst_95 {dimension_numbers = #tpu.dot_dimension_numbers<[1], [0], [0], [1], [0, 0, 1, 1], [], []>} : vector<32x16xf32>, vector<16x8xf32>, vector<32x8xf32> -> vector<32x8xf32>
    %114 = arith.addf %108, %113 : vector<32x8xf32>
    %c0_96 = arith.constant 0 : index
    %c0_97 = arith.constant 0 : index
    %115 = vector.load %arg7[%c0_96, %c0_97] : memref<4x8xf32, #tpu.memory_space<vmem>>, vector<4x8xf32>
    %116 = vector.extract_strided_slice %115 {offsets = [0, 0], sizes = [1, 8], strides = [1, 1]} : vector<4x8xf32> to vector<1x8xf32>
    %117 = vector.broadcast %116 : vector<1x8xf32> to vector<32x8xf32>
    %118 = arith.addf %114, %117 : vector<32x8xf32>
    %cst_98 = arith.constant dense<0.000000e+00> : vector<8xf32>
    %119 = vector.multi_reduction <add>, %118, %cst_98 [0] : vector<32x8xf32> to vector<8xf32>
    %120 = vector.shape_cast %119 : vector<8xf32> to vector<1x8xf32>
    %cst_99 = arith.constant 3.200000e+01 : f32
    %121 = vector.broadcast %cst_99 : f32 to vector<1x8xf32>
    %122 = arith.divf %120, %121 : vector<1x8xf32>
    %123 = vector.broadcast %122 : vector<1x8xf32> to vector<32x8xf32>
    %124 = arith.subf %118, %123 : vector<32x8xf32>
    %125 = arith.mulf %124, %124 : vector<32x8xf32>
    %cst_100 = arith.constant dense<0.000000e+00> : vector<8xf32>
    %126 = vector.multi_reduction <add>, %125, %cst_100 [0] : vector<32x8xf32> to vector<8xf32>
    %127 = vector.shape_cast %126 : vector<8xf32> to vector<1x8xf32>
    %cst_101 = arith.constant 3.200000e+01 : f32
    %128 = vector.broadcast %cst_101 : f32 to vector<1x8xf32>
    %129 = arith.divf %127, %128 : vector<1x8xf32>
    %130 = vector.broadcast %122 : vector<1x8xf32> to vector<32x8xf32>
    %131 = arith.subf %118, %130 : vector<32x8xf32>
    %cst_102 = arith.constant 9.99999974E-6 : f32
    %132 = vector.broadcast %cst_102 : f32 to vector<1x8xf32>
    %133 = arith.addf %129, %132 : vector<1x8xf32>
    %134 = math.rsqrt %133 : vector<1x8xf32>
    %135 = vector.broadcast %134 : vector<1x8xf32> to vector<32x8xf32>
    %136 = arith.mulf %131, %135 : vector<32x8xf32>
    %137 = vector.extract_strided_slice %115 {offsets = [1, 0], sizes = [1, 8], strides = [1, 1]} : vector<4x8xf32> to vector<1x8xf32>
    %138 = vector.broadcast %137 : vector<1x8xf32> to vector<32x8xf32>
    %139 = arith.mulf %136, %138 : vector<32x8xf32>
    %140 = vector.extract_strided_slice %115 {offsets = [2, 0], sizes = [1, 8], strides = [1, 1]} : vector<4x8xf32> to vector<1x8xf32>
    %141 = vector.broadcast %140 : vector<1x8xf32> to vector<32x8xf32>
    %142 = arith.addf %139, %141 : vector<32x8xf32>
    %cst_103 = arith.constant 0.000000e+00 : f32
    %143 = vector.broadcast %cst_103 : f32 to vector<32x8xf32>
    %144 = arith.cmpf ogt, %142, %143 : vector<32x8xf32>
    %145 = vector.extract_strided_slice %115 {offsets = [3, 0], sizes = [1, 8], strides = [1, 1]} : vector<4x8xf32> to vector<1x8xf32>
    %146 = vector.broadcast %145 : vector<1x8xf32> to vector<32x8xf32>
    %147 = arith.mulf %146, %142 : vector<32x8xf32>
    %148 = arith.select %144, %142, %147 : vector<32x8xi1>, vector<32x8xf32>
    %149 = vector.shape_cast %148 : vector<32x8xf32> to vector<4x8x8xf32>
    %c8_104 = arith.constant 8 : index
    %c1_105 = arith.constant 1 : index
    %c8_106 = arith.constant 8 : index
    %150 = vector.load %arg17[%c8_104, %c1_105, %c8_106] : memref<12x10x32xf32, #tpu.memory_space<vmem>>, vector<4x8x8xf32>
    tpu.vector_store %arg17[%c8_104, %c1_105, %c8_106], %149 {strides = array<i32>} : memref<12x10x32xf32, #tpu.memory_space<vmem>>, vector<4x8x8xf32>,
    %cst_107 = arith.constant 0.000000e+00 : f32
    %151 = vector.broadcast %cst_107 : f32 to vector<32x8xf32>
    %c4_108 = arith.constant 4 : index
    %c0_109 = arith.constant 0 : index
    %c8_110 = arith.constant 8 : index
    %152 = vector.load %arg17[%c4_108, %c0_109, %c8_110] : memref<12x10x32xf32, #tpu.memory_space<vmem>>, vector<4x8x24xf32>
    %153 = vector.shape_cast %152 : vector<4x8x24xf32> to vector<32x24xf32>
    %c0_111 = arith.constant 0 : index
    %c0_112 = arith.constant 0 : index
    %c0_113 = arith.constant 0 : index
    %154 = vector.load %arg4[%c0_111, %c0_112, %c0_113] : memref<6x24x8xf32, #tpu.memory_space<vmem>>, vector<1x24x8xf32>
    %155 = vector.shape_cast %154 : vector<1x24x8xf32> to vector<24x8xf32>
    %cst_114 = arith.constant dense<0.000000e+00> : vector<32x8xf32>
    %156 = tpu.matmul %153, %155, %cst_114 {dimension_numbers = #tpu.dot_dimension_numbers<[1], [0], [0], [1], [0, 0, 1, 1], [], []>} : vector<32x24xf32>, vector<24x8xf32>, vector<32x8xf32> -> vector<32x8xf32>
    %157 = arith.addf %151, %156 : vector<32x8xf32>
    %c4_115 = arith.constant 4 : index
    %c1_116 = arith.constant 1 : index
    %c8_117 = arith.constant 8 : index
    %158 = vector.load %arg17[%c4_115, %c1_116, %c8_117] : memref<12x10x32xf32, #tpu.memory_space<vmem>>, vector<4x8x24xf32>
    %159 = vector.shape_cast %158 : vector<4x8x24xf32> to vector<32x24xf32>
    %c1_118 = arith.constant 1 : index
    %c0_119 = arith.constant 0 : index
    %c0_120 = arith.constant 0 : index
    %160 = vector.load %arg4[%c1_118, %c0_119, %c0_120] : memref<6x24x8xf32, #tpu.memory_space<vmem>>, vector<1x24x8xf32>
    %161 = vector.shape_cast %160 : vector<1x24x8xf32> to vector<24x8xf32>
    %cst_121 = arith.constant dense<0.000000e+00> : vector<32x8xf32>
    %162 = tpu.matmul %159, %161, %cst_121 {dimension_numbers = #tpu.dot_dimension_numbers<[1], [0], [0], [1], [0, 0, 1, 1], [], []>} : vector<32x24xf32>, vector<24x8xf32>, vector<32x8xf32> -> vector<32x8xf32>
    %163 = arith.addf %157, %162 : vector<32x8xf32>
    %c4_122 = arith.constant 4 : index
    %c2_123 = arith.constant 2 : index
    %c8_124 = arith.constant 8 : index
    %164 = vector.load %arg17[%c4_122, %c2_123, %c8_124] : memref<12x10x32xf32, #tpu.memory_space<vmem>>, vector<4x8x24xf32>
    %165 = vector.shape_cast %164 : vector<4x8x24xf32> to vector<32x24xf32>
    %c2_125 = arith.constant 2 : index
    %c0_126 = arith.constant 0 : index
    %c0_127 = arith.constant 0 : index
    %166 = vector.load %arg4[%c2_125, %c0_126, %c0_127] : memref<6x24x8xf32, #tpu.memory_space<vmem>>, vector<1x24x8xf32>
    %167 = vector.shape_cast %166 : vector<1x24x8xf32> to vector<24x8xf32>
    %cst_128 = arith.constant dense<0.000000e+00> : vector<32x8xf32>
    %168 = tpu.matmul %165, %167, %cst_128 {dimension_numbers = #tpu.dot_dimension_numbers<[1], [0], [0], [1], [0, 0, 1, 1], [], []>} : vector<32x24xf32>, vector<24x8xf32>, vector<32x8xf32> -> vector<32x8xf32>
    %169 = arith.addf %163, %168 : vector<32x8xf32>
    %c8_129 = arith.constant 8 : index
    %c0_130 = arith.constant 0 : index
    %c8_131 = arith.constant 8 : index
    %170 = vector.load %arg17[%c8_129, %c0_130, %c8_131] : memref<12x10x32xf32, #tpu.memory_space<vmem>>, vector<4x8x24xf32>
    %171 = vector.shape_cast %170 : vector<4x8x24xf32> to vector<32x24xf32>
    %c3_132 = arith.constant 3 : index
    %c0_133 = arith.constant 0 : index
    %c0_134 = arith.constant 0 : index
    %172 = vector.load %arg4[%c3_132, %c0_133, %c0_134] : memref<6x24x8xf32, #tpu.memory_space<vmem>>, vector<1x24x8xf32>
    %173 = vector.shape_cast %172 : vector<1x24x8xf32> to vector<24x8xf32>
    %cst_135 = arith.constant dense<0.000000e+00> : vector<32x8xf32>
    %174 = tpu.matmul %171, %173, %cst_135 {dimension_numbers = #tpu.dot_dimension_numbers<[1], [0], [0], [1], [0, 0, 1, 1], [], []>} : vector<32x24xf32>, vector<24x8xf32>, vector<32x8xf32> -> vector<32x8xf32>
    %175 = arith.addf %169, %174 : vector<32x8xf32>
    %c8_136 = arith.constant 8 : index
    %c1_137 = arith.constant 1 : index
    %c8_138 = arith.constant 8 : index
    %176 = vector.load %arg17[%c8_136, %c1_137, %c8_138] : memref<12x10x32xf32, #tpu.memory_space<vmem>>, vector<4x8x24xf32>
    %177 = vector.shape_cast %176 : vector<4x8x24xf32> to vector<32x24xf32>
    %c4_139 = arith.constant 4 : index
    %c0_140 = arith.constant 0 : index
    %c0_141 = arith.constant 0 : index
    %178 = vector.load %arg4[%c4_139, %c0_140, %c0_141] : memref<6x24x8xf32, #tpu.memory_space<vmem>>, vector<1x24x8xf32>
    %179 = vector.shape_cast %178 : vector<1x24x8xf32> to vector<24x8xf32>
    %cst_142 = arith.constant dense<0.000000e+00> : vector<32x8xf32>
    %180 = tpu.matmul %177, %179, %cst_142 {dimension_numbers = #tpu.dot_dimension_numbers<[1], [0], [0], [1], [0, 0, 1, 1], [], []>} : vector<32x24xf32>, vector<24x8xf32>, vector<32x8xf32> -> vector<32x8xf32>
    %181 = arith.addf %175, %180 : vector<32x8xf32>
    %c8_143 = arith.constant 8 : index
    %c2_144 = arith.constant 2 : index
    %c8_145 = arith.constant 8 : index
    %182 = vector.load %arg17[%c8_143, %c2_144, %c8_145] : memref<12x10x32xf32, #tpu.memory_space<vmem>>, vector<4x8x24xf32>
    %183 = vector.shape_cast %182 : vector<4x8x24xf32> to vector<32x24xf32>
    %c5_146 = arith.constant 5 : index
    %c0_147 = arith.constant 0 : index
    %c0_148 = arith.constant 0 : index
    %184 = vector.load %arg4[%c5_146, %c0_147, %c0_148] : memref<6x24x8xf32, #tpu.memory_space<vmem>>, vector<1x24x8xf32>
    %185 = vector.shape_cast %184 : vector<1x24x8xf32> to vector<24x8xf32>
    %cst_149 = arith.constant dense<0.000000e+00> : vector<32x8xf32>
    %186 = tpu.matmul %183, %185, %cst_149 {dimension_numbers = #tpu.dot_dimension_numbers<[1], [0], [0], [1], [0, 0, 1, 1], [], []>} : vector<32x24xf32>, vector<24x8xf32>, vector<32x8xf32> -> vector<32x8xf32>
    %187 = arith.addf %181, %186 : vector<32x8xf32>
    %c0_150 = arith.constant 0 : index
    %c0_151 = arith.constant 0 : index
    %188 = vector.load %arg8[%c0_150, %c0_151] : memref<4x8xf32, #tpu.memory_space<vmem>>, vector<4x8xf32>
    %189 = vector.extract_strided_slice %188 {offsets = [0, 0], sizes = [1, 8], strides = [1, 1]} : vector<4x8xf32> to vector<1x8xf32>
    %190 = vector.broadcast %189 : vector<1x8xf32> to vector<32x8xf32>
    %191 = arith.addf %187, %190 : vector<32x8xf32>
    %cst_152 = arith.constant dense<0.000000e+00> : vector<8xf32>
    %192 = vector.multi_reduction <add>, %191, %cst_152 [0] : vector<32x8xf32> to vector<8xf32>
    %193 = vector.shape_cast %192 : vector<8xf32> to vector<1x8xf32>
    %cst_153 = arith.constant 3.200000e+01 : f32
    %194 = vector.broadcast %cst_153 : f32 to vector<1x8xf32>
    %195 = arith.divf %193, %194 : vector<1x8xf32>
    %196 = vector.broadcast %195 : vector<1x8xf32> to vector<32x8xf32>
    %197 = arith.subf %191, %196 : vector<32x8xf32>
    %198 = arith.mulf %197, %197 : vector<32x8xf32>
    %cst_154 = arith.constant dense<0.000000e+00> : vector<8xf32>
    %199 = vector.multi_reduction <add>, %198, %cst_154 [0] : vector<32x8xf32> to vector<8xf32>
    %200 = vector.shape_cast %199 : vector<8xf32> to vector<1x8xf32>
    %cst_155 = arith.constant 3.200000e+01 : f32
    %201 = vector.broadcast %cst_155 : f32 to vector<1x8xf32>
    %202 = arith.divf %200, %201 : vector<1x8xf32>
    %203 = vector.broadcast %195 : vector<1x8xf32> to vector<32x8xf32>
    %204 = arith.subf %191, %203 : vector<32x8xf32>
    %cst_156 = arith.constant 9.99999974E-6 : f32
    %205 = vector.broadcast %cst_156 : f32 to vector<1x8xf32>
    %206 = arith.addf %202, %205 : vector<1x8xf32>
    %207 = math.rsqrt %206 : vector<1x8xf32>
    %208 = vector.broadcast %207 : vector<1x8xf32> to vector<32x8xf32>
    %209 = arith.mulf %204, %208 : vector<32x8xf32>
    %210 = vector.extract_strided_slice %188 {offsets = [1, 0], sizes = [1, 8], strides = [1, 1]} : vector<4x8xf32> to vector<1x8xf32>
    %211 = vector.broadcast %210 : vector<1x8xf32> to vector<32x8xf32>
    %212 = arith.mulf %209, %211 : vector<32x8xf32>
    %213 = vector.extract_strided_slice %188 {offsets = [2, 0], sizes = [1, 8], strides = [1, 1]} : vector<4x8xf32> to vector<1x8xf32>
    %214 = vector.broadcast %213 : vector<1x8xf32> to vector<32x8xf32>
    %215 = arith.addf %212, %214 : vector<32x8xf32>
    %cst_157 = arith.constant 0.000000e+00 : f32
    %216 = vector.broadcast %cst_157 : f32 to vector<32x8xf32>
    %217 = arith.cmpf ogt, %215, %216 : vector<32x8xf32>
    %218 = vector.extract_strided_slice %188 {offsets = [3, 0], sizes = [1, 8], strides = [1, 1]} : vector<4x8xf32> to vector<1x8xf32>
    %219 = vector.broadcast %218 : vector<1x8xf32> to vector<32x8xf32>
    %220 = arith.mulf %219, %215 : vector<32x8xf32>
    %221 = arith.select %217, %215, %220 : vector<32x8xi1>, vector<32x8xf32>
    %222 = vector.shape_cast %221 : vector<32x8xf32> to vector<4x8x8xf32>
    %c8_158 = arith.constant 8 : index
    %c1_159 = arith.constant 1 : index
    %c0_160 = arith.constant 0 : index
    %223 = vector.load %arg17[%c8_158, %c1_159, %c0_160] : memref<12x10x32xf32, #tpu.memory_space<vmem>>, vector<4x8x8xf32>
    tpu.vector_store %arg17[%c8_158, %c1_159, %c0_160], %222 {strides = array<i32>} : memref<12x10x32xf32, #tpu.memory_space<vmem>>, vector<4x8x8xf32>,
    %cst_161 = arith.constant 0.000000e+00 : f32
    %224 = vector.broadcast %cst_161 : f32 to vector<32x8xf32>
    %c0_162 = arith.constant 0 : index
    %c0_163 = arith.constant 0 : index
    %c0_164 = arith.constant 0 : index
    %225 = vector.load %arg17[%c0_162, %c0_163, %c0_164] : memref<12x10x32xf32, #tpu.memory_space<vmem>>, vector<4x8x32xf32>
    %226 = vector.shape_cast %225 : vector<4x8x32xf32> to vector<32x32xf32>
    %c0_165 = arith.constant 0 : index
    %c0_166 = arith.constant 0 : index
    %c0_167 = arith.constant 0 : index
    %227 = vector.load %arg5[%c0_165, %c0_166, %c0_167] : memref<6x32x8xf32, #tpu.memory_space<vmem>>, vector<1x32x8xf32>
    %228 = vector.shape_cast %227 : vector<1x32x8xf32> to vector<32x8xf32>
    %cst_168 = arith.constant dense<0.000000e+00> : vector<32x8xf32>
    %229 = tpu.matmul %226, %228, %cst_168 {dimension_numbers = #tpu.dot_dimension_numbers<[1], [0], [0], [1], [0, 0, 1, 1], [], []>} : vector<32x32xf32>, vector<32x8xf32>, vector<32x8xf32> -> vector<32x8xf32>
    %230 = arith.addf %224, %229 : vector<32x8xf32>
    %c0_169 = arith.constant 0 : index
    %c1_170 = arith.constant 1 : index
    %c0_171 = arith.constant 0 : index
    %231 = vector.load %arg17[%c0_169, %c1_170, %c0_171] : memref<12x10x32xf32, #tpu.memory_space<vmem>>, vector<4x8x32xf32>
    %232 = vector.shape_cast %231 : vector<4x8x32xf32> to vector<32x32xf32>
    %c1_172 = arith.constant 1 : index
    %c0_173 = arith.constant 0 : index
    %c0_174 = arith.constant 0 : index
    %233 = vector.load %arg5[%c1_172, %c0_173, %c0_174] : memref<6x32x8xf32, #tpu.memory_space<vmem>>, vector<1x32x8xf32>
    %234 = vector.shape_cast %233 : vector<1x32x8xf32> to vector<32x8xf32>
    %cst_175 = arith.constant dense<0.000000e+00> : vector<32x8xf32>
    %235 = tpu.matmul %232, %234, %cst_175 {dimension_numbers = #tpu.dot_dimension_numbers<[1], [0], [0], [1], [0, 0, 1, 1], [], []>} : vector<32x32xf32>, vector<32x8xf32>, vector<32x8xf32> -> vector<32x8xf32>
    %236 = arith.addf %230, %235 : vector<32x8xf32>
    %c0_176 = arith.constant 0 : index
    %c2_177 = arith.constant 2 : index
    %c0_178 = arith.constant 0 : index
    %237 = vector.load %arg17[%c0_176, %c2_177, %c0_178] : memref<12x10x32xf32, #tpu.memory_space<vmem>>, vector<4x8x32xf32>
    %238 = vector.shape_cast %237 : vector<4x8x32xf32> to vector<32x32xf32>
    %c2_179 = arith.constant 2 : index
    %c0_180 = arith.constant 0 : index
    %c0_181 = arith.constant 0 : index
    %239 = vector.load %arg5[%c2_179, %c0_180, %c0_181] : memref<6x32x8xf32, #tpu.memory_space<vmem>>, vector<1x32x8xf32>
    %240 = vector.shape_cast %239 : vector<1x32x8xf32> to vector<32x8xf32>
    %cst_182 = arith.constant dense<0.000000e+00> : vector<32x8xf32>
    %241 = tpu.matmul %238, %240, %cst_182 {dimension_numbers = #tpu.dot_dimension_numbers<[1], [0], [0], [1], [0, 0, 1, 1], [], []>} : vector<32x32xf32>, vector<32x8xf32>, vector<32x8xf32> -> vector<32x8xf32>
    %242 = arith.addf %236, %241 : vector<32x8xf32>
    %c8_183 = arith.constant 8 : index
    %c0_184 = arith.constant 0 : index
    %c0_185 = arith.constant 0 : index
    %243 = vector.load %arg17[%c8_183, %c0_184, %c0_185] : memref<12x10x32xf32, #tpu.memory_space<vmem>>, vector<4x8x32xf32>
    %244 = vector.shape_cast %243 : vector<4x8x32xf32> to vector<32x32xf32>
    %c3_186 = arith.constant 3 : index
    %c0_187 = arith.constant 0 : index
    %c0_188 = arith.constant 0 : index
    %245 = vector.load %arg5[%c3_186, %c0_187, %c0_188] : memref<6x32x8xf32, #tpu.memory_space<vmem>>, vector<1x32x8xf32>
    %246 = vector.shape_cast %245 : vector<1x32x8xf32> to vector<32x8xf32>
    %cst_189 = arith.constant dense<0.000000e+00> : vector<32x8xf32>
    %247 = tpu.matmul %244, %246, %cst_189 {dimension_numbers = #tpu.dot_dimension_numbers<[1], [0], [0], [1], [0, 0, 1, 1], [], []>} : vector<32x32xf32>, vector<32x8xf32>, vector<32x8xf32> -> vector<32x8xf32>
    %248 = arith.addf %242, %247 : vector<32x8xf32>
    %c8_190 = arith.constant 8 : index
    %c1_191 = arith.constant 1 : index
    %c0_192 = arith.constant 0 : index
    %249 = vector.load %arg17[%c8_190, %c1_191, %c0_192] : memref<12x10x32xf32, #tpu.memory_space<vmem>>, vector<4x8x32xf32>
    %250 = vector.shape_cast %249 : vector<4x8x32xf32> to vector<32x32xf32>
    %c4_193 = arith.constant 4 : index
    %c0_194 = arith.constant 0 : index
    %c0_195 = arith.constant 0 : index
    %251 = vector.load %arg5[%c4_193, %c0_194, %c0_195] : memref<6x32x8xf32, #tpu.memory_space<vmem>>, vector<1x32x8xf32>
    %252 = vector.shape_cast %251 : vector<1x32x8xf32> to vector<32x8xf32>
    %cst_196 = arith.constant dense<0.000000e+00> : vector<32x8xf32>
    %253 = tpu.matmul %250, %252, %cst_196 {dimension_numbers = #tpu.dot_dimension_numbers<[1], [0], [0], [1], [0, 0, 1, 1], [], []>} : vector<32x32xf32>, vector<32x8xf32>, vector<32x8xf32> -> vector<32x8xf32>
    %254 = arith.addf %248, %253 : vector<32x8xf32>
    %c8_197 = arith.constant 8 : index
    %c2_198 = arith.constant 2 : index
    %c0_199 = arith.constant 0 : index
    %255 = vector.load %arg17[%c8_197, %c2_198, %c0_199] : memref<12x10x32xf32, #tpu.memory_space<vmem>>, vector<4x8x32xf32>
    %256 = vector.shape_cast %255 : vector<4x8x32xf32> to vector<32x32xf32>
    %c5_200 = arith.constant 5 : index
    %c0_201 = arith.constant 0 : index
    %c0_202 = arith.constant 0 : index
    %257 = vector.load %arg5[%c5_200, %c0_201, %c0_202] : memref<6x32x8xf32, #tpu.memory_space<vmem>>, vector<1x32x8xf32>
    %258 = vector.shape_cast %257 : vector<1x32x8xf32> to vector<32x8xf32>
    %cst_203 = arith.constant dense<0.000000e+00> : vector<32x8xf32>
    %259 = tpu.matmul %256, %258, %cst_203 {dimension_numbers = #tpu.dot_dimension_numbers<[1], [0], [0], [1], [0, 0, 1, 1], [], []>} : vector<32x32xf32>, vector<32x8xf32>, vector<32x8xf32> -> vector<32x8xf32>
    %260 = arith.addf %254, %259 : vector<32x8xf32>
    %c0_204 = arith.constant 0 : index
    %c0_205 = arith.constant 0 : index
    %261 = vector.load %arg9[%c0_204, %c0_205] : memref<4x8xf32, #tpu.memory_space<vmem>>, vector<4x8xf32>
    %262 = vector.extract_strided_slice %261 {offsets = [0, 0], sizes = [1, 8], strides = [1, 1]} : vector<4x8xf32> to vector<1x8xf32>
    %263 = vector.broadcast %262 : vector<1x8xf32> to vector<32x8xf32>
    %264 = arith.addf %260, %263 : vector<32x8xf32>
    %cst_206 = arith.constant dense<0.000000e+00> : vector<8xf32>
    %265 = vector.multi_reduction <add>, %264, %cst_206 [0] : vector<32x8xf32> to vector<8xf32>
    %266 = vector.shape_cast %265 : vector<8xf32> to vector<1x8xf32>
    %cst_207 = arith.constant 3.200000e+01 : f32
    %267 = vector.broadcast %cst_207 : f32 to vector<1x8xf32>
    %268 = arith.divf %266, %267 : vector<1x8xf32>
    %269 = vector.broadcast %268 : vector<1x8xf32> to vector<32x8xf32>
    %270 = arith.subf %264, %269 : vector<32x8xf32>
    %271 = arith.mulf %270, %270 : vector<32x8xf32>
    %cst_208 = arith.constant dense<0.000000e+00> : vector<8xf32>
    %272 = vector.multi_reduction <add>, %271, %cst_208 [0] : vector<32x8xf32> to vector<8xf32>
    %273 = vector.shape_cast %272 : vector<8xf32> to vector<1x8xf32>
    %cst_209 = arith.constant 3.200000e+01 : f32
    %274 = vector.broadcast %cst_209 : f32 to vector<1x8xf32>
    %275 = arith.divf %273, %274 : vector<1x8xf32>
    %276 = vector.broadcast %268 : vector<1x8xf32> to vector<32x8xf32>
    %277 = arith.subf %264, %276 : vector<32x8xf32>
    %cst_210 = arith.constant 9.99999974E-6 : f32
    %278 = vector.broadcast %cst_210 : f32 to vector<1x8xf32>
    %279 = arith.addf %275, %278 : vector<1x8xf32>
    %280 = math.rsqrt %279 : vector<1x8xf32>
    %281 = vector.broadcast %280 : vector<1x8xf32> to vector<32x8xf32>
    %282 = arith.mulf %277, %281 : vector<32x8xf32>
    %283 = vector.extract_strided_slice %261 {offsets = [1, 0], sizes = [1, 8], strides = [1, 1]} : vector<4x8xf32> to vector<1x8xf32>
    %284 = vector.broadcast %283 : vector<1x8xf32> to vector<32x8xf32>
    %285 = arith.mulf %282, %284 : vector<32x8xf32>
    %286 = vector.extract_strided_slice %261 {offsets = [2, 0], sizes = [1, 8], strides = [1, 1]} : vector<4x8xf32> to vector<1x8xf32>
    %287 = vector.broadcast %286 : vector<1x8xf32> to vector<32x8xf32>
    %288 = arith.addf %285, %287 : vector<32x8xf32>
    %cst_211 = arith.constant 0.000000e+00 : f32
    %289 = vector.broadcast %cst_211 : f32 to vector<32x8xf32>
    %290 = arith.cmpf ogt, %288, %289 : vector<32x8xf32>
    %291 = vector.extract_strided_slice %261 {offsets = [3, 0], sizes = [1, 8], strides = [1, 1]} : vector<4x8xf32> to vector<1x8xf32>
    %292 = vector.broadcast %291 : vector<1x8xf32> to vector<32x8xf32>
    %293 = arith.mulf %292, %288 : vector<32x8xf32>
    %294 = arith.select %290, %288, %293 : vector<32x8xi1>, vector<32x8xf32>
    %295 = vector.shape_cast %294 : vector<32x8xf32> to vector<4x8x8xf32>
    %c8_212 = arith.constant 8 : index
    %c1_213 = arith.constant 1 : index
    %c0_214 = arith.constant 0 : index
    %296 = vector.load %arg17[%c8_212, %c1_213, %c0_214] : memref<12x10x32xf32, #tpu.memory_space<vmem>>, vector<4x8x8xf32>
    tpu.vector_store %arg17[%c8_212, %c1_213, %c0_214], %295 {strides = array<i32>} : memref<12x10x32xf32, #tpu.memory_space<vmem>>, vector<4x8x8xf32>,
    %cst_215 = arith.constant 0.000000e+00 : f32
    %297 = vector.broadcast %cst_215 : f32 to vector<32x16xf32>
    %c8_216 = arith.constant 8 : index
    %c0_217 = arith.constant 0 : index
    %c0_218 = arith.constant 0 : index
    %298 = vector.load %arg17[%c8_216, %c0_217, %c0_218] : memref<12x10x32xf32, #tpu.memory_space<vmem>>, vector<4x8x8xf32>
    %299 = vector.shape_cast %298 : vector<4x8x8xf32> to vector<32x8xf32>
    %c0_219 = arith.constant 0 : index
    %c0_220 = arith.constant 0 : index
    %c0_221 = arith.constant 0 : index
    %300 = vector.load %arg10[%c0_219, %c0_220, %c0_221] : memref<3x8x16xf32, #tpu.memory_space<vmem>>, vector<1x8x16xf32>
    %301 = vector.shape_cast %300 : vector<1x8x16xf32> to vector<8x16xf32>
    %cst_222 = arith.constant dense<0.000000e+00> : vector<32x16xf32>
    %302 = tpu.matmul %299, %301, %cst_222 {dimension_numbers = #tpu.dot_dimension_numbers<[1], [0], [0], [1], [0, 0, 1, 1], [], []>} : vector<32x8xf32>, vector<8x16xf32>, vector<32x16xf32> -> vector<32x16xf32>
    %303 = arith.addf %297, %302 : vector<32x16xf32>
    %c8_223 = arith.constant 8 : index
    %c1_224 = arith.constant 1 : index
    %c0_225 = arith.constant 0 : index
    %304 = vector.load %arg17[%c8_223, %c1_224, %c0_225] : memref<12x10x32xf32, #tpu.memory_space<vmem>>, vector<4x8x8xf32>
    %305 = vector.shape_cast %304 : vector<4x8x8xf32> to vector<32x8xf32>
    %c1_226 = arith.constant 1 : index
    %c0_227 = arith.constant 0 : index
    %c0_228 = arith.constant 0 : index
    %306 = vector.load %arg10[%c1_226, %c0_227, %c0_228] : memref<3x8x16xf32, #tpu.memory_space<vmem>>, vector<1x8x16xf32>
    %307 = vector.shape_cast %306 : vector<1x8x16xf32> to vector<8x16xf32>
    %cst_229 = arith.constant dense<0.000000e+00> : vector<32x16xf32>
    %308 = tpu.matmul %305, %307, %cst_229 {dimension_numbers = #tpu.dot_dimension_numbers<[1], [0], [0], [1], [0, 0, 1, 1], [], []>} : vector<32x8xf32>, vector<8x16xf32>, vector<32x16xf32> -> vector<32x16xf32>
    %309 = arith.addf %303, %308 : vector<32x16xf32>
    %c8_230 = arith.constant 8 : index
    %c2_231 = arith.constant 2 : index
    %c0_232 = arith.constant 0 : index
    %310 = vector.load %arg17[%c8_230, %c2_231, %c0_232] : memref<12x10x32xf32, #tpu.memory_space<vmem>>, vector<4x8x8xf32>
    %311 = vector.shape_cast %310 : vector<4x8x8xf32> to vector<32x8xf32>
    %c2_233 = arith.constant 2 : index
    %c0_234 = arith.constant 0 : index
    %c0_235 = arith.constant 0 : index
    %312 = vector.load %arg10[%c2_233, %c0_234, %c0_235] : memref<3x8x16xf32, #tpu.memory_space<vmem>>, vector<1x8x16xf32>
    %313 = vector.shape_cast %312 : vector<1x8x16xf32> to vector<8x16xf32>
    %cst_236 = arith.constant dense<0.000000e+00> : vector<32x16xf32>
    %314 = tpu.matmul %311, %313, %cst_236 {dimension_numbers = #tpu.dot_dimension_numbers<[1], [0], [0], [1], [0, 0, 1, 1], [], []>} : vector<32x8xf32>, vector<8x16xf32>, vector<32x16xf32> -> vector<32x16xf32>
    %315 = arith.addf %309, %314 : vector<32x16xf32>
    %c0_237 = arith.constant 0 : index
    %c0_238 = arith.constant 0 : index
    %316 = vector.load %arg11[%c0_237, %c0_238] : memref<1x16xf32, #tpu.memory_space<vmem>>, vector<1x16xf32>
    %317 = vector.broadcast %316 : vector<1x16xf32> to vector<32x16xf32>
    %318 = arith.addf %315, %317 : vector<32x16xf32>
    %319 = vector.shape_cast %318 : vector<32x16xf32> to vector<4x8x16xf32>
    %c0_239 = arith.constant 0 : index
    %c0_240 = arith.constant 0 : index
    %320 = vector.load %arg12[%c0_239, %c0_240] : memref<16x2xf32, #tpu.memory_space<vmem>>, vector<16x2xf32>
    %321 = vector.extract_strided_slice %320 {offsets = [0, 0], sizes = [16, 1], strides = [1, 1]} : vector<16x2xf32> to vector<16x1xf32>
    %322 = vector.shape_cast %321 : vector<16x1xf32> to vector<16xf32>
    %323 = vector.shape_cast %322 : vector<16xf32> to vector<1x1x16xf32>
    %324 = vector.extract_strided_slice %320 {offsets = [0, 1], sizes = [16, 1], strides = [1, 1]} : vector<16x2xf32> to vector<16x1xf32>
    %325 = vector.shape_cast %324 : vector<16x1xf32> to vector<16xf32>
    %326 = vector.shape_cast %325 : vector<16xf32> to vector<1x1x16xf32>
    %327 = vector.broadcast %323 : vector<1x1x16xf32> to vector<4x8x16xf32>
    %328 = arith.mulf %319, %327 : vector<4x8x16xf32>
    %cst_241 = arith.constant dense<0.000000e+00> : vector<4x8xf32>
    %329 = vector.multi_reduction <add>, %328, %cst_241 [2] : vector<4x8x16xf32> to vector<4x8xf32>
    %330 = vector.extract_strided_slice %319 {offsets = [0, 1, 0], sizes = [4, 7, 8], strides = [1, 1, 1]} : vector<4x8x16xf32> to vector<4x7x8xf32>
    %331 = vector.extract_strided_slice %319 {offsets = [0, 0, 8], sizes = [4, 7, 8], strides = [1, 1, 1]} : vector<4x8x16xf32> to vector<4x7x8xf32>
    %332 = tpu.concatenate %330, %331 in 2 : vector<4x7x8xf32>, vector<4x7x8xf32> -> vector<4x7x16xf32>
    %333 = vector.broadcast %326 : vector<1x1x16xf32> to vector<4x7x16xf32>
    %334 = arith.mulf %332, %333 : vector<4x7x16xf32>
    %cst_242 = arith.constant dense<0.000000e+00> : vector<4x7xf32>
    %335 = vector.multi_reduction <add>, %334, %cst_242 [2] : vector<4x7x16xf32> to vector<4x7xf32>
    %cst_243 = arith.constant 0.000000e+00 : f32
    %336 = vector.broadcast %cst_243 : f32 to vector<4x1xf32>
    %337 = tpu.concatenate %335, %336 in 1 : vector<4x7xf32>, vector<4x1xf32> -> vector<4x8xf32>
    %338 = tpu.concatenate %329, %337 in 1 : vector<4x8xf32>, vector<4x8xf32> -> vector<4x16xf32>
    %c0_244 = arith.constant 0 : index
    %c0_245 = arith.constant 0 : index
    %339 = vector.load %arg13[%c0_244, %c0_245] : memref<16x15xf32, #tpu.memory_space<vmem>>, vector<16x15xf32>
    %cst_246 = arith.constant dense<0.000000e+00> : vector<4x15xf32>
    %340 = tpu.matmul %338, %339, %cst_246 {dimension_numbers = #tpu.dot_dimension_numbers<[1], [0], [0], [1], [0, 0, 1, 1], [], []>} : vector<4x16xf32>, vector<16x15xf32>, vector<4x15xf32> -> vector<4x15xf32>
    %c0_247 = arith.constant 0 : index
    %c0_248 = arith.constant 0 : index
    %341 = memref.load %arg15[%c0_247, %c0_248] : memref<1x6xf32, #tpu.memory_space<smem>>
    %342 = vector.broadcast %341 : f32 to vector<4x15xf32>
    %343 = arith.addf %340, %342 : vector<4x15xf32>
    %344 = vector.shape_cast %343 : vector<4x15xf32> to vector<1x4x15xf32>
    %cst_249 = arith.constant dense<0.000000e+00> : vector<1xf32>
    %345 = vector.multi_reduction <add>, %344, %cst_249 [1, 2] : vector<1x4x15xf32> to vector<1xf32>
    %346 = vector.shape_cast %345 : vector<1xf32> to vector<1x1x1xf32>
    %347 = vector.extract %346[0, 0, 0] : f32 from vector<1x1x1xf32>
    %348 = vector.broadcast %347 : f32 to vector<1x1xf32>
    %cst_250 = arith.constant 6.000000e+01 : f32
    %349 = vector.broadcast %cst_250 : f32 to vector<1x1xf32>
    %350 = arith.divf %348, %349 : vector<1x1xf32>
    %351 = vector.broadcast %350 : vector<1x1xf32> to vector<4x15xf32>
    %352 = arith.subf %343, %351 : vector<4x15xf32>
    %353 = arith.mulf %352, %352 : vector<4x15xf32>
    %354 = vector.shape_cast %353 : vector<4x15xf32> to vector<1x4x15xf32>
    %cst_251 = arith.constant dense<0.000000e+00> : vector<1xf32>
    %355 = vector.multi_reduction <add>, %354, %cst_251 [1, 2] : vector<1x4x15xf32> to vector<1xf32>
    %356 = vector.shape_cast %355 : vector<1xf32> to vector<1x1x1xf32>
    %357 = vector.extract %356[0, 0, 0] : f32 from vector<1x1x1xf32>
    %358 = vector.broadcast %357 : f32 to vector<1x1xf32>
    %cst_252 = arith.constant 6.000000e+01 : f32
    %359 = vector.broadcast %cst_252 : f32 to vector<1x1xf32>
    %360 = arith.divf %358, %359 : vector<1x1xf32>
    %361 = vector.broadcast %350 : vector<1x1xf32> to vector<4x15xf32>
    %362 = arith.subf %343, %361 : vector<4x15xf32>
    %cst_253 = arith.constant 9.99999974E-6 : f32
    %363 = vector.broadcast %cst_253 : f32 to vector<1x1xf32>
    %364 = arith.addf %360, %363 : vector<1x1xf32>
    %365 = math.rsqrt %364 : vector<1x1xf32>
    %366 = vector.broadcast %365 : vector<1x1xf32> to vector<4x15xf32>
    %367 = arith.mulf %362, %366 : vector<4x15xf32>
    %c0_254 = arith.constant 0 : index
    %c1_255 = arith.constant 1 : index
    %368 = memref.load %arg15[%c0_254, %c1_255] : memref<1x6xf32, #tpu.memory_space<smem>>
    %369 = vector.broadcast %368 : f32 to vector<4x15xf32>
    %370 = arith.mulf %367, %369 : vector<4x15xf32>
    %c0_256 = arith.constant 0 : index
    %c2_257 = arith.constant 2 : index
    %371 = memref.load %arg15[%c0_256, %c2_257] : memref<1x6xf32, #tpu.memory_space<smem>>
    %372 = vector.broadcast %371 : f32 to vector<4x15xf32>
    %373 = arith.addf %370, %372 : vector<4x15xf32>
    %cst_258 = arith.constant 0.000000e+00 : f32
    %374 = vector.broadcast %cst_258 : f32 to vector<4x15xf32>
    %375 = arith.cmpf ogt, %373, %374 : vector<4x15xf32>
    %c0_259 = arith.constant 0 : index
    %c3_260 = arith.constant 3 : index
    %376 = memref.load %arg15[%c0_259, %c3_260] : memref<1x6xf32, #tpu.memory_space<smem>>
    %377 = vector.broadcast %376 : f32 to vector<4x15xf32>
    %378 = arith.mulf %377, %373 : vector<4x15xf32>
    %379 = arith.select %375, %373, %378 : vector<4x15xi1>, vector<4x15xf32>
    %c0_261 = arith.constant 0 : index
    %c4_262 = arith.constant 4 : index
    %380 = memref.load %arg15[%c0_261, %c4_262] : memref<1x6xf32, #tpu.memory_space<smem>>
    %381 = vector.broadcast %380 : f32 to vector<4x15xf32>
    %382 = arith.mulf %379, %381 : vector<4x15xf32>
    %c0_263 = arith.constant 0 : index
    %c5_264 = arith.constant 5 : index
    %383 = memref.load %arg15[%c0_263, %c5_264] : memref<1x6xf32, #tpu.memory_space<smem>>
    %384 = vector.broadcast %383 : f32 to vector<4x15xf32>
    %385 = arith.addf %382, %384 : vector<4x15xf32>
    %cst_265 = arith.constant 0.000000e+00 : f32
    %386 = vector.broadcast %cst_265 : f32 to vector<4x15xf32>
    %387 = arith.cmpf ogt, %385, %386 : vector<4x15xf32>
    %c0_266 = arith.constant 0 : index
    %c0_267 = arith.constant 0 : index
    %388 = vector.load %arg14[%c0_266, %c0_267] : memref<1x15xf32, #tpu.memory_space<vmem>>, vector<1x15xf32>
    %389 = vector.broadcast %388 : vector<1x15xf32> to vector<4x15xf32>
    %390 = arith.mulf %389, %385 : vector<4x15xf32>
    %391 = arith.select %387, %385, %390 : vector<4x15xi1>, vector<4x15xf32>
    %c0_268 = arith.constant 0 : index
    %c0_269 = arith.constant 0 : index
    %c0_270 = arith.constant 0 : index
    %392 = vector.load %arg16[%c0_268, %c0_269, %c0_270] : memref<1x4x15xf32, #tpu.memory_space<vmem>>, vector<1x4x15xf32>
    %393 = vector.shape_cast %392 : vector<1x4x15xf32> to vector<4x15xf32>
    %394 = vector.shape_cast %391 : vector<4x15xf32> to vector<1x4x15xf32>
    tpu.vector_store %arg16[%c0_268, %c0_269, %c0_270], %394 {strides = array<i32>} : memref<1x4x15xf32, #tpu.memory_space<vmem>>, vector<1x4x15xf32>,
    return
  }
  func.func @transform_0(%arg0: i32) -> (i32, i32, i32, i32) {
    %c0_i32 = arith.constant 0 : i32
    %c0_i32_0 = arith.constant 0 : i32
    %c0_i32_1 = arith.constant 0 : i32
    %c0_i32_2 = arith.constant 0 : i32
    return %arg0, %c0_i32, %c0_i32_0, %c0_i32_1 : i32, i32, i32, i32
  }
  func.func @transform_1(%arg0: i32) -> (i32, i32, i32) {
    %c0_i32 = arith.constant 0 : i32
    %c0_i32_0 = arith.constant 0 : i32
    %c0_i32_1 = arith.constant 0 : i32
    %c0_i32_2 = arith.constant 0 : i32
    return %c0_i32, %c0_i32_0, %c0_i32_1 : i32, i32, i32
  }
  func.func @transform_2(%arg0: i32) -> (i32, i32, i32) {
    %c0_i32 = arith.constant 0 : i32
    %c0_i32_0 = arith.constant 0 : i32
    %c0_i32_1 = arith.constant 0 : i32
    %c0_i32_2 = arith.constant 0 : i32
    return %c0_i32, %c0_i32_0, %c0_i32_1 : i32, i32, i32
  }
  func.func @transform_3(%arg0: i32) -> (i32, i32, i32) {
    %c0_i32 = arith.constant 0 : i32
    %c0_i32_0 = arith.constant 0 : i32
    %c0_i32_1 = arith.constant 0 : i32
    %c0_i32_2 = arith.constant 0 : i32
    return %c0_i32, %c0_i32_0, %c0_i32_1 : i32, i32, i32
  }
  func.func @transform_4(%arg0: i32) -> (i32, i32, i32) {
    %c0_i32 = arith.constant 0 : i32
    %c0_i32_0 = arith.constant 0 : i32
    %c0_i32_1 = arith.constant 0 : i32
    %c0_i32_2 = arith.constant 0 : i32
    return %c0_i32, %c0_i32_0, %c0_i32_1 : i32, i32, i32
  }
  func.func @transform_5(%arg0: i32) -> (i32, i32) {
    %c0_i32 = arith.constant 0 : i32
    %c0_i32_0 = arith.constant 0 : i32
    %c0_i32_1 = arith.constant 0 : i32
    return %c0_i32, %c0_i32_0 : i32, i32
  }
  func.func @transform_6(%arg0: i32) -> (i32, i32) {
    %c0_i32 = arith.constant 0 : i32
    %c0_i32_0 = arith.constant 0 : i32
    %c0_i32_1 = arith.constant 0 : i32
    return %c0_i32, %c0_i32_0 : i32, i32
  }
  func.func @transform_7(%arg0: i32) -> (i32, i32) {
    %c0_i32 = arith.constant 0 : i32
    %c0_i32_0 = arith.constant 0 : i32
    %c0_i32_1 = arith.constant 0 : i32
    return %c0_i32, %c0_i32_0 : i32, i32
  }
  func.func @transform_8(%arg0: i32) -> (i32, i32) {
    %c0_i32 = arith.constant 0 : i32
    %c0_i32_0 = arith.constant 0 : i32
    %c0_i32_1 = arith.constant 0 : i32
    return %c0_i32, %c0_i32_0 : i32, i32
  }
  func.func @transform_9(%arg0: i32) -> (i32, i32, i32) {
    %c0_i32 = arith.constant 0 : i32
    %c0_i32_0 = arith.constant 0 : i32
    %c0_i32_1 = arith.constant 0 : i32
    %c0_i32_2 = arith.constant 0 : i32
    return %c0_i32, %c0_i32_0, %c0_i32_1 : i32, i32, i32
  }
  func.func @transform_10(%arg0: i32) -> (i32, i32) {
    %c0_i32 = arith.constant 0 : i32
    %c0_i32_0 = arith.constant 0 : i32
    %c0_i32_1 = arith.constant 0 : i32
    return %c0_i32, %c0_i32_0 : i32, i32
  }
  func.func @transform_11(%arg0: i32) -> (i32, i32) {
    %c0_i32 = arith.constant 0 : i32
    %c0_i32_0 = arith.constant 0 : i32
    %c0_i32_1 = arith.constant 0 : i32
    return %c0_i32, %c0_i32_0 : i32, i32
  }
  func.func @transform_12(%arg0: i32) -> (i32, i32) {
    %c0_i32 = arith.constant 0 : i32
    %c0_i32_0 = arith.constant 0 : i32
    %c0_i32_1 = arith.constant 0 : i32
    return %c0_i32, %c0_i32_0 : i32, i32
  }
  func.func @transform_13(%arg0: i32) -> (i32, i32) {
    %c0_i32 = arith.constant 0 : i32
    %c0_i32_0 = arith.constant 0 : i32
    %c0_i32_1 = arith.constant 0 : i32
    return %c0_i32, %c0_i32_0 : i32, i32
  }
  func.func @transform_14(%arg0: i32) -> (i32, i32) {
    %c0_i32 = arith.constant 0 : i32
    %c0_i32_0 = arith.constant 0 : i32
    %c0_i32_1 = arith.constant 0 : i32
    return %c0_i32, %c0_i32_0 : i32, i32
  }
  func.func @transform_15(%arg0: i32) -> (i32, i32, i32) {
    %c0_i32 = arith.constant 0 : i32
    %c0_i32_0 = arith.constant 0 : i32
    %c0_i32_1 = arith.constant 0 : i32
    return %arg0, %c0_i32, %c0_i32_0 : i32, i32, i32
  }
}

</mosaic_0001>

<llo_original>
// kernel: _lambda_.1
$region0: #{_lambda_.1}
  #allocation0 [shape = 'u32[]', space=smem, size = 0x4, offset = 0x4, fixed_abs, tag = 'smem constant byte address 0x4 - core index']
  #allocation1 [shape = 'u32[144,128]{1,0:T(1,128)}', space=vmem, size = 0x12000, scoped, tag = 'internal scratch']
  #allocation2 [shape = 'f32[12,10,32]{2,1,0:T(8,128)}', space=vmem, size = 0x18000, scoped, tag = 'scratch operand']
  %s0 = inlined_call_operand.vmem [shape: f32[2,4,8,8], index: 0, kind: input, shape index: {}]
  %s1 = inlined_call_operand.hbm [shape: f32[6,8,8], index: 1, kind: input, shape index: {}]
  %s2 = inlined_call_operand.hbm [shape: f32[6,16,8], index: 2, kind: input, shape index: {}]
  %s3 = inlined_call_operand.vmem [shape: f32[6,24,8], index: 3, kind: input, shape index: {}]
  %s4 = inlined_call_operand.hbm [shape: f32[6,32,8], index: 4, kind: input, shape index: {}]
  %s5 = inlined_call_operand.hbm [shape: f32[4,8], index: 5, kind: input, shape index: {}]
  %s6 = inlined_call_operand.hbm [shape: f32[4,8], index: 6, kind: input, shape index: {}]
  %s7 = inlined_call_operand.hbm [shape: f32[4,8], index: 7, kind: input, shape index: {}]
  %s8 = inlined_call_operand.hbm [shape: f32[4,8], index: 8, kind: input, shape index: {}]
  %s9 = inlined_call_operand.vmem [shape: f32[3,8,16], index: 9, kind: input, shape index: {}]
  %s10 = inlined_call_operand.vmem [shape: f32[1,16], index: 10, kind: input, shape index: {}]
  %s11 = inlined_call_operand.vmem [shape: f32[16,2], index: 11, kind: input, shape index: {}]
  %s12 = inlined_call_operand.vmem [shape: f32[16,15], index: 12, kind: input, shape index: {}]
  %s13 = inlined_call_operand.vmem [shape: f32[1,15], index: 13, kind: input, shape index: {}]
  %s14 = inlined_call_operand.hbm [shape: f32[1,6], index: 14, kind: input, shape index: {}]
  %s15 = inlined_call_operand.hbm [shape: f32[2,4,15], index: 15, kind: output, shape index: {}]
  %s16 = sld [smem:[#allocation0]]
  $region125: #{_lambda_.1} parent=0
    _
  %s18 = ssub.s32 1, %s16
  %s19 = scalar_select 0, %s18, %s16
  $region1: #{_lambda_.1} parent=0
    #allocation3 [shape = 'u8[24576]{0}', space=vmem, size = 0x6000, scoped, tag = 'input window, operand 1, single buffered']
    #allocation4 [shape = 's32[2]{0}', space=sflag, size = 0x8, scoped, tag = 'scoped memory for _lambda_.1']
    #allocation5 [shape = 's32[2]{0}', space=sflag, size = 0x8, scoped, tag = 'scoped memory for _lambda_.1']
    #allocation6 [shape = 's32[2]{0}', space=sflag, size = 0x8, scoped, tag = 'scoped memory for _lambda_.1']
    #allocation7 [shape = 'u8[49152]{0}', space=vmem, size = 0xc000, scoped, tag = 'input window, operand 2, single buffered']
    #allocation8 [shape = 's32[1]{0}', space=sflag, size = 0x4, scoped, tag = 'scoped memory for _lambda_.1']
    #allocation9 [shape = 'u8[98304]{0}', space=vmem, size = 0x18000, scoped, tag = 'input window, operand 4, single buffered']
    #allocation10 [shape = 'u8[2048]{0}', space=vmem, size = 0x800, scoped, tag = 'input window, operand 5, single buffered']
    #allocation11 [shape = 's32[1]{0}', space=sflag, size = 0x4, scoped, tag = 'scoped memory for _lambda_.1']
    #allocation12 [shape = 'u8[2048]{0}', space=vmem, size = 0x800, scoped, tag = 'input window, operand 6, single buffered']
    #allocation13 [shape = 'u8[2048]{0}', space=vmem, size = 0x800, scoped, tag = 'input window, operand 7, single buffered']
    #allocation14 [shape = 's32[1]{0}', space=sflag, size = 0x4, scoped, tag = 'scoped memory for _lambda_.1']
    #allocation15 [shape = 'u8[2048]{0}', space=vmem, size = 0x800, scoped, tag = 'input window, operand 8, single buffered']
    #allocation16 [shape = 'u8[512]{0}', space=smem, size = 0x200, scoped, tag = 'input window, operand 14, single buffered']
    #allocation17 [shape = 'u8[4096]{0}', space=vmem, size = 0x1000, scoped, tag = 'output window, operand 0']
    %20 = vsyncpa [#allocation4], 0
    %21 = vsyncpa [#allocation8], 0
    %22 = vsyncpa [#allocation11], 0
    %23 = vsyncpa [#allocation14], 0
    %24 = vsyncpa [#allocation6], 0
    %25 = vsyncpa [#allocation5], 0
    %s26 = scalar_lea.sflag [#allocation5], 1
    %27 = vsyncpa %s26, 0
    loop: start=0, step=1, limit=4
    $region2: #{_lambda_.1} parent=1 // loop_pre_header
      _
    $region3: #{_lambda_.1} parent=1 // loop_header
      %s29 = sphi 0, %s33
      %p30 = scmp.ge.s32.totalorder %s29, 4
      %s39 = sphi 0, %s41
      %s42 = sphi 0, %s39
      %s43 = sphi 0, %s42
      %s59 = sphi 0, %s43
      %s63 = sphi 0, %s63
      %s65 = sphi 0, %s63
      %s66 = sphi 0, %s65
      %s80 = sphi 0, %s66
      %s84 = sphi 0, %s84
      %s86 = sphi 0, %s84
      %s87 = sphi 0, %s86
      %s101 = sphi 0, %s87
      %s105 = sphi 0, %s105
      %s107 = sphi 0, %s105
      %s108 = sphi 0, %s107
      %s122 = sphi 0, %s108
      %s126 = sphi 0, %s126
      %s128 = sphi 0, %s126
      %s129 = sphi 0, %s128
      %s143 = sphi 0, %s129
      %s147 = sphi 0, %s147
      %s149 = sphi 0, %s147
      %s150 = sphi 0, %s149
      %s164 = sphi 0, %s150
      %s168 = sphi 0, %s168
      %s170 = sphi 0, %s168
      %s171 = sphi 0, %s170
      %s185 = sphi 0, %s171
      %s189 = sphi 0, %s189
      %s191 = sphi 0, %s189
      %s192 = sphi 0, %s191
      %s206 = sphi 0, %s192
      %s210 = sphi 0, %s210
      %s212 = sphi 0, %s210
      %s213 = sphi 0, %s212
      %s227 = sphi 0, %s213
      %s231 = sphi 0, %s231
      %s233 = sphi 0, %s231
      %s234 = sphi 0, %s233
      %s248 = sphi 0, %s234
      %s252 = sphi 0, %s252
      %s254 = sphi 0, %s252
      %s255 = sphi 0, %s254
      %s269 = sphi 0, %s255
      %s273 = sphi 0, %s273
      %s275 = sphi 0, %s273
      %s276 = sphi 0, %s275
      %s290 = sphi 0, %s276
      %s294 = sphi 0, %s294
      %s296 = sphi 0, %s294
      %s297 = sphi 0, %s296
      %s311 = sphi 0, %s297
      %s315 = sphi 0, %s315
      %s317 = sphi 0, %s315
      %s318 = sphi 0, %s317
      %s332 = sphi 0, %s318
      %s336 = sphi 0, %s336
      %s338 = sphi 0, %s336
      %s339 = sphi 0, %s338
      %s353 = sphi 0, %s339
      %s359 = sphi 0, %s361
      %s362 = sphi 0, %s359
      %s363 = sphi 0, %s362
      %s379 = sphi 0, %s363
    $region4: #{_lambda_.1} parent=1 // loop_header_branch
      %32 = sbr.rel (%p30) target = $region8
    $region5: #{_lambda_.1} parent=1 // loop_body
      %s34 = ssub.s32 %s29, 1
      %s35 = ssub.s32 %s29, 2
      %s36 = sadd.s32 %s29, 1
      %s37 = ssub.s32 %s29, %s36
      %p38 = scmp.eq.s32.totalorder %s37, 0
      %s40 = sadd.s32 %s39, 1
      %s41 = scalar_select %p38, %s39, %s40
      %p44 = pneg %p38
      %p45 = scmp.eq.s32.totalorder %s29, 1
      %p46 = por %p44, %p45
      %p47 = scmp.ne.s32.totalorder %s39, %s42
      %p48 = scmp.eq.s32.totalorder %s29, 0
      %p49 = por %p47, %p48
      %p50 = scmp.ne.s32.totalorder %s39, %s42
      %p51 = scmp.eq.s32.totalorder %s34, 1
      %p52 = por %p50, %p51
      %p53 = scmp.ne.s32.totalorder %s42, %s43
      %p54 = scmp.eq.s32.totalorder %s34, 0
      %p55 = por %p53, %p54
      %p56 = scmp.ne.s32.totalorder %s42, %s43
      %p57 = scmp.eq.s32.totalorder %s35, 1
      %p58 = por %p56, %p57
      %p60 = scmp.ne.s32.totalorder %s43, %s59
      %p61 = scmp.eq.s32.totalorder %s35, 0
      %p62 = por %p60, %p61
      %s64 = sadd.s32 %s63, 1
      %p67 = scmp.eq.s32.totalorder %s29, 1
      %p68 = scmp.ne.s32.totalorder %s63, %s65
      %p69 = scmp.eq.s32.totalorder %s29, 0
      %p70 = por %p68, %p69
      %p71 = scmp.ne.s32.totalorder %s63, %s65
      %p72 = scmp.eq.s32.totalorder %s34, 1
      %p73 = por %p71, %p72
      %p74 = scmp.ne.s32.totalorder %s65, %s66
      %p75 = scmp.eq.s32.totalorder %s34, 0
      %p76 = por %p74, %p75
      %p77 = scmp.ne.s32.totalorder %s65, %s66
      %p78 = scmp.eq.s32.totalorder %s35, 1
      %p79 = por %p77, %p78
      %p81 = scmp.ne.s32.totalorder %s66, %s80
      %p82 = scmp.eq.s32.totalorder %s35, 0
      %p83 = por %p81, %p82
      %s85 = sadd.s32 %s84, 1
      %p88 = scmp.eq.s32.totalorder %s29, 1
      %p89 = scmp.ne.s32.totalorder %s84, %s86
      %p90 = scmp.eq.s32.totalorder %s29, 0
      %p91 = por %p89, %p90
      %p92 = scmp.ne.s32.totalorder %s84, %s86
      %p93 = scmp.eq.s32.totalorder %s34, 1
      %p94 = por %p92, %p93
      %p95 = scmp.ne.s32.totalorder %s86, %s87
      %p96 = scmp.eq.s32.totalorder %s34, 0
      %p97 = por %p95, %p96
      %p98 = scmp.ne.s32.totalorder %s86, %s87
      %p99 = scmp.eq.s32.totalorder %s35, 1
      %p100 = por %p98, %p99
      %p102 = scmp.ne.s32.totalorder %s87, %s101
      %p103 = scmp.eq.s32.totalorder %s35, 0
      %p104 = por %p102, %p103
      %s106 = sadd.s32 %s105, 1
      %p109 = scmp.eq.s32.totalorder %s29, 1
      %p110 = scmp.ne.s32.totalorder %s105, %s107
      %p111 = scmp.eq.s32.totalorder %s29, 0
      %p112 = por %p110, %p111
      %p113 = scmp.ne.s32.totalorder %s105, %s107
      %p114 = scmp.eq.s32.totalorder %s34, 1
      %p115 = por %p113, %p114
      %p116 = scmp.ne.s32.totalorder %s107, %s108
      %p117 = scmp.eq.s32.totalorder %s34, 0
      %p118 = por %p116, %p117
      %p119 = scmp.ne.s32.totalorder %s107, %s108
      %p120 = scmp.eq.s32.totalorder %s35, 1
      %p121 = por %p119, %p120
      %p123 = scmp.ne.s32.totalorder %s108, %s122
      %p124 = scmp.eq.s32.totalorder %s35, 0
      %p125 = por %p123, %p124
      %s127 = sadd.s32 %s126, 1
      %p130 = scmp.eq.s32.totalorder %s29, 1
      %p131 = scmp.ne.s32.totalorder %s126, %s128
      %p132 = scmp.eq.s32.totalorder %s29, 0
      %p133 = por %p131, %p132
      %p134 = scmp.ne.s32.totalorder %s126, %s128
      %p135 = scmp.eq.s32.totalorder %s34, 1
      %p136 = por %p134, %p135
      %p137 = scmp.ne.s32.totalorder %s128, %s129
      %p138 = scmp.eq.s32.totalorder %s34, 0
      %p139 = por %p137, %p138
      %p140 = scmp.ne.s32.totalorder %s128, %s129
      %p141 = scmp.eq.s32.totalorder %s35, 1
      %p142 = por %p140, %p141
      %p144 = scmp.ne.s32.totalorder %s129, %s143
      %p145 = scmp.eq.s32.totalorder %s35, 0
      %p146 = por %p144, %p145
      %s148 = sadd.s32 %s147, 1
      %p151 = scmp.eq.s32.totalorder %s29, 1
      %p152 = scmp.ne.s32.totalorder %s147, %s149
      %p153 = scmp.eq.s32.totalorder %s29, 0
      %p154 = por %p152, %p153
      %p155 = scmp.ne.s32.totalorder %s147, %s149
      %p156 = scmp.eq.s32.totalorder %s34, 1
      %p157 = por %p155, %p156
      %p158 = scmp.ne.s32.totalorder %s149, %s150
      %p159 = scmp.eq.s32.totalorder %s34, 0
      %p160 = por %p158, %p159
      %p161 = scmp.ne.s32.totalorder %s149, %s150
      %p162 = scmp.eq.s32.totalorder %s35, 1
      %p163 = por %p161, %p162
      %p165 = scmp.ne.s32.totalorder %s150, %s164
      %p166 = scmp.eq.s32.totalorder %s35, 0
      %p167 = por %p165, %p166
      %s169 = sadd.s32 %s168, 1
      %p172 = scmp.eq.s32.totalorder %s29, 1
      %p173 = scmp.ne.s32.totalorder %s168, %s170
      %p174 = scmp.eq.s32.totalorder %s29, 0
      %p175 = por %p173, %p174
      %p176 = scmp.ne.s32.totalorder %s168, %s170
      %p177 = scmp.eq.s32.totalorder %s34, 1
      %p178 = por %p176, %p177
      %p179 = scmp.ne.s32.totalorder %s170, %s171
      %p180 = scmp.eq.s32.totalorder %s34, 0
      %p181 = por %p179, %p180
      %p182 = scmp.ne.s32.totalorder %s170, %s171
      %p183 = scmp.eq.s32.totalorder %s35, 1
      %p184 = por %p182, %p183
      %p186 = scmp.ne.s32.totalorder %s171, %s185
      %p187 = scmp.eq.s32.totalorder %s35, 0
      %p188 = por %p186, %p187
      %s190 = sadd.s32 %s189, 1
      %p193 = scmp.eq.s32.totalorder %s29, 1
      %p194 = scmp.ne.s32.totalorder %s189, %s191
      %p195 = scmp.eq.s32.totalorder %s29, 0
      %p196 = por %p194, %p195
      %p197 = scmp.ne.s32.totalorder %s189, %s191
      %p198 = scmp.eq.s32.totalorder %s34, 1
      %p199 = por %p197, %p198
      %p200 = scmp.ne.s32.totalorder %s191, %s192
      %p201 = scmp.eq.s32.totalorder %s34, 0
      %p202 = por %p200, %p201
      %p203 = scmp.ne.s32.totalorder %s191, %s192
      %p204 = scmp.eq.s32.totalorder %s35, 1
      %p205 = por %p203, %p204
      %p207 = scmp.ne.s32.totalorder %s192, %s206
      %p208 = scmp.eq.s32.totalorder %s35, 0
      %p209 = por %p207, %p208
      %s211 = sadd.s32 %s210, 1
      %p214 = scmp.eq.s32.totalorder %s29, 1
      %p215 = scmp.ne.s32.totalorder %s210, %s212
      %p216 = scmp.eq.s32.totalorder %s29, 0
      %p217 = por %p215, %p216
      %p218 = scmp.ne.s32.totalorder %s210, %s212
      %p219 = scmp.eq.s32.totalorder %s34, 1
      %p220 = por %p218, %p219
      %p221 = scmp.ne.s32.totalorder %s212, %s213
      %p222 = scmp.eq.s32.totalorder %s34, 0
      %p223 = por %p221, %p222
      %p224 = scmp.ne.s32.totalorder %s212, %s213
      %p225 = scmp.eq.s32.totalorder %s35, 1
      %p226 = por %p224, %p225
      %p228 = scmp.ne.s32.totalorder %s213, %s227
      %p229 = scmp.eq.s32.totalorder %s35, 0
      %p230 = por %p228, %p229
      %s232 = sadd.s32 %s231, 1
      %p235 = scmp.eq.s32.totalorder %s29, 1
      %p236 = scmp.ne.s32.totalorder %s231, %s233
      %p237 = scmp.eq.s32.totalorder %s29, 0
      %p238 = por %p236, %p237
      %p239 = scmp.ne.s32.totalorder %s231, %s233
      %p240 = scmp.eq.s32.totalorder %s34, 1
      %p241 = por %p239, %p240
      %p242 = scmp.ne.s32.totalorder %s233, %s234
      %p243 = scmp.eq.s32.totalorder %s34, 0
      %p244 = por %p242, %p243
      %p245 = scmp.ne.s32.totalorder %s233, %s234
      %p246 = scmp.eq.s32.totalorder %s35, 1
      %p247 = por %p245, %p246
      %p249 = scmp.ne.s32.totalorder %s234, %s248
      %p250 = scmp.eq.s32.totalorder %s35, 0
      %p251 = por %p249, %p250
      %s253 = sadd.s32 %s252, 1
      %p256 = scmp.eq.s32.totalorder %s29, 1
      %p257 = scmp.ne.s32.totalorder %s252, %s254
      %p258 = scmp.eq.s32.totalorder %s29, 0
      %p259 = por %p257, %p258
      %p260 = scmp.ne.s32.totalorder %s252, %s254
      %p261 = scmp.eq.s32.totalorder %s34, 1
      %p262 = por %p260, %p261
      %p263 = scmp.ne.s32.totalorder %s254, %s255
      %p264 = scmp.eq.s32.totalorder %s34, 0
      %p265 = por %p263, %p264
      %p266 = scmp.ne.s32.totalorder %s254, %s255
      %p267 = scmp.eq.s32.totalorder %s35, 1
      %p268 = por %p266, %p267
      %p270 = scmp.ne.s32.totalorder %s255, %s269
      %p271 = scmp.eq.s32.totalorder %s35, 0
      %p272 = por %p270, %p271
      %s274 = sadd.s32 %s273, 1
      %p277 = scmp.eq.s32.totalorder %s29, 1
      %p278 = scmp.ne.s32.totalorder %s273, %s275
      %p279 = scmp.eq.s32.totalorder %s29, 0
      %p280 = por %p278, %p279
      %p281 = scmp.ne.s32.totalorder %s273, %s275
      %p282 = scmp.eq.s32.totalorder %s34, 1
      %p283 = por %p281, %p282
      %p284 = scmp.ne.s32.totalorder %s275, %s276
      %p285 = scmp.eq.s32.totalorder %s34, 0
      %p286 = por %p284, %p285
      %p287 = scmp.ne.s32.totalorder %s275, %s276
      %p288 = scmp.eq.s32.totalorder %s35, 1
      %p289 = por %p287, %p288
      %p291 = scmp.ne.s32.totalorder %s276, %s290
      %p292 = scmp.eq.s32.totalorder %s35, 0
      %p293 = por %p291, %p292
      %s295 = sadd.s32 %s294, 1
      %p298 = scmp.eq.s32.totalorder %s29, 1
      %p299 = scmp.ne.s32.totalorder %s294, %s296
      %p300 = scmp.eq.s32.totalorder %s29, 0
      %p301 = por %p299, %p300
      %p302 = scmp.ne.s32.totalorder %s294, %s296
      %p303 = scmp.eq.s32.totalorder %s34, 1
      %p304 = por %p302, %p303
      %p305 = scmp.ne.s32.totalorder %s296, %s297
      %p306 = scmp.eq.s32.totalorder %s34, 0
      %p307 = por %p305, %p306
      %p308 = scmp.ne.s32.totalorder %s296, %s297
      %p309 = scmp.eq.s32.totalorder %s35, 1
      %p310 = por %p308, %p309
      %p312 = scmp.ne.s32.totalorder %s297, %s311
      %p313 = scmp.eq.s32.totalorder %s35, 0
      %p314 = por %p312, %p313
      %s316 = sadd.s32 %s315, 1
      %p319 = scmp.eq.s32.totalorder %s29, 1
      %p320 = scmp.ne.s32.totalorder %s315, %s317
      %p321 = scmp.eq.s32.totalorder %s29, 0
      %p322 = por %p320, %p321
      %p323 = scmp.ne.s32.totalorder %s315, %s317
      %p324 = scmp.eq.s32.totalorder %s34, 1
      %p325 = por %p323, %p324
      %p326 = scmp.ne.s32.totalorder %s317, %s318
      %p327 = scmp.eq.s32.totalorder %s34, 0
      %p328 = por %p326, %p327
      %p329 = scmp.ne.s32.totalorder %s317, %s318
      %p330 = scmp.eq.s32.totalorder %s35, 1
      %p331 = por %p329, %p330
      %p333 = scmp.ne.s32.totalorder %s318, %s332
      %p334 = scmp.eq.s32.totalorder %s35, 0
      %p335 = por %p333, %p334
      %s337 = sadd.s32 %s336, 1
      %p340 = scmp.eq.s32.totalorder %s29, 1
      %p341 = scmp.ne.s32.totalorder %s336, %s338
      %p342 = scmp.eq.s32.totalorder %s29, 0
      %p343 = por %p341, %p342
      %p344 = scmp.ne.s32.totalorder %s336, %s338
      %p345 = scmp.eq.s32.totalorder %s34, 1
      %p346 = por %p344, %p345
      %p347 = scmp.ne.s32.totalorder %s338, %s339
      %p348 = scmp.eq.s32.totalorder %s34, 0
      %p349 = por %p347, %p348
      %p350 = scmp.ne.s32.totalorder %s338, %s339
      %p351 = scmp.eq.s32.totalorder %s35, 1
      %p352 = por %p350, %p351
      %p354 = scmp.ne.s32.totalorder %s339, %s353
      %p355 = scmp.eq.s32.totalorder %s35, 0
      %p356 = por %p354, %p355
      %s357 = ssub.s32 %s29, %s36
      %p358 = scmp.eq.s32.totalorder %s357, 0
      %s360 = sadd.s32 %s359, 1
      %s361 = scalar_select %p358, %s359, %s360
      %p364 = pneg %p358
      %p365 = scmp.eq.s32.totalorder %s29, 1
      %p366 = por %p364, %p365
      %p367 = scmp.ne.s32.totalorder %s359, %s362
      %p368 = scmp.eq.s32.totalorder %s29, 0
      %p369 = por %p367, %p368
      %p370 = scmp.ne.s32.totalorder %s359, %s362
      %p371 = scmp.eq.s32.totalorder %s34, 1
      %p372 = por %p370, %p371
      %p373 = scmp.ne.s32.totalorder %s362, %s363
      %p374 = scmp.eq.s32.totalorder %s34, 0
      %p375 = por %p373, %p374
      %p376 = scmp.ne.s32.totalorder %s362, %s363
      %p377 = scmp.eq.s32.totalorder %s35, 1
      %p378 = por %p376, %p377
      %p380 = scmp.ne.s32.totalorder %s363, %s379
      %p381 = scmp.eq.s32.totalorder %s35, 0
      %p382 = por %p380, %p381
      %p383 = scmp.le.s32.totalorder 1, %s29
      %p384 = scmp.lt.s32.totalorder %s29, 3
      %p385 = pnand %p383, %p384
      %p386 = pneg %p385
      // Predicated region
      $region9: #{_lambda_.1} parent=5 // pred_check
        _
      $region10: #{_lambda_.1} parent=5 // pred_check_branch
        %388 = sbr.rel (%p385) target = $region12
      $region11: #{_lambda_.1} parent=5 // pred_region
        %s389 = ssub.s32 %s29, 1
        // Predicated region
        $region13: #{_lambda_.1} parent=11 // pred_check
          %p390 = pneg %p76
        $region14: #{_lambda_.1} parent=11 // pred_check_branch
          %392 = sbr.rel (%p390) target = $region16
        $region15: #{_lambda_.1} parent=11 // pred_region
          %s394 = ssub.s32 768, 768
          %395 = vsyncadd [#allocation4], %s394
          %s396 = sshll.u32 [#allocation3], 4
          %s397 = int_to_ptr.vmem [resolvable:$true] %s396
          %402 = dma.hbm_to_vmem [thread:$0]  %s1, 768, %s397, [#allocation4], 128, 128, 8
        $region16: #{_lambda_.1} parent=11 // pred_fallthru
          _
        // Predicated region
        $region17: #{_lambda_.1} parent=11 // pred_check
          %p403 = pneg %p97
        $region18: #{_lambda_.1} parent=11 // pred_check_branch
          %405 = sbr.rel (%p403) target = $region20
        $region19: #{_lambda_.1} parent=11 // pred_region
          %s407 = ssub.s32 1536, 1536
          %408 = vsyncadd [#allocation8], %s407
          %s409 = sshll.u32 [#allocation7], 4
          %s410 = int_to_ptr.vmem [resolvable:$true] %s409
          %415 = dma.hbm_to_vmem [thread:$0]  %s2, 1536, %s410, [#allocation8], 128, 128, 8
        $region20: #{_lambda_.1} parent=11 // pred_fallthru
          _
        // Predicated region
        $region21: #{_lambda_.1} parent=11 // pred_check
          %p416 = pneg %p118
        $region22: #{_lambda_.1} parent=11 // pred_check_branch
          %418 = sbr.rel (%p416) target = $region24
        $region23: #{_lambda_.1} parent=11 // pred_region
          _
        $region24: #{_lambda_.1} parent=11 // pred_fallthru
          _
        // Predicated region
        $region25: #{_lambda_.1} parent=11 // pred_check
          %p419 = pneg %p139
        $region26: #{_lambda_.1} parent=11 // pred_check_branch
          %421 = sbr.rel (%p419) target = $region28
        $region27: #{_lambda_.1} parent=11 // pred_region
          %s423 = ssub.s32 3072, 3072
          %424 = vsyncadd [#allocation8], %s423
          %s425 = sshll.u32 [#allocation9], 4
          %s426 = int_to_ptr.vmem [resolvable:$true] %s425
          %431 = dma.hbm_to_vmem [thread:$0]  %s4, 3072, %s426, [#allocation8], 128, 128, 8
        $region28: #{_lambda_.1} parent=11 // pred_fallthru
          _
        // Predicated region
        $region29: #{_lambda_.1} parent=11 // pred_check
          %p432 = pneg %p160
        $region30: #{_lambda_.1} parent=11 // pred_check_branch
          %434 = sbr.rel (%p432) target = $region32
        $region31: #{_lambda_.1} parent=11 // pred_region
          %s436 = ssub.s32 64, 64
          %437 = vsyncadd [#allocation11], %s436
          %s439 = sshll.u32 [#allocation10], 4
          %s440 = int_to_ptr.vmem [resolvable:$true] %s439
          %442 = dma.hbm_to_vmem [thread:$0]  %s5, 64, %s440, [#allocation11]
        $region32: #{_lambda_.1} parent=11 // pred_fallthru
          _
        // Predicated region
        $region33: #{_lambda_.1} parent=11 // pred_check
          %p443 = pneg %p181
        $region34: #{_lambda_.1} parent=11 // pred_check_branch
          %445 = sbr.rel (%p443) target = $region36
        $region35: #{_lambda_.1} parent=11 // pred_region
          %s447 = ssub.s32 64, 64
          %448 = vsyncadd [#allocation11], %s447
          %s450 = sshll.u32 [#allocation12], 4
          %s451 = int_to_ptr.vmem [resolvable:$true] %s450
          %453 = dma.hbm_to_vmem [thread:$0]  %s6, 64, %s451, [#allocation11]
        $region36: #{_lambda_.1} parent=11 // pred_fallthru
          _
        // Predicated region
        $region37: #{_lambda_.1} parent=11 // pred_check
          %p454 = pneg %p202
        $region38: #{_lambda_.1} parent=11 // pred_check_branch
          %456 = sbr.rel (%p454) target = $region40
        $region39: #{_lambda_.1} parent=11 // pred_region
          %s458 = ssub.s32 64, 64
          %459 = vsyncadd [#allocation14], %s458
          %s461 = sshll.u32 [#allocation13], 4
          %s462 = int_to_ptr.vmem [resolvable:$true] %s461
          %464 = dma.hbm_to_vmem [thread:$0]  %s7, 64, %s462, [#allocation14]
        $region40: #{_lambda_.1} parent=11 // pred_fallthru
          _
        // Predicated region
        $region41: #{_lambda_.1} parent=11 // pred_check
          %p465 = pneg %p223
        $region42: #{_lambda_.1} parent=11 // pred_check_branch
          %467 = sbr.rel (%p465) target = $region44
        $region43: #{_lambda_.1} parent=11 // pred_region
          %s469 = ssub.s32 64, 64
          %470 = vsyncadd [#allocation14], %s469
          %s472 = sshll.u32 [#allocation15], 4
          %s473 = int_to_ptr.vmem [resolvable:$true] %s472
          %475 = dma.hbm_to_vmem [thread:$0]  %s8, 64, %s473, [#allocation14]
        $region44: #{_lambda_.1} parent=11 // pred_fallthru
          _
        // Predicated region
        $region45: #{_lambda_.1} parent=11 // pred_check
          %p476 = pneg %p244
        $region46: #{_lambda_.1} parent=11 // pred_check_branch
          %478 = sbr.rel (%p476) target = $region48
        $region47: #{_lambda_.1} parent=11 // pred_region
          _
        $region48: #{_lambda_.1} parent=11 // pred_fallthru
          _
        // Predicated region
        $region49: #{_lambda_.1} parent=11 // pred_check
          %p479 = pneg %p265
        $region50: #{_lambda_.1} parent=11 // pred_check_branch
          %481 = sbr.rel (%p479) target = $region52
        $region51: #{_lambda_.1} parent=11 // pred_region
          _
        $region52: #{_lambda_.1} parent=11 // pred_fallthru
          _
        // Predicated region
        $region53: #{_lambda_.1} parent=11 // pred_check
          %p482 = pneg %p286
        $region54: #{_lambda_.1} parent=11 // pred_check_branch
          %484 = sbr.rel (%p482) target = $region56
        $region55: #{_lambda_.1} parent=11 // pred_region
          _
        $region56: #{_lambda_.1} parent=11 // pred_fallthru
          _
        // Predicated region
        $region57: #{_lambda_.1} parent=11 // pred_check
          %p485 = pneg %p307
        $region58: #{_lambda_.1} parent=11 // pred_check_branch
          %487 = sbr.rel (%p485) target = $region60
        $region59: #{_lambda_.1} parent=11 // pred_region
          _
        $region60: #{_lambda_.1} parent=11 // pred_fallthru
          _
        // Predicated region
        $region61: #{_lambda_.1} parent=11 // pred_check
          %p488 = pneg %p328
        $region62: #{_lambda_.1} parent=11 // pred_check_branch
          %490 = sbr.rel (%p488) target = $region64
        $region63: #{_lambda_.1} parent=11 // pred_region
          _
        $region64: #{_lambda_.1} parent=11 // pred_fallthru
          _
        // Predicated region
        $region65: #{_lambda_.1} parent=11 // pred_check
          %p491 = pneg %p349
        $region66: #{_lambda_.1} parent=11 // pred_check_branch
          %493 = sbr.rel (%p491) target = $region68
        $region67: #{_lambda_.1} parent=11 // pred_region
          %s495 = ssub.s32 16, 16
          %496 = vsyncadd [#allocation6], %s495
          %499 = dma.hbm_to_smem %s14, 16, [#allocation16], [#allocation6]
        $region68: #{_lambda_.1} parent=11 // pred_fallthru
          _
      $region12: #{_lambda_.1} parent=5 // pred_fallthru
        _
      %p500 = scmp.lt.s32.totalorder %s29, 2
      // Predicated region
      $region69: #{_lambda_.1} parent=5 // pred_check
        %p501 = pneg %p500
      $region70: #{_lambda_.1} parent=5 // pred_check_branch
        %503 = sbr.rel (%p501) target = $region72
      $region71: #{_lambda_.1} parent=5 // pred_region
        // Predicated region
        $region73: #{_lambda_.1} parent=71 // pred_check
          %p504 = pneg %p49
        $region74: #{_lambda_.1} parent=71 // pred_check_branch
          %506 = sbr.rel (%p504) target = $region76
        $region75: #{_lambda_.1} parent=71 // pred_region
          %p507 = scmp.lt.s32.totalorder %s29, 1
          %s508 = scalar_select %p507, %s29, 1
          %s509 = smul.addr %s508, 4
          %s510 = smul.addr %s509, 8
          %s511 = scalar_lea.vmem %s0, %s510
        $region76: #{_lambda_.1} parent=71 // pred_fallthru
          _
      $region72: #{_lambda_.1} parent=5 // pred_fallthru
        _
      %p512 = scmp.le.s32.totalorder 1, %s29
      %p513 = scmp.lt.s32.totalorder %s29, 3
      %p514 = pnand %p512, %p513
      %p515 = pneg %p514
      // Predicated region
      $region77: #{_lambda_.1} parent=5 // pred_check
        _
      $region78: #{_lambda_.1} parent=5 // pred_check_branch
        %517 = sbr.rel (%p514) target = $region80
      $region79: #{_lambda_.1} parent=5 // pred_region
        %s518 = ssub.s32 %s29, 1
        // Predicated region
        $region81: #{_lambda_.1} parent=79 // pred_check
          %p519 = pneg %p76
        $region82: #{_lambda_.1} parent=79 // pred_check_branch
          %521 = sbr.rel (%p519) target = $region84
        $region83: #{_lambda_.1} parent=79 // pred_region
          %522 = dma.done [#allocation4], 768
        $region84: #{_lambda_.1} parent=79 // pred_fallthru
          _
        // Predicated region
        $region85: #{_lambda_.1} parent=79 // pred_check
          %p523 = pneg %p97
        $region86: #{_lambda_.1} parent=79 // pred_check_branch
          %525 = sbr.rel (%p523) target = $region88
        $region87: #{_lambda_.1} parent=79 // pred_region
          %526 = dma.done [#allocation8], 1536
        $region88: #{_lambda_.1} parent=79 // pred_fallthru
          _
        // Predicated region
        $region89: #{_lambda_.1} parent=79 // pred_check
          %p527 = pneg %p139
        $region90: #{_lambda_.1} parent=79 // pred_check_branch
          %529 = sbr.rel (%p527) target = $region92
        $region91: #{_lambda_.1} parent=79 // pred_region
          %530 = dma.done [#allocation8], 3072
        $region92: #{_lambda_.1} parent=79 // pred_fallthru
          _
        // Predicated region
        $region93: #{_lambda_.1} parent=79 // pred_check
          %p531 = pneg %p160
        $region94: #{_lambda_.1} parent=79 // pred_check_branch
          %533 = sbr.rel (%p531) target = $region96
        $region95: #{_lambda_.1} parent=79 // pred_region
          %534 = dma.done [#allocation11], 64
        $region96: #{_lambda_.1} parent=79 // pred_fallthru
          _
        // Predicated region
        $region97: #{_lambda_.1} parent=79 // pred_check
          %p535 = pneg %p181
        $region98: #{_lambda_.1} parent=79 // pred_check_branch
          %537 = sbr.rel (%p535) target = $region100
        $region99: #{_lambda_.1} parent=79 // pred_region
          %538 = dma.done [#allocation11], 64
        $region100: #{_lambda_.1} parent=79 // pred_fallthru
          _
        // Predicated region
        $region101: #{_lambda_.1} parent=79 // pred_check
          %p539 = pneg %p202
        $region102: #{_lambda_.1} parent=79 // pred_check_branch
          %541 = sbr.rel (%p539) target = $region104
        $region103: #{_lambda_.1} parent=79 // pred_region
          %542 = dma.done [#allocation14], 64
        $region104: #{_lambda_.1} parent=79 // pred_fallthru
          _
        // Predicated region
        $region105: #{_lambda_.1} parent=79 // pred_check
          %p543 = pneg %p223
        $region106: #{_lambda_.1} parent=79 // pred_check_branch
          %545 = sbr.rel (%p543) target = $region108
        $region107: #{_lambda_.1} parent=79 // pred_region
          %546 = dma.done [#allocation14], 64
        $region108: #{_lambda_.1} parent=79 // pred_fallthru
          _
        // Predicated region
        $region109: #{_lambda_.1} parent=79 // pred_check
          %p547 = pneg %p349
        $region110: #{_lambda_.1} parent=79 // pred_check_branch
          %549 = sbr.rel (%p547) target = $region112
        $region111: #{_lambda_.1} parent=79 // pred_region
          %550 = dma.done [#allocation6], 16
        $region112: #{_lambda_.1} parent=79 // pred_fallthru
          _
        %551 = sfence
        %p552 = scmp.lt.s32.totalorder %s34, 1
        %s553 = scalar_select %p552, %s34, 1
        %s554 = smul.addr %s553, 4
        %s555 = smul.addr %s554, 8
        %s556 = scalar_lea.vmem %s0, %s555
        %p557 = pneg %p55
        %p558 = pneg %p52
        %p559 = pneg %p76
        %p560 = pneg %p73
        %p561 = pneg %p97
        %p562 = pneg %p94
        %p563 = pneg %p118
        %p564 = pneg %p115
        %p565 = pneg %p139
        %p566 = pneg %p136
        %p567 = pneg %p160
        %p568 = pneg %p157
        %p569 = pneg %p181
        %p570 = pneg %p178
        %p571 = pneg %p202
        %p572 = pneg %p199
        %p573 = pneg %p223
        %p574 = pneg %p220
        %p575 = pneg %p244
        %p576 = pneg %p241
        %p577 = pneg %p265
        %p578 = pneg %p262
        %p579 = pneg %p286
        %p580 = pneg %p283
        %p581 = pneg %p307
        %p582 = pneg %p304
        %p583 = pneg %p328
        %p584 = pneg %p325
        %p585 = pneg %p349
        %p586 = pneg %p346
        %p587 = pneg %p375
        %p588 = pneg %p372
        %s589 = sand.u32 %s362, 1
        %s590 = scalar_lea.sflag [#allocation5], %s589
        %s591 = sand.u32 %s362, 1
        %s592 = smul.addr %s591, 4
        %s593 = scalar_lea.vmem [#allocation17], %s592
        %p594 = scmp.lt.s32.totalorder %s34, 1
        %s595 = scalar_select %p594, %s34, 1
        %s596 = smul.addr %s595, 4
        %s597 = smul.addr %s596, 8
        %s598 = scalar_lea.vmem %s0, %s597
        %vm599 = vcmask 261120
        %600 = vst.msk [vmem:[#allocation2] sm:$0xff] %vm599, 0.0
        %vm601 = vcmask 254976
        %602 = vst.msk [vmem:[#allocation2 + $0x8] sm:$0x3] %vm601, 0.0
        %603 = vst.msk [vmem:[#allocation2 + $0x10] sm:$0xff] %vm599, 0.0
        %604 = vst.msk [vmem:[#allocation2 + $0x18] sm:$0x3] %vm601, 0.0
        %605 = vst.msk [vmem:[#allocation2 + $0x20] sm:$0xff] %vm599, 0.0
        %606 = vst.msk [vmem:[#allocation2 + $0x28] sm:$0x3] %vm601, 0.0
        %607 = vst.msk [vmem:[#allocation2 + $0x30] sm:$0xff] %vm599, 0.0
        %608 = vst.msk [vmem:[#allocation2 + $0x38] sm:$0x3] %vm601, 0.0
        %609 = vst.msk [vmem:[#allocation2 + $0x40] sm:$0xff] %vm599, 0.0
        %610 = vst.msk [vmem:[#allocation2 + $0x48] sm:$0x3] %vm601, 0.0
        %611 = vst.msk [vmem:[#allocation2 + $0x50] sm:$0xff] %vm599, 0.0
        %612 = vst.msk [vmem:[#allocation2 + $0x58] sm:$0x3] %vm601, 0.0
        %613 = vst.msk [vmem:[#allocation2 + $0x60] sm:$0xff] %vm599, 0.0
        %614 = vst.msk [vmem:[#allocation2 + $0x68] sm:$0x3] %vm601, 0.0
        %615 = vst.msk [vmem:[#allocation2 + $0x70] sm:$0xff] %vm599, 0.0
        %616 = vst.msk [vmem:[#allocation2 + $0x78] sm:$0x3] %vm601, 0.0
        %617 = vst.msk [vmem:[#allocation2 + $0x80] sm:$0xff] %vm599, 0.0
        %618 = vst.msk [vmem:[#allocation2 + $0x88] sm:$0x3] %vm601, 0.0
        %619 = vst.msk [vmem:[#allocation2 + $0x90] sm:$0xff] %vm599, 0.0
        %620 = vst.msk [vmem:[#allocation2 + $0x98] sm:$0x3] %vm601, 0.0
        %621 = vst.msk [vmem:[#allocation2 + $0xa0] sm:$0xff] %vm599, 0.0
        %622 = vst.msk [vmem:[#allocation2 + $0xa8] sm:$0x3] %vm601, 0.0
        %623 = vst.msk [vmem:[#allocation2 + $0xb0] sm:$0xff] %vm599, 0.0
        %624 = vst.msk [vmem:[#allocation2 + $0xb8] sm:$0x3] %vm601, 0.0
        %v625 = vld [vmem:[%s598] sm:$0xff]
        %v626 = vld [vmem:[%s598 + $0x8] sm:$0xff]
        %v627 = vld [vmem:[%s598 + $0x10] sm:$0xff]
        %v628 = vld [vmem:[%s598 + $0x18] sm:$0xff]
        %633 = vrot.lane.b32.xlu0 %v625, 24
        %v634 = vpop.permute.xlu0 %633
        %635 = vrot.lane.b32.xlu0 %v626, 24
        %v636 = vpop.permute.xlu0 %635
        %637 = vrot.lane.b32.xlu0 %v627, 24
        %v638 = vpop.permute.xlu0 %637
        %639 = vrot.lane.b32.xlu0 %v628, 24
        %v640 = vpop.permute.xlu0 %639
        %s645 = scalar_lea.vmem [#allocation2], 128
        %vm646 = vcmask 261312
        %647 = vst.msk [vmem:[%s645 + $0x1] sm:$0xff] %vm646, %v634
        %648 = vst.msk [vmem:[%s645 + $0x11] sm:$0xff] %vm646, %v636
        %649 = vst.msk [vmem:[%s645 + $0x21] sm:$0xff] %vm646, %v638
        %650 = vst.msk [vmem:[%s645 + $0x31] sm:$0xff] %vm646, %v640
        %s651 = scalar_lea.vmem [#allocation2], 112
        %v652 = vld [vmem:[%s651] sm:$0xff]
        %v653 = vld [vmem:[%s651 + $0x10] sm:$0xff]
        %v654 = vld [vmem:[%s651 + $0x20] sm:$0xff]
        %v655 = vld [vmem:[%s651 + $0x30] sm:$0xff]
        %v656 = vld [vmem:[#allocation3] sm:$0xff]
        %v657 = vld [vmem:[%s651 + $0x1] sm:$0xff]
        %v658 = vld [vmem:[%s651 + $0x11] sm:$0xff]
        %v659 = vld [vmem:[%s651 + $0x21] sm:$0xff]
        %v660 = vld [vmem:[%s651 + $0x31] sm:$0xff]
        %s661 = scalar_lea.vmem [#allocation3], 8
        %v662 = vld [vmem:[%s661] sm:$0xff]
        %667 = vrot.lane.b32.xlu0 %v657, 104
        %v668 = vpop.permute.xlu0 %667
        %669 = vrot.lane.b32.xlu0 %v658, 104
        %v670 = vpop.permute.xlu0 %669
        %671 = vrot.lane.b32.xlu0 %v659, 104
        %v672 = vpop.permute.xlu0 %671
        %673 = vrot.lane.b32.xlu0 %v660, 104
        %v674 = vpop.permute.xlu0 %673
        %vm675 = vcmask 64512
        %v676 = vsel %vm675, %v668, 0
        %v678 = vsel %vm675, %v670, 0
        %v680 = vsel %vm675, %v672, 0
        %v682 = vsel %vm675, %v674, 0
        %684 = vmatprep.subr.mxu0 0.0
        %685 = vmatpush1.msra.mxu0 0.0
        %686 = vmatprep.subr.mxu0 0.0
        %687 = vmatpush1.msra.mxu0 0.0
        %688 = vmatprep.subr.mxu0 0.0
        %689 = vmatpush1.msra.mxu0 0.0
        %690 = vmatprep.subr.mxu0 0.0
        %691 = vmatpush1.msra.mxu0 0.0
        %692 = vmatprep.subr.mxu0 0.0
        %693 = vmatpush1.msra.mxu0 0.0
        %694 = vmatprep.subr.mxu0 0.0
        %695 = vmatpush1.msra.mxu0 0.0
        %696 = vmatprep.subr.mxu0 0.0
        %697 = vmatpush1.msra.mxu0 0.0
        %698 = vmatprep.subr.mxu0 0.0
        %699 = vmatpush1.msra.mxu0 0.0
        %700 = vmatprep.subr.mxu0 0.0
        %701 = vmatpush1.msra.mxu0 0.0
        %702 = vmatprep.subr.mxu0 0.0
        %703 = vmatpush1.msra.mxu0 0.0
        %704 = vmatprep.subr.mxu0 0.0
        %705 = vmatpush1.msra.mxu0 0.0
        %706 = vmatprep.subr.mxu0 0.0
        %707 = vmatpush1.msra.mxu0 0.0
        %708 = vmatprep.subr.mxu0 0.0
        %709 = vmatpush1.msra.mxu0 0.0
        %710 = vmatprep.subr.mxu0 0.0
        %711 = vmatpush1.msra.mxu0 0.0
        %712 = vmatprep.subr.mxu0 0.0
        %713 = vmatpush1.msra.mxu0 0.0
        %714 = vmatprep.subr.mxu0 0.0
        %715 = vmatpush1.msra.mxu0 %v662
        %716 = vmatprep.subr.mxu0 0.0
        %717 = vmatpush2.msra.mxu0 0.0
        %718 = vmatprep.subr.mxu0 0.0
        %719 = vmatpush2.msra.mxu0 0.0
        %720 = vmatprep.subr.mxu0 0.0
        %721 = vmatpush2.msra.mxu0 0.0
        %722 = vmatprep.subr.mxu0 0.0
        %723 = vmatpush2.msra.mxu0 0.0
        %724 = vmatprep.subr.mxu0 0.0
        %725 = vmatpush2.msra.mxu0 0.0
        %726 = vmatprep.subr.mxu0 0.0
        %727 = vmatpush2.msra.mxu0 0.0
        %728 = vmatprep.subr.mxu0 0.0
        %729 = vmatpush2.msra.mxu0 0.0
        %730 = vmatprep.subr.mxu0 0.0
        %731 = vmatpush2.msra.mxu0 0.0
        %732 = vmatprep.subr.mxu0 0.0
        %733 = vmatpush2.msra.mxu0 0.0
        %734 = vmatprep.subr.mxu0 0.0
        %735 = vmatpush2.msra.mxu0 0.0
        %736 = vmatprep.subr.mxu0 0.0
        %737 = vmatpush2.msra.mxu0 0.0
        %738 = vmatprep.subr.mxu0 0.0
        %739 = vmatpush2.msra.mxu0 0.0
        %740 = vmatprep.subr.mxu0 0.0
        %741 = vmatpush2.msra.mxu0 0.0
        %742 = vmatprep.subr.mxu0 0.0
        %743 = vmatpush2.msra.mxu0 0.0
        %744 = vmatprep.subr.mxu0 0.0
        %745 = vmatpush2.msra.mxu0 0.0
        %746 = vmatprep.subr.mxu0 0.0
        %747 = vmatpush2.msra.mxu0 0.0
        %748 = vmatprep.mubr.f32.mxu0 0.0
        %749 = vmatmul.mubr.f32.gmra.mxu0 %v676
        %v750 = vpop.f32.mrf.mxu0
        %v751 = vadd.f32 0.0, %v750
        %v752 = vpop.f32.mrf.mxu0
        %753 = vmatprep.mubr.f32.mxu0 0.0
        %754 = vmatmul.mubr.f32.gmra.mxu0 %v678
        %v755 = vpop.f32.mrf.mxu0
        %v756 = vadd.f32 0.0, %v755
        %v757 = vpop.f32.mrf.mxu0
        %758 = vmatprep.mubr.f32.mxu0 0.0
        %759 = vmatmul.mubr.f32.gmra.mxu0 %v680
        %v760 = vpop.f32.mrf.mxu0
        %v761 = vadd.f32 0.0, %v760
        %v762 = vpop.f32.mrf.mxu0
        %763 = vmatprep.mubr.f32.mxu0 0.0
        %764 = vmatmul.mubr.f32.gmra.mxu0 %v682
        %v765 = vpop.f32.mrf.mxu0
        %v766 = vadd.f32 0.0, %v765
        %v767 = vpop.f32.mrf.mxu0
        %768 = vdwg.mxu0
        %773 = vrot.lane.b32.xlu0 %v652, 104
        %v774 = vpop.permute.xlu0 %773
        %775 = vrot.lane.b32.xlu0 %v653, 104
        %v776 = vpop.permute.xlu0 %775
        %777 = vrot.lane.b32.xlu0 %v654, 104
        %v778 = vpop.permute.xlu0 %777
        %779 = vrot.lane.b32.xlu0 %v655, 104
        %v780 = vpop.permute.xlu0 %779
        %v781 = vsel %vm675, %v774, 0
        %v783 = vsel %vm675, %v776, 0
        %v785 = vsel %vm675, %v778, 0
        %v787 = vsel %vm675, %v780, 0
        %789 = vmatprep.subr.mxu0 0.0
        %790 = vmatpush1.msra.mxu0 0.0
        %791 = vmatprep.subr.mxu0 0.0
        %792 = vmatpush1.msra.mxu0 0.0
        %793 = vmatprep.subr.mxu0 0.0
        %794 = vmatpush1.msra.mxu0 0.0
        %795 = vmatprep.subr.mxu0 0.0
        %796 = vmatpush1.msra.mxu0 0.0
        %797 = vmatprep.subr.mxu0 0.0
        %798 = vmatpush1.msra.mxu0 0.0
        %799 = vmatprep.subr.mxu0 0.0
        %800 = vmatpush1.msra.mxu0 0.0
        %801 = vmatprep.subr.mxu0 0.0
        %802 = vmatpush1.msra.mxu0 0.0
        %803 = vmatprep.subr.mxu0 0.0
        %804 = vmatpush1.msra.mxu0 0.0
        %805 = vmatprep.subr.mxu0 0.0
        %806 = vmatpush1.msra.mxu0 0.0
        %807 = vmatprep.subr.mxu0 0.0
        %808 = vmatpush1.msra.mxu0 0.0
        %809 = vmatprep.subr.mxu0 0.0
        %810 = vmatpush1.msra.mxu0 0.0
        %811 = vmatprep.subr.mxu0 0.0
        %812 = vmatpush1.msra.mxu0 0.0
        %813 = vmatprep.subr.mxu0 0.0
        %814 = vmatpush1.msra.mxu0 0.0
        %815 = vmatprep.subr.mxu0 0.0
        %816 = vmatpush1.msra.mxu0 0.0
        %817 = vmatprep.subr.mxu0 0.0
        %818 = vmatpush1.msra.mxu0 0.0
        %819 = vmatprep.subr.mxu0 0.0
        %820 = vmatpush1.msra.mxu0 %v656
        %821 = vmatprep.subr.mxu0 0.0
        %822 = vmatpush2.msra.mxu0 0.0
        %823 = vmatprep.subr.mxu0 0.0
        %824 = vmatpush2.msra.mxu0 0.0
        %825 = vmatprep.subr.mxu0 0.0
        %826 = vmatpush2.msra.mxu0 0.0
        %827 = vmatprep.subr.mxu0 0.0
        %828 = vmatpush2.msra.mxu0 0.0
        %829 = vmatprep.subr.mxu0 0.0
        %830 = vmatpush2.msra.mxu0 0.0
        %831 = vmatprep.subr.mxu0 0.0
        %832 = vmatpush2.msra.mxu0 0.0
        %833 = vmatprep.subr.mxu0 0.0
        %834 = vmatpush2.msra.mxu0 0.0
        %835 = vmatprep.subr.mxu0 0.0
        %836 = vmatpush2.msra.mxu0 0.0
        %837 = vmatprep.subr.mxu0 0.0
        %838 = vmatpush2.msra.mxu0 0.0
        %839 = vmatprep.subr.mxu0 0.0
        %840 = vmatpush2.msra.mxu0 0.0
        %841 = vmatprep.subr.mxu0 0.0
        %842 = vmatpush2.msra.mxu0 0.0
        %843 = vmatprep.subr.mxu0 0.0
        %844 = vmatpush2.msra.mxu0 0.0
        %845 = vmatprep.subr.mxu0 0.0
        %846 = vmatpush2.msra.mxu0 0.0
        %847 = vmatprep.subr.mxu0 0.0
        %848 = vmatpush2.msra.mxu0 0.0
        %849 = vmatprep.subr.mxu0 0.0
        %850 = vmatpush2.msra.mxu0 0.0
        %851 = vmatprep.subr.mxu0 0.0
        %852 = vmatpush2.msra.mxu0 0.0
        %853 = vmatprep.mubr.f32.mxu0 0.0
        %854 = vmatmul.mubr.f32.gmra.mxu0 %v781
        %v855 = vpop.f32.mrf.mxu0
        %v856 = vadd.f32 %v751, %v855
        %v857 = vpop.f32.mrf.mxu0
        %858 = vmatprep.mubr.f32.mxu0 0.0
        %859 = vmatmul.mubr.f32.gmra.mxu0 %v783
        %v860 = vpop.f32.mrf.mxu0
        %v861 = vadd.f32 %v756, %v860
        %v862 = vpop.f32.mrf.mxu0
        %863 = vmatprep.mubr.f32.mxu0 0.0
        %864 = vmatmul.mubr.f32.gmra.mxu0 %v785
        %v865 = vpop.f32.mrf.mxu0
        %v866 = vadd.f32 %v761, %v865
        %v867 = vpop.f32.mrf.mxu0
        %868 = vmatprep.mubr.f32.mxu0 0.0
        %869 = vmatmul.mubr.f32.gmra.mxu0 %v787
        %v870 = vpop.f32.mrf.mxu0
        %v871 = vadd.f32 %v766, %v870
        %v872 = vpop.f32.mrf.mxu0
        %873 = vdwg.mxu0
        %v874 = vld [vmem:[%s651 + $0x2] sm:$0xff]
        %v875 = vld [vmem:[%s651 + $0x12] sm:$0xff]
        %v876 = vld [vmem:[%s651 + $0x22] sm:$0xff]
        %v877 = vld [vmem:[%s651 + $0x32] sm:$0xff]
        %s878 = scalar_lea.vmem [#allocation3], 16
        %v879 = vld [vmem:[%s878] sm:$0xff]
        %884 = vrot.lane.b32.xlu0 %v874, 104
        %v885 = vpop.permute.xlu0 %884
        %886 = vrot.lane.b32.xlu0 %v875, 104
        %v887 = vpop.permute.xlu0 %886
        %888 = vrot.lane.b32.xlu0 %v876, 104
        %v889 = vpop.permute.xlu0 %888
        %890 = vrot.lane.b32.xlu0 %v877, 104
        %v891 = vpop.permute.xlu0 %890
        %v892 = vsel %vm675, %v885, 0
        %v894 = vsel %vm675, %v887, 0
        %v896 = vsel %vm675, %v889, 0
        %v898 = vsel %vm675, %v891, 0
        %900 = vmatprep.subr.mxu0 0.0
        %901 = vmatpush1.msra.mxu0 0.0
        %902 = vmatprep.subr.mxu0 0.0
        %903 = vmatpush1.msra.mxu0 0.0
        %904 = vmatprep.subr.mxu0 0.0
        %905 = vmatpush1.msra.mxu0 0.0
        %906 = vmatprep.subr.mxu0 0.0
        %907 = vmatpush1.msra.mxu0 0.0
        %908 = vmatprep.subr.mxu0 0.0
        %909 = vmatpush1.msra.mxu0 0.0
        %910 = vmatprep.subr.mxu0 0.0
        %911 = vmatpush1.msra.mxu0 0.0
        %912 = vmatprep.subr.mxu0 0.0
        %913 = vmatpush1.msra.mxu0 0.0
        %914 = vmatprep.subr.mxu0 0.0
        %915 = vmatpush1.msra.mxu0 0.0
        %916 = vmatprep.subr.mxu0 0.0
        %917 = vmatpush1.msra.mxu0 0.0
        %918 = vmatprep.subr.mxu0 0.0
        %919 = vmatpush1.msra.mxu0 0.0
        %920 = vmatprep.subr.mxu0 0.0
        %921 = vmatpush1.msra.mxu0 0.0
        %922 = vmatprep.subr.mxu0 0.0
        %923 = vmatpush1.msra.mxu0 0.0
        %924 = vmatprep.subr.mxu0 0.0
        %925 = vmatpush1.msra.mxu0 0.0
        %926 = vmatprep.subr.mxu0 0.0
        %927 = vmatpush1.msra.mxu0 0.0
        %928 = vmatprep.subr.mxu0 0.0
        %929 = vmatpush1.msra.mxu0 0.0
        %930 = vmatprep.subr.mxu0 0.0
        %931 = vmatpush1.msra.mxu0 %v879
        %932 = vmatprep.subr.mxu0 0.0
        %933 = vmatpush2.msra.mxu0 0.0
        %934 = vmatprep.subr.mxu0 0.0
        %935 = vmatpush2.msra.mxu0 0.0
        %936 = vmatprep.subr.mxu0 0.0
        %937 = vmatpush2.msra.mxu0 0.0
        %938 = vmatprep.subr.mxu0 0.0
        %939 = vmatpush2.msra.mxu0 0.0
        %940 = vmatprep.subr.mxu0 0.0
        %941 = vmatpush2.msra.mxu0 0.0
        %942 = vmatprep.subr.mxu0 0.0
        %943 = vmatpush2.msra.mxu0 0.0
        %944 = vmatprep.subr.mxu0 0.0
        %945 = vmatpush2.msra.mxu0 0.0
        %946 = vmatprep.subr.mxu0 0.0
        %947 = vmatpush2.msra.mxu0 0.0
        %948 = vmatprep.subr.mxu0 0.0
        %949 = vmatpush2.msra.mxu0 0.0
        %950 = vmatprep.subr.mxu0 0.0
        %951 = vmatpush2.msra.mxu0 0.0
        %952 = vmatprep.subr.mxu0 0.0
        %953 = vmatpush2.msra.mxu0 0.0
        %954 = vmatprep.subr.mxu0 0.0
        %955 = vmatpush2.msra.mxu0 0.0
        %956 = vmatprep.subr.mxu0 0.0
        %957 = vmatpush2.msra.mxu0 0.0
        %958 = vmatprep.subr.mxu0 0.0
        %959 = vmatpush2.msra.mxu0 0.0
        %960 = vmatprep.subr.mxu0 0.0
        %961 = vmatpush2.msra.mxu0 0.0
        %962 = vmatprep.subr.mxu0 0.0
        %963 = vmatpush2.msra.mxu0 0.0
        %964 = vmatprep.mubr.f32.mxu0 0.0
        %965 = vmatmul.mubr.f32.gmra.mxu0 %v892
        %v966 = vpop.f32.mrf.mxu0
        %v967 = vadd.f32 0.0, %v966
        %v968 = vpop.f32.mrf.mxu0
        %969 = vmatprep.mubr.f32.mxu0 0.0
        %970 = vmatmul.mubr.f32.gmra.mxu0 %v894
        %v971 = vpop.f32.mrf.mxu0
        %v972 = vadd.f32 0.0, %v971
        %v973 = vpop.f32.mrf.mxu0
        %974 = vmatprep.mubr.f32.mxu0 0.0
        %975 = vmatmul.mubr.f32.gmra.mxu0 %v896
        %v976 = vpop.f32.mrf.mxu0
        %v977 = vadd.f32 0.0, %v976
        %v978 = vpop.f32.mrf.mxu0
        %979 = vmatprep.mubr.f32.mxu0 0.0
        %980 = vmatmul.mubr.f32.gmra.mxu0 %v898
        %v981 = vpop.f32.mrf.mxu0
        %v982 = vadd.f32 0.0, %v981
        %v983 = vpop.f32.mrf.mxu0
        %984 = vdwg.mxu0
        %v985 = vadd.f32 %v856, %v967
        %v986 = vadd.f32 %v861, %v972
        %v987 = vadd.f32 %v866, %v977
        %v988 = vadd.f32 %v871, %v982
        %v989 = vld [vmem:[%s645] sm:$0xff]
        %v990 = vld [vmem:[%s645 + $0x10] sm:$0xff]
        %v991 = vld [vmem:[%s645 + $0x20] sm:$0xff]
        %v992 = vld [vmem:[%s645 + $0x30] sm:$0xff]
        %s993 = scalar_lea.vmem [#allocation3], 24
        %v994 = vld [vmem:[%s993] sm:$0xff]
        %999 = vrot.lane.b32.xlu0 %v989, 104
        %v1000 = vpop.permute.xlu0 %999
        %1001 = vrot.lane.b32.xlu0 %v990, 104
        %v1002 = vpop.permute.xlu0 %1001
        %1003 = vrot.lane.b32.xlu0 %v991, 104
        %v1004 = vpop.permute.xlu0 %1003
        %1005 = vrot.lane.b32.xlu0 %v992, 104
        %v1006 = vpop.permute.xlu0 %1005
        %v1007 = vsel %vm675, %v1000, 0
        %v1009 = vsel %vm675, %v1002, 0
        %v1011 = vsel %vm675, %v1004, 0
        %v1013 = vsel %vm675, %v1006, 0
        %1015 = vmatprep.subr.mxu0 0.0
        %1016 = vmatpush1.msra.mxu0 0.0
        %1017 = vmatprep.subr.mxu0 0.0
        %1018 = vmatpush1.msra.mxu0 0.0
        %1019 = vmatprep.subr.mxu0 0.0
        %1020 = vmatpush1.msra.mxu0 0.0
        %1021 = vmatprep.subr.mxu0 0.0
        %1022 = vmatpush1.msra.mxu0 0.0
        %1023 = vmatprep.subr.mxu0 0.0
        %1024 = vmatpush1.msra.mxu0 0.0
        %1025 = vmatprep.subr.mxu0 0.0
        %1026 = vmatpush1.msra.mxu0 0.0
        %1027 = vmatprep.subr.mxu0 0.0
        %1028 = vmatpush1.msra.mxu0 0.0
        %1029 = vmatprep.subr.mxu0 0.0
        %1030 = vmatpush1.msra.mxu0 0.0
        %1031 = vmatprep.subr.mxu0 0.0
        %1032 = vmatpush1.msra.mxu0 0.0
        %1033 = vmatprep.subr.mxu0 0.0
        %1034 = vmatpush1.msra.mxu0 0.0
        %1035 = vmatprep.subr.mxu0 0.0
        %1036 = vmatpush1.msra.mxu0 0.0
        %1037 = vmatprep.subr.mxu0 0.0
        %1038 = vmatpush1.msra.mxu0 0.0
        %1039 = vmatprep.subr.mxu0 0.0
        %1040 = vmatpush1.msra.mxu0 0.0
        %1041 = vmatprep.subr.mxu0 0.0
        %1042 = vmatpush1.msra.mxu0 0.0
        %1043 = vmatprep.subr.mxu0 0.0
        %1044 = vmatpush1.msra.mxu0 0.0
        %1045 = vmatprep.subr.mxu0 0.0
        %1046 = vmatpush1.msra.mxu0 %v994
        %1047 = vmatprep.subr.mxu0 0.0
        %1048 = vmatpush2.msra.mxu0 0.0
        %1049 = vmatprep.subr.mxu0 0.0
        %1050 = vmatpush2.msra.mxu0 0.0
        %1051 = vmatprep.subr.mxu0 0.0
        %1052 = vmatpush2.msra.mxu0 0.0
        %1053 = vmatprep.subr.mxu0 0.0
        %1054 = vmatpush2.msra.mxu0 0.0
        %1055 = vmatprep.subr.mxu0 0.0
        %1056 = vmatpush2.msra.mxu0 0.0
        %1057 = vmatprep.subr.mxu0 0.0
        %1058 = vmatpush2.msra.mxu0 0.0
        %1059 = vmatprep.subr.mxu0 0.0
        %1060 = vmatpush2.msra.mxu0 0.0
        %1061 = vmatprep.subr.mxu0 0.0
        %1062 = vmatpush2.msra.mxu0 0.0
        %1063 = vmatprep.subr.mxu0 0.0
        %1064 = vmatpush2.msra.mxu0 0.0
        %1065 = vmatprep.subr.mxu0 0.0
        %1066 = vmatpush2.msra.mxu0 0.0
        %1067 = vmatprep.subr.mxu0 0.0
        %1068 = vmatpush2.msra.mxu0 0.0
        %1069 = vmatprep.subr.mxu0 0.0
        %1070 = vmatpush2.msra.mxu0 0.0
        %1071 = vmatprep.subr.mxu0 0.0
        %1072 = vmatpush2.msra.mxu0 0.0
        %1073 = vmatprep.subr.mxu0 0.0
        %1074 = vmatpush2.msra.mxu0 0.0
        %1075 = vmatprep.subr.mxu0 0.0
        %1076 = vmatpush2.msra.mxu0 0.0
        %1077 = vmatprep.subr.mxu0 0.0
        %1078 = vmatpush2.msra.mxu0 0.0
        %1079 = vmatprep.mubr.f32.mxu0 0.0
        %1080 = vmatmul.mubr.f32.gmra.mxu0 %v1007
        %v1081 = vpop.f32.mrf.mxu0
        %v1082 = vadd.f32 0.0, %v1081
        %v1083 = vpop.f32.mrf.mxu0
        %1084 = vmatprep.mubr.f32.mxu0 0.0
        %1085 = vmatmul.mubr.f32.gmra.mxu0 %v1009
        %v1086 = vpop.f32.mrf.mxu0
        %v1087 = vadd.f32 0.0, %v1086
        %v1088 = vpop.f32.mrf.mxu0
        %1089 = vmatprep.mubr.f32.mxu0 0.0
        %1090 = vmatmul.mubr.f32.gmra.mxu0 %v1011
        %v1091 = vpop.f32.mrf.mxu0
        %v1092 = vadd.f32 0.0, %v1091
        %v1093 = vpop.f32.mrf.mxu0
        %1094 = vmatprep.mubr.f32.mxu0 0.0
        %1095 = vmatmul.mubr.f32.gmra.mxu0 %v1013
        %v1096 = vpop.f32.mrf.mxu0
        %v1097 = vadd.f32 0.0, %v1096
        %v1098 = vpop.f32.mrf.mxu0
        %1099 = vdwg.mxu0
        %v1100 = vadd.f32 %v985, %v1082
        %v1101 = vadd.f32 %v986, %v1087
        %v1102 = vadd.f32 %v987, %v1092
        %v1103 = vadd.f32 %v988, %v1097
        %v1104 = vld [vmem:[%s645 + $0x1] sm:$0xff]
        %v1105 = vld [vmem:[%s645 + $0x11] sm:$0xff]
        %v1106 = vld [vmem:[%s645 + $0x21] sm:$0xff]
        %v1107 = vld [vmem:[%s645 + $0x31] sm:$0xff]
        %s1108 = scalar_lea.vmem [#allocation3], 32
        %v1109 = vld [vmem:[%s1108] sm:$0xff]
        %1114 = vrot.lane.b32.xlu0 %v1104, 104
        %v1115 = vpop.permute.xlu0 %1114
        %1116 = vrot.lane.b32.xlu0 %v1105, 104
        %v1117 = vpop.permute.xlu0 %1116
        %1118 = vrot.lane.b32.xlu0 %v1106, 104
        %v1119 = vpop.permute.xlu0 %1118
        %1120 = vrot.lane.b32.xlu0 %v1107, 104
        %v1121 = vpop.permute.xlu0 %1120
        %v1122 = vsel %vm675, %v1115, 0
        %v1124 = vsel %vm675, %v1117, 0
        %v1126 = vsel %vm675, %v1119, 0
        %v1128 = vsel %vm675, %v1121, 0
        %1130 = vmatprep.subr.mxu0 0.0
        %1131 = vmatpush1.msra.mxu0 0.0
        %1132 = vmatprep.subr.mxu0 0.0
        %1133 = vmatpush1.msra.mxu0 0.0
        %1134 = vmatprep.subr.mxu0 0.0
        %1135 = vmatpush1.msra.mxu0 0.0
        %1136 = vmatprep.subr.mxu0 0.0
        %1137 = vmatpush1.msra.mxu0 0.0
        %1138 = vmatprep.subr.mxu0 0.0
        %1139 = vmatpush1.msra.mxu0 0.0
        %1140 = vmatprep.subr.mxu0 0.0
        %1141 = vmatpush1.msra.mxu0 0.0
        %1142 = vmatprep.subr.mxu0 0.0
        %1143 = vmatpush1.msra.mxu0 0.0
        %1144 = vmatprep.subr.mxu0 0.0
        %1145 = vmatpush1.msra.mxu0 0.0
        %1146 = vmatprep.subr.mxu0 0.0
        %1147 = vmatpush1.msra.mxu0 0.0
        %1148 = vmatprep.subr.mxu0 0.0
        %1149 = vmatpush1.msra.mxu0 0.0
        %1150 = vmatprep.subr.mxu0 0.0
        %1151 = vmatpush1.msra.mxu0 0.0
        %1152 = vmatprep.subr.mxu0 0.0
        %1153 = vmatpush1.msra.mxu0 0.0
        %1154 = vmatprep.subr.mxu0 0.0
        %1155 = vmatpush1.msra.mxu0 0.0
        %1156 = vmatprep.subr.mxu0 0.0
        %1157 = vmatpush1.msra.mxu0 0.0
        %1158 = vmatprep.subr.mxu0 0.0
        %1159 = vmatpush1.msra.mxu0 0.0
        %1160 = vmatprep.subr.mxu0 0.0
        %1161 = vmatpush1.msra.mxu0 %v1109
        %1162 = vmatprep.subr.mxu0 0.0
        %1163 = vmatpush2.msra.mxu0 0.0
        %1164 = vmatprep.subr.mxu0 0.0
        %1165 = vmatpush2.msra.mxu0 0.0
        %1166 = vmatprep.subr.mxu0 0.0
        %1167 = vmatpush2.msra.mxu0 0.0
        %1168 = vmatprep.subr.mxu0 0.0
        %1169 = vmatpush2.msra.mxu0 0.0
        %1170 = vmatprep.subr.mxu0 0.0
        %1171 = vmatpush2.msra.mxu0 0.0
        %1172 = vmatprep.subr.mxu0 0.0
        %1173 = vmatpush2.msra.mxu0 0.0
        %1174 = vmatprep.subr.mxu0 0.0
        %1175 = vmatpush2.msra.mxu0 0.0
        %1176 = vmatprep.subr.mxu0 0.0
        %1177 = vmatpush2.msra.mxu0 0.0
        %1178 = vmatprep.subr.mxu0 0.0
        %1179 = vmatpush2.msra.mxu0 0.0
        %1180 = vmatprep.subr.mxu0 0.0
        %1181 = vmatpush2.msra.mxu0 0.0
        %1182 = vmatprep.subr.mxu0 0.0
        %1183 = vmatpush2.msra.mxu0 0.0
        %1184 = vmatprep.subr.mxu0 0.0
        %1185 = vmatpush2.msra.mxu0 0.0
        %1186 = vmatprep.subr.mxu0 0.0
        %1187 = vmatpush2.msra.mxu0 0.0
        %1188 = vmatprep.subr.mxu0 0.0
        %1189 = vmatpush2.msra.mxu0 0.0
        %1190 = vmatprep.subr.mxu0 0.0
        %1191 = vmatpush2.msra.mxu0 0.0
        %1192 = vmatprep.subr.mxu0 0.0
        %1193 = vmatpush2.msra.mxu0 0.0
        %1194 = vmatprep.mubr.f32.mxu0 0.0
        %1195 = vmatmul.mubr.f32.gmra.mxu0 %v1122
        %v1196 = vpop.f32.mrf.mxu0
        %v1197 = vadd.f32 0.0, %v1196
        %v1198 = vpop.f32.mrf.mxu0
        %1199 = vmatprep.mubr.f32.mxu0 0.0
        %1200 = vmatmul.mubr.f32.gmra.mxu0 %v1124
        %v1201 = vpop.f32.mrf.mxu0
        %v1202 = vadd.f32 0.0, %v1201
        %v1203 = vpop.f32.mrf.mxu0
        %1204 = vmatprep.mubr.f32.mxu0 0.0
        %1205 = vmatmul.mubr.f32.gmra.mxu0 %v1126
        %v1206 = vpop.f32.mrf.mxu0
        %v1207 = vadd.f32 0.0, %v1206
        %v1208 = vpop.f32.mrf.mxu0
        %1209 = vmatprep.mubr.f32.mxu0 0.0
        %1210 = vmatmul.mubr.f32.gmra.mxu0 %v1128
        %v1211 = vpop.f32.mrf.mxu0
        %v1212 = vadd.f32 0.0, %v1211
        %v1213 = vpop.f32.mrf.mxu0
        %1214 = vdwg.mxu0
        %v1215 = vadd.f32 %v1100, %v1197
        %v1216 = vadd.f32 %v1101, %v1202
        %v1217 = vadd.f32 %v1102, %v1207
        %v1218 = vadd.f32 %v1103, %v1212
        %v1219 = vld [vmem:[%s645 + $0x2] sm:$0xff]
        %v1220 = vld [vmem:[%s645 + $0x12] sm:$0xff]
        %v1221 = vld [vmem:[%s645 + $0x22] sm:$0xff]
        %v1222 = vld [vmem:[%s645 + $0x32] sm:$0xff]
        %s1223 = scalar_lea.vmem [#allocation3], 40
        %v1224 = vld [vmem:[%s1223] sm:$0xff]
        %1229 = vrot.lane.b32.xlu0 %v1219, 104
        %v1230 = vpop.permute.xlu0 %1229
        %1231 = vrot.lane.b32.xlu0 %v1220, 104
        %v1232 = vpop.permute.xlu0 %1231
        %1233 = vrot.lane.b32.xlu0 %v1221, 104
        %v1234 = vpop.permute.xlu0 %1233
        %1235 = vrot.lane.b32.xlu0 %v1222, 104
        %v1236 = vpop.permute.xlu0 %1235
        %v1237 = vsel %vm675, %v1230, 0
        %v1239 = vsel %vm675, %v1232, 0
        %v1241 = vsel %vm675, %v1234, 0
        %v1243 = vsel %vm675, %v1236, 0
        %1245 = vmatprep.subr.mxu0 0.0
        %1246 = vmatpush1.msra.mxu0 0.0
        %1247 = vmatprep.subr.mxu0 0.0
        %1248 = vmatpush1.msra.mxu0 0.0
        %1249 = vmatprep.subr.mxu0 0.0
        %1250 = vmatpush1.msra.mxu0 0.0
        %1251 = vmatprep.subr.mxu0 0.0
        %1252 = vmatpush1.msra.mxu0 0.0
        %1253 = vmatprep.subr.mxu0 0.0
        %1254 = vmatpush1.msra.mxu0 0.0
        %1255 = vmatprep.subr.mxu0 0.0
        %1256 = vmatpush1.msra.mxu0 0.0
        %1257 = vmatprep.subr.mxu0 0.0
        %1258 = vmatpush1.msra.mxu0 0.0
        %1259 = vmatprep.subr.mxu0 0.0
        %1260 = vmatpush1.msra.mxu0 0.0
        %1261 = vmatprep.subr.mxu0 0.0
        %1262 = vmatpush1.msra.mxu0 0.0
        %1263 = vmatprep.subr.mxu0 0.0
        %1264 = vmatpush1.msra.mxu0 0.0
        %1265 = vmatprep.subr.mxu0 0.0
        %1266 = vmatpush1.msra.mxu0 0.0
        %1267 = vmatprep.subr.mxu0 0.0
        %1268 = vmatpush1.msra.mxu0 0.0
        %1269 = vmatprep.subr.mxu0 0.0
        %1270 = vmatpush1.msra.mxu0 0.0
        %1271 = vmatprep.subr.mxu0 0.0
        %1272 = vmatpush1.msra.mxu0 0.0
        %1273 = vmatprep.subr.mxu0 0.0
        %1274 = vmatpush1.msra.mxu0 0.0
        %1275 = vmatprep.subr.mxu0 0.0
        %1276 = vmatpush1.msra.mxu0 %v1224
        %1277 = vmatprep.subr.mxu0 0.0
        %1278 = vmatpush2.msra.mxu0 0.0
        %1279 = vmatprep.subr.mxu0 0.0
        %1280 = vmatpush2.msra.mxu0 0.0
        %1281 = vmatprep.subr.mxu0 0.0
        %1282 = vmatpush2.msra.mxu0 0.0
        %1283 = vmatprep.subr.mxu0 0.0
        %1284 = vmatpush2.msra.mxu0 0.0
        %1285 = vmatprep.subr.mxu0 0.0
        %1286 = vmatpush2.msra.mxu0 0.0
        %1287 = vmatprep.subr.mxu0 0.0
        %1288 = vmatpush2.msra.mxu0 0.0
        %1289 = vmatprep.subr.mxu0 0.0
        %1290 = vmatpush2.msra.mxu0 0.0
        %1291 = vmatprep.subr.mxu0 0.0
        %1292 = vmatpush2.msra.mxu0 0.0
        %1293 = vmatprep.subr.mxu0 0.0
        %1294 = vmatpush2.msra.mxu0 0.0
        %1295 = vmatprep.subr.mxu0 0.0
        %1296 = vmatpush2.msra.mxu0 0.0
        %1297 = vmatprep.subr.mxu0 0.0
        %1298 = vmatpush2.msra.mxu0 0.0
        %1299 = vmatprep.subr.mxu0 0.0
        %1300 = vmatpush2.msra.mxu0 0.0
        %1301 = vmatprep.subr.mxu0 0.0
        %1302 = vmatpush2.msra.mxu0 0.0
        %1303 = vmatprep.subr.mxu0 0.0
        %1304 = vmatpush2.msra.mxu0 0.0
        %1305 = vmatprep.subr.mxu0 0.0
        %1306 = vmatpush2.msra.mxu0 0.0
        %1307 = vmatprep.subr.mxu0 0.0
        %1308 = vmatpush2.msra.mxu0 0.0
        %1309 = vmatprep.mubr.f32.mxu0 0.0
        %1310 = vmatmul.mubr.f32.gmra.mxu0 %v1237
        %v1311 = vpop.f32.mrf.mxu0
        %v1312 = vadd.f32 0.0, %v1311
        %v1313 = vpop.f32.mrf.mxu0
        %1314 = vmatprep.mubr.f32.mxu0 0.0
        %1315 = vmatmul.mubr.f32.gmra.mxu0 %v1239
        %v1316 = vpop.f32.mrf.mxu0
        %v1317 = vadd.f32 0.0, %v1316
        %v1318 = vpop.f32.mrf.mxu0
        %1319 = vmatprep.mubr.f32.mxu0 0.0
        %1320 = vmatmul.mubr.f32.gmra.mxu0 %v1241
        %v1321 = vpop.f32.mrf.mxu0
        %v1322 = vadd.f32 0.0, %v1321
        %v1323 = vpop.f32.mrf.mxu0
        %1324 = vmatprep.mubr.f32.mxu0 0.0
        %1325 = vmatmul.mubr.f32.gmra.mxu0 %v1243
        %v1326 = vpop.f32.mrf.mxu0
        %v1327 = vadd.f32 0.0, %v1326
        %v1328 = vpop.f32.mrf.mxu0
        %1329 = vdwg.mxu0
        %v1330 = vadd.f32 %v1215, %v1312
        %v1331 = vadd.f32 %v1216, %v1317
        %v1332 = vadd.f32 %v1217, %v1322
        %v1333 = vadd.f32 %v1218, %v1327
        %v1334 = vld [vmem:[#allocation10] sm:$0xf]
        %v1335 = vlaneseq
        %v1336 = vshrl.u32 %v1335, 7
        %v1337 = vsub.s32 0, %v1336
        %v1338 = vrot.slane %v1334, %v1337
        %v1339 = vadd.f32 %v1330, %v1338
        %v1340 = vadd.f32 %v1331, %v1338
        %v1341 = vadd.f32 %v1332, %v1338
        %v1342 = vadd.f32 %v1333, %v1338
        %v1343 = vsel %vm675, %v1339, 0.0
        %v1344 = vsel %vm675, %v1340, 0.0
        %v1345 = vadd.f32 %v1343, %v1344
        %v1346 = vsel %vm675, %v1341, 0.0
        %v1347 = vadd.f32 %v1345, %v1346
        %v1348 = vsel %vm675, %v1342, 0.0
        %v1349 = vadd.f32 %v1347, %v1348
        %v1350 = vrot.slane %v1349, 4
        %v1351 = vadd.f32 %v1349, %v1350
        %v1352 = vrot.slane %v1351, 2
        %v1353 = vadd.f32 %v1351, %v1352
        %v1354 = vrot.slane %v1353, 1
        %v1355 = vadd.f32 %v1353, %v1354
        %v1356 = vrcp.pop 32.0
        %v1357 = vmul.f32 %v1355, %v1356
        %v1358 = vsub.f32 %v1339, %v1357
        %v1359 = vsub.f32 %v1340, %v1357
        %v1360 = vsub.f32 %v1341, %v1357
        %v1361 = vsub.f32 %v1342, %v1357
        %v1362 = vmul.f32 %v1358, %v1358
        %v1363 = vmul.f32 %v1359, %v1359
        %v1364 = vmul.f32 %v1360, %v1360
        %v1365 = vmul.f32 %v1361, %v1361
        %v1366 = vsel %vm675, %v1362, 0.0
        %v1367 = vsel %vm675, %v1363, 0.0
        %v1368 = vadd.f32 %v1366, %v1367
        %v1369 = vsel %vm675, %v1364, 0.0
        %v1370 = vadd.f32 %v1368, %v1369
        %v1371 = vsel %vm675, %v1365, 0.0
        %v1372 = vadd.f32 %v1370, %v1371
        %v1373 = vrot.slane %v1372, 4
        %v1374 = vadd.f32 %v1372, %v1373
        %v1375 = vrot.slane %v1374, 2
        %v1376 = vadd.f32 %v1374, %v1375
        %v1377 = vrot.slane %v1376, 1
        %v1378 = vadd.f32 %v1376, %v1377
        %v1379 = vmul.f32 %v1378, %v1356
        %v1380 = vadd.f32 %v1379, 1e-05
        %v1381 = vrsqrt.pop %v1380
        %v1382 = vmul.f32 %v1358, %v1381
        %v1383 = vmul.f32 %v1359, %v1381
        %v1384 = vmul.f32 %v1360, %v1381
        %v1385 = vmul.f32 %v1361, %v1381
        %v1386 = vlaneseq
        %v1387 = vshrl.u32 %v1386, 7
        %v1388 = vsub.s32 1, %v1387
        %v1389 = vrot.slane %v1334, %v1388
        %v1390 = vmul.f32 %v1382, %v1389
        %v1391 = vmul.f32 %v1383, %v1389
        %v1392 = vmul.f32 %v1384, %v1389
        %v1393 = vmul.f32 %v1385, %v1389
        %v1394 = vlaneseq
        %v1395 = vshrl.u32 %v1394, 7
        %v1396 = vsub.s32 2, %v1395
        %v1397 = vrot.slane %v1334, %v1396
        %v1398 = vadd.f32 %v1390, %v1397
        %v1399 = vadd.f32 %v1391, %v1397
        %v1400 = vadd.f32 %v1392, %v1397
        %v1401 = vadd.f32 %v1393, %v1397
        %vm1402 = vcmp.gt.f32.partialorder %v1398, 0.0
        %vm1403 = vcmp.gt.f32.partialorder %v1399, 0.0
        %vm1404 = vcmp.gt.f32.partialorder %v1400, 0.0
        %vm1405 = vcmp.gt.f32.partialorder %v1401, 0.0
        %v1406 = vlaneseq
        %v1407 = vshrl.u32 %v1406, 7
        %v1408 = vsub.s32 3, %v1407
        %v1409 = vrot.slane %v1334, %v1408
        %v1410 = vmul.f32 %v1409, %v1398
        %v1411 = vmul.f32 %v1409, %v1399
        %v1412 = vmul.f32 %v1409, %v1400
        %v1413 = vmul.f32 %v1409, %v1401
        %v1414 = vsel %vm1402, %v1398, %v1410
        %v1415 = vsel %vm1403, %v1399, %v1411
        %v1416 = vsel %vm1404, %v1400, %v1412
        %v1417 = vsel %vm1405, %v1401, %v1413
        %1422 = vrot.lane.b32.xlu0 %v1414, 16
        %v1423 = vpop.permute.xlu0 %1422
        %1424 = vrot.lane.b32.xlu0 %v1415, 16
        %v1425 = vpop.permute.xlu0 %1424
        %1426 = vrot.lane.b32.xlu0 %v1416, 16
        %v1427 = vpop.permute.xlu0 %1426
        %1428 = vrot.lane.b32.xlu0 %v1417, 16
        %v1429 = vpop.permute.xlu0 %1428
        %vm1434 = vcmask 195712
        %1435 = vst.msk [vmem:[%s645 + $0x1] sm:$0xff] %vm1434, %v1423
        %1436 = vst.msk [vmem:[%s645 + $0x11] sm:$0xff] %vm1434, %v1425
        %1437 = vst.msk [vmem:[%s645 + $0x21] sm:$0xff] %vm1434, %v1427
        %1438 = vst.msk [vmem:[%s645 + $0x31] sm:$0xff] %vm1434, %v1429
        %s1439 = scalar_lea.vmem [#allocation2], 96
        %v1440 = vld [vmem:[%s1439] sm:$0xff]
        %v1441 = vld [vmem:[%s1439 + $0x10] sm:$0xff]
        %v1442 = vld [vmem:[%s1439 + $0x20] sm:$0xff]
        %v1443 = vld [vmem:[%s1439 + $0x30] sm:$0xff]
        %v1444 = vld [vmem:[#allocation7] sm:$0xff]
        %v1445 = vld [vmem:[#allocation7 + $0x8] sm:$0xff]
        %v1446 = vld [vmem:[%s1439 + $0x1] sm:$0xff]
        %v1447 = vld [vmem:[%s1439 + $0x11] sm:$0xff]
        %v1448 = vld [vmem:[%s1439 + $0x21] sm:$0xff]
        %v1449 = vld [vmem:[%s1439 + $0x31] sm:$0xff]
        %s1450 = scalar_lea.vmem [#allocation7], 16
        %v1451 = vld [vmem:[%s1450] sm:$0xff]
        %v1452 = vld [vmem:[%s1450 + $0x8] sm:$0xff]
        %1457 = vrot.lane.b32.xlu0 %v1446, 112
        %v1458 = vpop.permute.xlu0 %1457
        %1459 = vrot.lane.b32.xlu0 %v1447, 112
        %v1460 = vpop.permute.xlu0 %1459
        %1461 = vrot.lane.b32.xlu0 %v1448, 112
        %v1462 = vpop.permute.xlu0 %1461
        %1463 = vrot.lane.b32.xlu0 %v1449, 112
        %v1464 = vpop.permute.xlu0 %1463
        %vm1465 = vcmask 130048
        %v1466 = vsel %vm1465, %v1458, 0
        %v1468 = vsel %vm1465, %v1460, 0
        %v1470 = vsel %vm1465, %v1462, 0
        %v1472 = vsel %vm1465, %v1464, 0
        %1474 = vmatprep.subr.mxu0 0.0
        %1475 = vmatpush1.msra.mxu0 0.0
        %1476 = vmatprep.subr.mxu0 0.0
        %1477 = vmatpush1.msra.mxu0 0.0
        %1478 = vmatprep.subr.mxu0 0.0
        %1479 = vmatpush1.msra.mxu0 0.0
        %1480 = vmatprep.subr.mxu0 0.0
        %1481 = vmatpush1.msra.mxu0 0.0
        %1482 = vmatprep.subr.mxu0 0.0
        %1483 = vmatpush1.msra.mxu0 0.0
        %1484 = vmatprep.subr.mxu0 0.0
        %1485 = vmatpush1.msra.mxu0 0.0
        %1486 = vmatprep.subr.mxu0 0.0
        %1487 = vmatpush1.msra.mxu0 0.0
        %1488 = vmatprep.subr.mxu0 0.0
        %1489 = vmatpush1.msra.mxu0 0.0
        %1490 = vmatprep.subr.mxu0 0.0
        %1491 = vmatpush1.msra.mxu0 0.0
        %1492 = vmatprep.subr.mxu0 0.0
        %1493 = vmatpush1.msra.mxu0 0.0
        %1494 = vmatprep.subr.mxu0 0.0
        %1495 = vmatpush1.msra.mxu0 0.0
        %1496 = vmatprep.subr.mxu0 0.0
        %1497 = vmatpush1.msra.mxu0 0.0
        %1498 = vmatprep.subr.mxu0 0.0
        %1499 = vmatpush1.msra.mxu0 0.0
        %1500 = vmatprep.subr.mxu0 0.0
        %1501 = vmatpush1.msra.mxu0 0.0
        %1502 = vmatprep.subr.mxu0 0.0
        %1503 = vmatpush1.msra.mxu0 %v1452
        %1504 = vmatprep.subr.mxu0 0.0
        %1505 = vmatpush1.msra.mxu0 %v1451
        %1506 = vmatprep.subr.mxu0 0.0
        %1507 = vmatpush2.msra.mxu0 0.0
        %1508 = vmatprep.subr.mxu0 0.0
        %1509 = vmatpush2.msra.mxu0 0.0
        %1510 = vmatprep.subr.mxu0 0.0
        %1511 = vmatpush2.msra.mxu0 0.0
        %1512 = vmatprep.subr.mxu0 0.0
        %1513 = vmatpush2.msra.mxu0 0.0
        %1514 = vmatprep.subr.mxu0 0.0
        %1515 = vmatpush2.msra.mxu0 0.0
        %1516 = vmatprep.subr.mxu0 0.0
        %1517 = vmatpush2.msra.mxu0 0.0
        %1518 = vmatprep.subr.mxu0 0.0
        %1519 = vmatpush2.msra.mxu0 0.0
        %1520 = vmatprep.subr.mxu0 0.0
        %1521 = vmatpush2.msra.mxu0 0.0
        %1522 = vmatprep.subr.mxu0 0.0
        %1523 = vmatpush2.msra.mxu0 0.0
        %1524 = vmatprep.subr.mxu0 0.0
        %1525 = vmatpush2.msra.mxu0 0.0
        %1526 = vmatprep.subr.mxu0 0.0
        %1527 = vmatpush2.msra.mxu0 0.0
        %1528 = vmatprep.subr.mxu0 0.0
        %1529 = vmatpush2.msra.mxu0 0.0
        %1530 = vmatprep.subr.mxu0 0.0
        %1531 = vmatpush2.msra.mxu0 0.0
        %1532 = vmatprep.subr.mxu0 0.0
        %1533 = vmatpush2.msra.mxu0 0.0
        %1534 = vmatprep.subr.mxu0 0.0
        %1535 = vmatpush2.msra.mxu0 0.0
        %1536 = vmatprep.subr.mxu0 0.0
        %1537 = vmatpush2.msra.mxu0 0.0
        %1538 = vmatprep.mubr.f32.mxu0 0.0
        %1539 = vmatmul.mubr.f32.gmra.mxu0 %v1466
        %v1540 = vpop.f32.mrf.mxu0
        %v1541 = vadd.f32 0.0, %v1540
        %v1542 = vpop.f32.mrf.mxu0
        %1543 = vmatprep.mubr.f32.mxu0 0.0
        %1544 = vmatmul.mubr.f32.gmra.mxu0 %v1468
        %v1545 = vpop.f32.mrf.mxu0
        %v1546 = vadd.f32 0.0, %v1545
        %v1547 = vpop.f32.mrf.mxu0
        %1548 = vmatprep.mubr.f32.mxu0 0.0
        %1549 = vmatmul.mubr.f32.gmra.mxu0 %v1470
        %v1550 = vpop.f32.mrf.mxu0
        %v1551 = vadd.f32 0.0, %v1550
        %v1552 = vpop.f32.mrf.mxu0
        %1553 = vmatprep.mubr.f32.mxu0 0.0
        %1554 = vmatmul.mubr.f32.gmra.mxu0 %v1472
        %v1555 = vpop.f32.mrf.mxu0
        %v1556 = vadd.f32 0.0, %v1555
        %v1557 = vpop.f32.mrf.mxu0
        %1558 = vdwg.mxu0
        %1563 = vrot.lane.b32.xlu0 %v1440, 112
        %v1564 = vpop.permute.xlu0 %1563
        %1565 = vrot.lane.b32.xlu0 %v1441, 112
        %v1566 = vpop.permute.xlu0 %1565
        %1567 = vrot.lane.b32.xlu0 %v1442, 112
        %v1568 = vpop.permute.xlu0 %1567
        %1569 = vrot.lane.b32.xlu0 %v1443, 112
        %v1570 = vpop.permute.xlu0 %1569
        %v1571 = vsel %vm1465, %v1564, 0
        %v1573 = vsel %vm1465, %v1566, 0
        %v1575 = vsel %vm1465, %v1568, 0
        %v1577 = vsel %vm1465, %v1570, 0
        %1579 = vmatprep.subr.mxu0 0.0
        %1580 = vmatpush1.msra.mxu0 0.0
        %1581 = vmatprep.subr.mxu0 0.0
        %1582 = vmatpush1.msra.mxu0 0.0
        %1583 = vmatprep.subr.mxu0 0.0
        %1584 = vmatpush1.msra.mxu0 0.0
        %1585 = vmatprep.subr.mxu0 0.0
        %1586 = vmatpush1.msra.mxu0 0.0
        %1587 = vmatprep.subr.mxu0 0.0
        %1588 = vmatpush1.msra.mxu0 0.0
        %1589 = vmatprep.subr.mxu0 0.0
        %1590 = vmatpush1.msra.mxu0 0.0
        %1591 = vmatprep.subr.mxu0 0.0
        %1592 = vmatpush1.msra.mxu0 0.0
        %1593 = vmatprep.subr.mxu0 0.0
        %1594 = vmatpush1.msra.mxu0 0.0
        %1595 = vmatprep.subr.mxu0 0.0
        %1596 = vmatpush1.msra.mxu0 0.0
        %1597 = vmatprep.subr.mxu0 0.0
        %1598 = vmatpush1.msra.mxu0 0.0
        %1599 = vmatprep.subr.mxu0 0.0
        %1600 = vmatpush1.msra.mxu0 0.0
        %1601 = vmatprep.subr.mxu0 0.0
        %1602 = vmatpush1.msra.mxu0 0.0
        %1603 = vmatprep.subr.mxu0 0.0
        %1604 = vmatpush1.msra.mxu0 0.0
        %1605 = vmatprep.subr.mxu0 0.0
        %1606 = vmatpush1.msra.mxu0 0.0
        %1607 = vmatprep.subr.mxu0 0.0
        %1608 = vmatpush1.msra.mxu0 %v1445
        %1609 = vmatprep.subr.mxu0 0.0
        %1610 = vmatpush1.msra.mxu0 %v1444
        %1611 = vmatprep.subr.mxu0 0.0
        %1612 = vmatpush2.msra.mxu0 0.0
        %1613 = vmatprep.subr.mxu0 0.0
        %1614 = vmatpush2.msra.mxu0 0.0
        %1615 = vmatprep.subr.mxu0 0.0
        %1616 = vmatpush2.msra.mxu0 0.0
        %1617 = vmatprep.subr.mxu0 0.0
        %1618 = vmatpush2.msra.mxu0 0.0
        %1619 = vmatprep.subr.mxu0 0.0
        %1620 = vmatpush2.msra.mxu0 0.0
        %1621 = vmatprep.subr.mxu0 0.0
        %1622 = vmatpush2.msra.mxu0 0.0
        %1623 = vmatprep.subr.mxu0 0.0
        %1624 = vmatpush2.msra.mxu0 0.0
        %1625 = vmatprep.subr.mxu0 0.0
        %1626 = vmatpush2.msra.mxu0 0.0
        %1627 = vmatprep.subr.mxu0 0.0
        %1628 = vmatpush2.msra.mxu0 0.0
        %1629 = vmatprep.subr.mxu0 0.0
        %1630 = vmatpush2.msra.mxu0 0.0
        %1631 = vmatprep.subr.mxu0 0.0
        %1632 = vmatpush2.msra.mxu0 0.0
        %1633 = vmatprep.subr.mxu0 0.0
        %1634 = vmatpush2.msra.mxu0 0.0
        %1635 = vmatprep.subr.mxu0 0.0
        %1636 = vmatpush2.msra.mxu0 0.0
        %1637 = vmatprep.subr.mxu0 0.0
        %1638 = vmatpush2.msra.mxu0 0.0
        %1639 = vmatprep.subr.mxu0 0.0
        %1640 = vmatpush2.msra.mxu0 0.0
        %1641 = vmatprep.subr.mxu0 0.0
        %1642 = vmatpush2.msra.mxu0 0.0
        %1643 = vmatprep.mubr.f32.mxu0 0.0
        %1644 = vmatmul.mubr.f32.gmra.mxu0 %v1571
        %v1645 = vpop.f32.mrf.mxu0
        %v1646 = vadd.f32 %v1541, %v1645
        %v1647 = vpop.f32.mrf.mxu0
        %1648 = vmatprep.mubr.f32.mxu0 0.0
        %1649 = vmatmul.mubr.f32.gmra.mxu0 %v1573
        %v1650 = vpop.f32.mrf.mxu0
        %v1651 = vadd.f32 %v1546, %v1650
        %v1652 = vpop.f32.mrf.mxu0
        %1653 = vmatprep.mubr.f32.mxu0 0.0
        %1654 = vmatmul.mubr.f32.gmra.mxu0 %v1575
        %v1655 = vpop.f32.mrf.mxu0
        %v1656 = vadd.f32 %v1551, %v1655
        %v1657 = vpop.f32.mrf.mxu0
        %1658 = vmatprep.mubr.f32.mxu0 0.0
        %1659 = vmatmul.mubr.f32.gmra.mxu0 %v1577
        %v1660 = vpop.f32.mrf.mxu0
        %v1661 = vadd.f32 %v1556, %v1660
        %v1662 = vpop.f32.mrf.mxu0
        %1663 = vdwg.mxu0
        %v1664 = vld [vmem:[%s1439 + $0x2] sm:$0xff]
        %v1665 = vld [vmem:[%s1439 + $0x12] sm:$0xff]
        %v1666 = vld [vmem:[%s1439 + $0x22] sm:$0xff]
        %v1667 = vld [vmem:[%s1439 + $0x32] sm:$0xff]
        %s1668 = scalar_lea.vmem [#allocation7], 32
        %v1669 = vld [vmem:[%s1668] sm:$0xff]
        %v1670 = vld [vmem:[%s1668 + $0x8] sm:$0xff]
        %1675 = vrot.lane.b32.xlu0 %v1664, 112
        %v1676 = vpop.permute.xlu0 %1675
        %1677 = vrot.lane.b32.xlu0 %v1665, 112
        %v1678 = vpop.permute.xlu0 %1677
        %1679 = vrot.lane.b32.xlu0 %v1666, 112
        %v1680 = vpop.permute.xlu0 %1679
        %1681 = vrot.lane.b32.xlu0 %v1667, 112
        %v1682 = vpop.permute.xlu0 %1681
        %v1683 = vsel %vm1465, %v1676, 0
        %v1685 = vsel %vm1465, %v1678, 0
        %v1687 = vsel %vm1465, %v1680, 0
        %v1689 = vsel %vm1465, %v1682, 0
        %1691 = vmatprep.subr.mxu0 0.0
        %1692 = vmatpush1.msra.mxu0 0.0
        %1693 = vmatprep.subr.mxu0 0.0
        %1694 = vmatpush1.msra.mxu0 0.0
        %1695 = vmatprep.subr.mxu0 0.0
        %1696 = vmatpush1.msra.mxu0 0.0
        %1697 = vmatprep.subr.mxu0 0.0
        %1698 = vmatpush1.msra.mxu0 0.0
        %1699 = vmatprep.subr.mxu0 0.0
        %1700 = vmatpush1.msra.mxu0 0.0
        %1701 = vmatprep.subr.mxu0 0.0
        %1702 = vmatpush1.msra.mxu0 0.0
        %1703 = vmatprep.subr.mxu0 0.0
        %1704 = vmatpush1.msra.mxu0 0.0
        %1705 = vmatprep.subr.mxu0 0.0
        %1706 = vmatpush1.msra.mxu0 0.0
        %1707 = vmatprep.subr.mxu0 0.0
        %1708 = vmatpush1.msra.mxu0 0.0
        %1709 = vmatprep.subr.mxu0 0.0
        %1710 = vmatpush1.msra.mxu0 0.0
        %1711 = vmatprep.subr.mxu0 0.0
        %1712 = vmatpush1.msra.mxu0 0.0
        %1713 = vmatprep.subr.mxu0 0.0
        %1714 = vmatpush1.msra.mxu0 0.0
        %1715 = vmatprep.subr.mxu0 0.0
        %1716 = vmatpush1.msra.mxu0 0.0
        %1717 = vmatprep.subr.mxu0 0.0
        %1718 = vmatpush1.msra.mxu0 0.0
        %1719 = vmatprep.subr.mxu0 0.0
        %1720 = vmatpush1.msra.mxu0 %v1670
        %1721 = vmatprep.subr.mxu0 0.0
        %1722 = vmatpush1.msra.mxu0 %v1669
        %1723 = vmatprep.subr.mxu0 0.0
        %1724 = vmatpush2.msra.mxu0 0.0
        %1725 = vmatprep.subr.mxu0 0.0
        %1726 = vmatpush2.msra.mxu0 0.0
        %1727 = vmatprep.subr.mxu0 0.0
        %1728 = vmatpush2.msra.mxu0 0.0
        %1729 = vmatprep.subr.mxu0 0.0
        %1730 = vmatpush2.msra.mxu0 0.0
        %1731 = vmatprep.subr.mxu0 0.0
        %1732 = vmatpush2.msra.mxu0 0.0
        %1733 = vmatprep.subr.mxu0 0.0
        %1734 = vmatpush2.msra.mxu0 0.0
        %1735 = vmatprep.subr.mxu0 0.0
        %1736 = vmatpush2.msra.mxu0 0.0
        %1737 = vmatprep.subr.mxu0 0.0
        %1738 = vmatpush2.msra.mxu0 0.0
        %1739 = vmatprep.subr.mxu0 0.0
        %1740 = vmatpush2.msra.mxu0 0.0
        %1741 = vmatprep.subr.mxu0 0.0
        %1742 = vmatpush2.msra.mxu0 0.0
        %1743 = vmatprep.subr.mxu0 0.0
        %1744 = vmatpush2.msra.mxu0 0.0
        %1745 = vmatprep.subr.mxu0 0.0
        %1746 = vmatpush2.msra.mxu0 0.0
        %1747 = vmatprep.subr.mxu0 0.0
        %1748 = vmatpush2.msra.mxu0 0.0
        %1749 = vmatprep.subr.mxu0 0.0
        %1750 = vmatpush2.msra.mxu0 0.0
        %1751 = vmatprep.subr.mxu0 0.0
        %1752 = vmatpush2.msra.mxu0 0.0
        %1753 = vmatprep.subr.mxu0 0.0
        %1754 = vmatpush2.msra.mxu0 0.0
        %1755 = vmatprep.mubr.f32.mxu0 0.0
        %1756 = vmatmul.mubr.f32.gmra.mxu0 %v1683
        %v1757 = vpop.f32.mrf.mxu0
        %v1758 = vadd.f32 0.0, %v1757
        %v1759 = vpop.f32.mrf.mxu0
        %1760 = vmatprep.mubr.f32.mxu0 0.0
        %1761 = vmatmul.mubr.f32.gmra.mxu0 %v1685
        %v1762 = vpop.f32.mrf.mxu0
        %v1763 = vadd.f32 0.0, %v1762
        %v1764 = vpop.f32.mrf.mxu0
        %1765 = vmatprep.mubr.f32.mxu0 0.0
        %1766 = vmatmul.mubr.f32.gmra.mxu0 %v1687
        %v1767 = vpop.f32.mrf.mxu0
        %v1768 = vadd.f32 0.0, %v1767
        %v1769 = vpop.f32.mrf.mxu0
        %1770 = vmatprep.mubr.f32.mxu0 0.0
        %1771 = vmatmul.mubr.f32.gmra.mxu0 %v1689
        %v1772 = vpop.f32.mrf.mxu0
        %v1773 = vadd.f32 0.0, %v1772
        %v1774 = vpop.f32.mrf.mxu0
        %1775 = vdwg.mxu0
        %v1776 = vadd.f32 %v1646, %v1758
        %v1777 = vadd.f32 %v1651, %v1763
        %v1778 = vadd.f32 %v1656, %v1768
        %v1779 = vadd.f32 %v1661, %v1773
        %v1780 = vld [vmem:[%s645] sm:$0xff]
        %v1781 = vld [vmem:[%s645 + $0x10] sm:$0xff]
        %v1782 = vld [vmem:[%s645 + $0x20] sm:$0xff]
        %v1783 = vld [vmem:[%s645 + $0x30] sm:$0xff]
        %s1784 = scalar_lea.vmem [#allocation7], 48
        %v1785 = vld [vmem:[%s1784] sm:$0xff]
        %v1786 = vld [vmem:[%s1784 + $0x8] sm:$0xff]
        %1791 = vrot.lane.b32.xlu0 %v1780, 112
        %v1792 = vpop.permute.xlu0 %1791
        %1793 = vrot.lane.b32.xlu0 %v1781, 112
        %v1794 = vpop.permute.xlu0 %1793
        %1795 = vrot.lane.b32.xlu0 %v1782, 112
        %v1796 = vpop.permute.xlu0 %1795
        %1797 = vrot.lane.b32.xlu0 %v1783, 112
        %v1798 = vpop.permute.xlu0 %1797
        %v1799 = vsel %vm1465, %v1792, 0
        %v1801 = vsel %vm1465, %v1794, 0
        %v1803 = vsel %vm1465, %v1796, 0
        %v1805 = vsel %vm1465, %v1798, 0
        %1807 = vmatprep.subr.mxu0 0.0
        %1808 = vmatpush1.msra.mxu0 0.0
        %1809 = vmatprep.subr.mxu0 0.0
        %1810 = vmatpush1.msra.mxu0 0.0
        %1811 = vmatprep.subr.mxu0 0.0
        %1812 = vmatpush1.msra.mxu0 0.0
        %1813 = vmatprep.subr.mxu0 0.0
        %1814 = vmatpush1.msra.mxu0 0.0
        %1815 = vmatprep.subr.mxu0 0.0
        %1816 = vmatpush1.msra.mxu0 0.0
        %1817 = vmatprep.subr.mxu0 0.0
        %1818 = vmatpush1.msra.mxu0 0.0
        %1819 = vmatprep.subr.mxu0 0.0
        %1820 = vmatpush1.msra.mxu0 0.0
        %1821 = vmatprep.subr.mxu0 0.0
        %1822 = vmatpush1.msra.mxu0 0.0
        %1823 = vmatprep.subr.mxu0 0.0
        %1824 = vmatpush1.msra.mxu0 0.0
        %1825 = vmatprep.subr.mxu0 0.0
        %1826 = vmatpush1.msra.mxu0 0.0
        %1827 = vmatprep.subr.mxu0 0.0
        %1828 = vmatpush1.msra.mxu0 0.0
        %1829 = vmatprep.subr.mxu0 0.0
        %1830 = vmatpush1.msra.mxu0 0.0
        %1831 = vmatprep.subr.mxu0 0.0
        %1832 = vmatpush1.msra.mxu0 0.0
        %1833 = vmatprep.subr.mxu0 0.0
        %1834 = vmatpush1.msra.mxu0 0.0
        %1835 = vmatprep.subr.mxu0 0.0
        %1836 = vmatpush1.msra.mxu0 %v1786
        %1837 = vmatprep.subr.mxu0 0.0
        %1838 = vmatpush1.msra.mxu0 %v1785
        %1839 = vmatprep.subr.mxu0 0.0
        %1840 = vmatpush2.msra.mxu0 0.0
        %1841 = vmatprep.subr.mxu0 0.0
        %1842 = vmatpush2.msra.mxu0 0.0
        %1843 = vmatprep.subr.mxu0 0.0
        %1844 = vmatpush2.msra.mxu0 0.0
        %1845 = vmatprep.subr.mxu0 0.0
        %1846 = vmatpush2.msra.mxu0 0.0
        %1847 = vmatprep.subr.mxu0 0.0
        %1848 = vmatpush2.msra.mxu0 0.0
        %1849 = vmatprep.subr.mxu0 0.0
        %1850 = vmatpush2.msra.mxu0 0.0
        %1851 = vmatprep.subr.mxu0 0.0
        %1852 = vmatpush2.msra.mxu0 0.0
        %1853 = vmatprep.subr.mxu0 0.0
        %1854 = vmatpush2.msra.mxu0 0.0
        %1855 = vmatprep.subr.mxu0 0.0
        %1856 = vmatpush2.msra.mxu0 0.0
        %1857 = vmatprep.subr.mxu0 0.0
        %1858 = vmatpush2.msra.mxu0 0.0
        %1859 = vmatprep.subr.mxu0 0.0
        %1860 = vmatpush2.msra.mxu0 0.0
        %1861 = vmatprep.subr.mxu0 0.0
        %1862 = vmatpush2.msra.mxu0 0.0
        %1863 = vmatprep.subr.mxu0 0.0
        %1864 = vmatpush2.msra.mxu0 0.0
        %1865 = vmatprep.subr.mxu0 0.0
        %1866 = vmatpush2.msra.mxu0 0.0
        %1867 = vmatprep.subr.mxu0 0.0
        %1868 = vmatpush2.msra.mxu0 0.0
        %1869 = vmatprep.subr.mxu0 0.0
        %1870 = vmatpush2.msra.mxu0 0.0
        %1871 = vmatprep.mubr.f32.mxu0 0.0
        %1872 = vmatmul.mubr.f32.gmra.mxu0 %v1799
        %v1873 = vpop.f32.mrf.mxu0
        %v1874 = vadd.f32 0.0, %v1873
        %v1875 = vpop.f32.mrf.mxu0
        %1876 = vmatprep.mubr.f32.mxu0 0.0
        %1877 = vmatmul.mubr.f32.gmra.mxu0 %v1801
        %v1878 = vpop.f32.mrf.mxu0
        %v1879 = vadd.f32 0.0, %v1878
        %v1880 = vpop.f32.mrf.mxu0
        %1881 = vmatprep.mubr.f32.mxu0 0.0
        %1882 = vmatmul.mubr.f32.gmra.mxu0 %v1803
        %v1883 = vpop.f32.mrf.mxu0
        %v1884 = vadd.f32 0.0, %v1883
        %v1885 = vpop.f32.mrf.mxu0
        %1886 = vmatprep.mubr.f32.mxu0 0.0
        %1887 = vmatmul.mubr.f32.gmra.mxu0 %v1805
        %v1888 = vpop.f32.mrf.mxu0
        %v1889 = vadd.f32 0.0, %v1888
        %v1890 = vpop.f32.mrf.mxu0
        %1891 = vdwg.mxu0
        %v1892 = vadd.f32 %v1776, %v1874
        %v1893 = vadd.f32 %v1777, %v1879
        %v1894 = vadd.f32 %v1778, %v1884
        %v1895 = vadd.f32 %v1779, %v1889
        %v1896 = vld [vmem:[%s645 + $0x1] sm:$0xff]
        %v1897 = vld [vmem:[%s645 + $0x11] sm:$0xff]
        %v1898 = vld [vmem:[%s645 + $0x21] sm:$0xff]
        %v1899 = vld [vmem:[%s645 + $0x31] sm:$0xff]
        %s1900 = scalar_lea.vmem [#allocation7], 64
        %v1901 = vld [vmem:[%s1900] sm:$0xff]
        %v1902 = vld [vmem:[%s1900 + $0x8] sm:$0xff]
        %1907 = vrot.lane.b32.xlu0 %v1896, 112
        %v1908 = vpop.permute.xlu0 %1907
        %1909 = vrot.lane.b32.xlu0 %v1897, 112
        %v1910 = vpop.permute.xlu0 %1909
        %1911 = vrot.lane.b32.xlu0 %v1898, 112
        %v1912 = vpop.permute.xlu0 %1911
        %1913 = vrot.lane.b32.xlu0 %v1899, 112
        %v1914 = vpop.permute.xlu0 %1913
        %v1915 = vsel %vm1465, %v1908, 0
        %v1917 = vsel %vm1465, %v1910, 0
        %v1919 = vsel %vm1465, %v1912, 0
        %v1921 = vsel %vm1465, %v1914, 0
        %1923 = vmatprep.subr.mxu0 0.0
        %1924 = vmatpush1.msra.mxu0 0.0
        %1925 = vmatprep.subr.mxu0 0.0
        %1926 = vmatpush1.msra.mxu0 0.0
        %1927 = vmatprep.subr.mxu0 0.0
        %1928 = vmatpush1.msra.mxu0 0.0
        %1929 = vmatprep.subr.mxu0 0.0
        %1930 = vmatpush1.msra.mxu0 0.0
        %1931 = vmatprep.subr.mxu0 0.0
        %1932 = vmatpush1.msra.mxu0 0.0
        %1933 = vmatprep.subr.mxu0 0.0
        %1934 = vmatpush1.msra.mxu0 0.0
        %1935 = vmatprep.subr.mxu0 0.0
        %1936 = vmatpush1.msra.mxu0 0.0
        %1937 = vmatprep.subr.mxu0 0.0
        %1938 = vmatpush1.msra.mxu0 0.0
        %1939 = vmatprep.subr.mxu0 0.0
        %1940 = vmatpush1.msra.mxu0 0.0
        %1941 = vmatprep.subr.mxu0 0.0
        %1942 = vmatpush1.msra.mxu0 0.0
        %1943 = vmatprep.subr.mxu0 0.0
        %1944 = vmatpush1.msra.mxu0 0.0
        %1945 = vmatprep.subr.mxu0 0.0
        %1946 = vmatpush1.msra.mxu0 0.0
        %1947 = vmatprep.subr.mxu0 0.0
        %1948 = vmatpush1.msra.mxu0 0.0
        %1949 = vmatprep.subr.mxu0 0.0
        %1950 = vmatpush1.msra.mxu0 0.0
        %1951 = vmatprep.subr.mxu0 0.0
        %1952 = vmatpush1.msra.mxu0 %v1902
        %1953 = vmatprep.subr.mxu0 0.0
        %1954 = vmatpush1.msra.mxu0 %v1901
        %1955 = vmatprep.subr.mxu0 0.0
        %1956 = vmatpush2.msra.mxu0 0.0
        %1957 = vmatprep.subr.mxu0 0.0
        %1958 = vmatpush2.msra.mxu0 0.0
        %1959 = vmatprep.subr.mxu0 0.0
        %1960 = vmatpush2.msra.mxu0 0.0
        %1961 = vmatprep.subr.mxu0 0.0
        %1962 = vmatpush2.msra.mxu0 0.0
        %1963 = vmatprep.subr.mxu0 0.0
        %1964 = vmatpush2.msra.mxu0 0.0
        %1965 = vmatprep.subr.mxu0 0.0
        %1966 = vmatpush2.msra.mxu0 0.0
        %1967 = vmatprep.subr.mxu0 0.0
        %1968 = vmatpush2.msra.mxu0 0.0
        %1969 = vmatprep.subr.mxu0 0.0
        %1970 = vmatpush2.msra.mxu0 0.0
        %1971 = vmatprep.subr.mxu0 0.0
        %1972 = vmatpush2.msra.mxu0 0.0
        %1973 = vmatprep.subr.mxu0 0.0
        %1974 = vmatpush2.msra.mxu0 0.0
        %1975 = vmatprep.subr.mxu0 0.0
        %1976 = vmatpush2.msra.mxu0 0.0
        %1977 = vmatprep.subr.mxu0 0.0
        %1978 = vmatpush2.msra.mxu0 0.0
        %1979 = vmatprep.subr.mxu0 0.0
        %1980 = vmatpush2.msra.mxu0 0.0
        %1981 = vmatprep.subr.mxu0 0.0
        %1982 = vmatpush2.msra.mxu0 0.0
        %1983 = vmatprep.subr.mxu0 0.0
        %1984 = vmatpush2.msra.mxu0 0.0
        %1985 = vmatprep.subr.mxu0 0.0
        %1986 = vmatpush2.msra.mxu0 0.0
        %1987 = vmatprep.mubr.f32.mxu0 0.0
        %1988 = vmatmul.mubr.f32.gmra.mxu0 %v1915
        %v1989 = vpop.f32.mrf.mxu0
        %v1990 = vadd.f32 0.0, %v1989
        %v1991 = vpop.f32.mrf.mxu0
        %1992 = vmatprep.mubr.f32.mxu0 0.0
        %1993 = vmatmul.mubr.f32.gmra.mxu0 %v1917
        %v1994 = vpop.f32.mrf.mxu0
        %v1995 = vadd.f32 0.0, %v1994
        %v1996 = vpop.f32.mrf.mxu0
        %1997 = vmatprep.mubr.f32.mxu0 0.0
        %1998 = vmatmul.mubr.f32.gmra.mxu0 %v1919
        %v1999 = vpop.f32.mrf.mxu0
        %v2000 = vadd.f32 0.0, %v1999
        %v2001 = vpop.f32.mrf.mxu0
        %2002 = vmatprep.mubr.f32.mxu0 0.0
        %2003 = vmatmul.mubr.f32.gmra.mxu0 %v1921
        %v2004 = vpop.f32.mrf.mxu0
        %v2005 = vadd.f32 0.0, %v2004
        %v2006 = vpop.f32.mrf.mxu0
        %2007 = vdwg.mxu0
        %v2008 = vadd.f32 %v1892, %v1990
        %v2009 = vadd.f32 %v1893, %v1995
        %v2010 = vadd.f32 %v1894, %v2000
        %v2011 = vadd.f32 %v1895, %v2005
        %v2012 = vld [vmem:[%s645 + $0x2] sm:$0xff]
        %v2013 = vld [vmem:[%s645 + $0x12] sm:$0xff]
        %v2014 = vld [vmem:[%s645 + $0x22] sm:$0xff]
        %v2015 = vld [vmem:[%s645 + $0x32] sm:$0xff]
        %s2016 = scalar_lea.vmem [#allocation7], 80
        %v2017 = vld [vmem:[%s2016] sm:$0xff]
        %v2018 = vld [vmem:[%s2016 + $0x8] sm:$0xff]
        %2023 = vrot.lane.b32.xlu0 %v2012, 112
        %v2024 = vpop.permute.xlu0 %2023
        %2025 = vrot.lane.b32.xlu0 %v2013, 112
        %v2026 = vpop.permute.xlu0 %2025
        %2027 = vrot.lane.b32.xlu0 %v2014, 112
        %v2028 = vpop.permute.xlu0 %2027
        %2029 = vrot.lane.b32.xlu0 %v2015, 112
        %v2030 = vpop.permute.xlu0 %2029
        %v2031 = vsel %vm1465, %v2024, 0
        %v2033 = vsel %vm1465, %v2026, 0
        %v2035 = vsel %vm1465, %v2028, 0
        %v2037 = vsel %vm1465, %v2030, 0
        %2039 = vmatprep.subr.mxu0 0.0
        %2040 = vmatpush1.msra.mxu0 0.0
        %2041 = vmatprep.subr.mxu0 0.0
        %2042 = vmatpush1.msra.mxu0 0.0
        %2043 = vmatprep.subr.mxu0 0.0
        %2044 = vmatpush1.msra.mxu0 0.0
        %2045 = vmatprep.subr.mxu0 0.0
        %2046 = vmatpush1.msra.mxu0 0.0
        %2047 = vmatprep.subr.mxu0 0.0
        %2048 = vmatpush1.msra.mxu0 0.0
        %2049 = vmatprep.subr.mxu0 0.0
        %2050 = vmatpush1.msra.mxu0 0.0
        %2051 = vmatprep.subr.mxu0 0.0
        %2052 = vmatpush1.msra.mxu0 0.0
        %2053 = vmatprep.subr.mxu0 0.0
        %2054 = vmatpush1.msra.mxu0 0.0
        %2055 = vmatprep.subr.mxu0 0.0
        %2056 = vmatpush1.msra.mxu0 0.0
        %2057 = vmatprep.subr.mxu0 0.0
        %2058 = vmatpush1.msra.mxu0 0.0
        %2059 = vmatprep.subr.mxu0 0.0
        %2060 = vmatpush1.msra.mxu0 0.0
        %2061 = vmatprep.subr.mxu0 0.0
        %2062 = vmatpush1.msra.mxu0 0.0
        %2063 = vmatprep.subr.mxu0 0.0
        %2064 = vmatpush1.msra.mxu0 0.0
        %2065 = vmatprep.subr.mxu0 0.0
        %2066 = vmatpush1.msra.mxu0 0.0
        %2067 = vmatprep.subr.mxu0 0.0
        %2068 = vmatpush1.msra.mxu0 %v2018
        %2069 = vmatprep.subr.mxu0 0.0
        %2070 = vmatpush1.msra.mxu0 %v2017
        %2071 = vmatprep.subr.mxu0 0.0
        %2072 = vmatpush2.msra.mxu0 0.0
        %2073 = vmatprep.subr.mxu0 0.0
        %2074 = vmatpush2.msra.mxu0 0.0
        %2075 = vmatprep.subr.mxu0 0.0
        %2076 = vmatpush2.msra.mxu0 0.0
        %2077 = vmatprep.subr.mxu0 0.0
        %2078 = vmatpush2.msra.mxu0 0.0
        %2079 = vmatprep.subr.mxu0 0.0
        %2080 = vmatpush2.msra.mxu0 0.0
        %2081 = vmatprep.subr.mxu0 0.0
        %2082 = vmatpush2.msra.mxu0 0.0
        %2083 = vmatprep.subr.mxu0 0.0
        %2084 = vmatpush2.msra.mxu0 0.0
        %2085 = vmatprep.subr.mxu0 0.0
        %2086 = vmatpush2.msra.mxu0 0.0
        %2087 = vmatprep.subr.mxu0 0.0
        %2088 = vmatpush2.msra.mxu0 0.0
        %2089 = vmatprep.subr.mxu0 0.0
        %2090 = vmatpush2.msra.mxu0 0.0
        %2091 = vmatprep.subr.mxu0 0.0
        %2092 = vmatpush2.msra.mxu0 0.0
        %2093 = vmatprep.subr.mxu0 0.0
        %2094 = vmatpush2.msra.mxu0 0.0
        %2095 = vmatprep.subr.mxu0 0.0
        %2096 = vmatpush2.msra.mxu0 0.0
        %2097 = vmatprep.subr.mxu0 0.0
        %2098 = vmatpush2.msra.mxu0 0.0
        %2099 = vmatprep.subr.mxu0 0.0
        %2100 = vmatpush2.msra.mxu0 0.0
        %2101 = vmatprep.subr.mxu0 0.0
        %2102 = vmatpush2.msra.mxu0 0.0
        %2103 = vmatprep.mubr.f32.mxu0 0.0
        %2104 = vmatmul.mubr.f32.gmra.mxu0 %v2031
        %v2105 = vpop.f32.mrf.mxu0
        %v2106 = vadd.f32 0.0, %v2105
        %v2107 = vpop.f32.mrf.mxu0
        %2108 = vmatprep.mubr.f32.mxu0 0.0
        %2109 = vmatmul.mubr.f32.gmra.mxu0 %v2033
        %v2110 = vpop.f32.mrf.mxu0
        %v2111 = vadd.f32 0.0, %v2110
        %v2112 = vpop.f32.mrf.mxu0
        %2113 = vmatprep.mubr.f32.mxu0 0.0
        %2114 = vmatmul.mubr.f32.gmra.mxu0 %v2035
        %v2115 = vpop.f32.mrf.mxu0
        %v2116 = vadd.f32 0.0, %v2115
        %v2117 = vpop.f32.mrf.mxu0
        %2118 = vmatprep.mubr.f32.mxu0 0.0
        %2119 = vmatmul.mubr.f32.gmra.mxu0 %v2037
        %v2120 = vpop.f32.mrf.mxu0
        %v2121 = vadd.f32 0.0, %v2120
        %v2122 = vpop.f32.mrf.mxu0
        %2123 = vdwg.mxu0
        %v2124 = vadd.f32 %v2008, %v2106
        %v2125 = vadd.f32 %v2009, %v2111
        %v2126 = vadd.f32 %v2010, %v2116
        %v2127 = vadd.f32 %v2011, %v2121
        %v2128 = vld [vmem:[#allocation12] sm:$0xf]
        %v2129 = vlaneseq
        %v2130 = vshrl.u32 %v2129, 7
        %v2131 = vsub.s32 0, %v2130
        %v2132 = vrot.slane %v2128, %v2131
        %v2133 = vadd.f32 %v2124, %v2132
        %v2134 = vadd.f32 %v2125, %v2132
        %v2135 = vadd.f32 %v2126, %v2132
        %v2136 = vadd.f32 %v2127, %v2132
        %v2137 = vsel %vm675, %v2133, 0.0
        %v2138 = vsel %vm675, %v2134, 0.0
        %v2139 = vadd.f32 %v2137, %v2138
        %v2140 = vsel %vm675, %v2135, 0.0
        %v2141 = vadd.f32 %v2139, %v2140
        %v2142 = vsel %vm675, %v2136, 0.0
        %v2143 = vadd.f32 %v2141, %v2142
        %v2144 = vrot.slane %v2143, 4
        %v2145 = vadd.f32 %v2143, %v2144
        %v2146 = vrot.slane %v2145, 2
        %v2147 = vadd.f32 %v2145, %v2146
        %v2148 = vrot.slane %v2147, 1
        %v2149 = vadd.f32 %v2147, %v2148
        %v2150 = vmul.f32 %v2149, %v1356
        %v2151 = vsub.f32 %v2133, %v2150
        %v2152 = vsub.f32 %v2134, %v2150
        %v2153 = vsub.f32 %v2135, %v2150
        %v2154 = vsub.f32 %v2136, %v2150
        %v2155 = vmul.f32 %v2151, %v2151
        %v2156 = vmul.f32 %v2152, %v2152
        %v2157 = vmul.f32 %v2153, %v2153
        %v2158 = vmul.f32 %v2154, %v2154
        %v2159 = vsel %vm675, %v2155, 0.0
        %v2160 = vsel %vm675, %v2156, 0.0
        %v2161 = vadd.f32 %v2159, %v2160
        %v2162 = vsel %vm675, %v2157, 0.0
        %v2163 = vadd.f32 %v2161, %v2162
        %v2164 = vsel %vm675, %v2158, 0.0
        %v2165 = vadd.f32 %v2163, %v2164
        %v2166 = vrot.slane %v2165, 4
        %v2167 = vadd.f32 %v2165, %v2166
        %v2168 = vrot.slane %v2167, 2
        %v2169 = vadd.f32 %v2167, %v2168
        %v2170 = vrot.slane %v2169, 1
        %v2171 = vadd.f32 %v2169, %v2170
        %v2172 = vmul.f32 %v2171, %v1356
        %v2173 = vadd.f32 %v2172, 1e-05
        %v2174 = vrsqrt.pop %v2173
        %v2175 = vmul.f32 %v2151, %v2174
        %v2176 = vmul.f32 %v2152, %v2174
        %v2177 = vmul.f32 %v2153, %v2174
        %v2178 = vmul.f32 %v2154, %v2174
        %v2179 = vlaneseq
        %v2180 = vshrl.u32 %v2179, 7
        %v2181 = vsub.s32 1, %v2180
        %v2182 = vrot.slane %v2128, %v2181
        %v2183 = vmul.f32 %v2175, %v2182
        %v2184 = vmul.f32 %v2176, %v2182
        %v2185 = vmul.f32 %v2177, %v2182
        %v2186 = vmul.f32 %v2178, %v2182
        %v2187 = vlaneseq
        %v2188 = vshrl.u32 %v2187, 7
        %v2189 = vsub.s32 2, %v2188
        %v2190 = vrot.slane %v2128, %v2189
        %v2191 = vadd.f32 %v2183, %v2190
        %v2192 = vadd.f32 %v2184, %v2190
        %v2193 = vadd.f32 %v2185, %v2190
        %v2194 = vadd.f32 %v2186, %v2190
        %vm2195 = vcmp.gt.f32.partialorder %v2191, 0.0
        %vm2196 = vcmp.gt.f32.partialorder %v2192, 0.0
        %vm2197 = vcmp.gt.f32.partialorder %v2193, 0.0
        %vm2198 = vcmp.gt.f32.partialorder %v2194, 0.0
        %v2199 = vlaneseq
        %v2200 = vshrl.u32 %v2199, 7
        %v2201 = vsub.s32 3, %v2200
        %v2202 = vrot.slane %v2128, %v2201
        %v2203 = vmul.f32 %v2202, %v2191
        %v2204 = vmul.f32 %v2202, %v2192
        %v2205 = vmul.f32 %v2202, %v2193
        %v2206 = vmul.f32 %v2202, %v2194
        %v2207 = vsel %vm2195, %v2191, %v2203
        %v2208 = vsel %vm2196, %v2192, %v2204
        %v2209 = vsel %vm2197, %v2193, %v2205
        %v2210 = vsel %vm2198, %v2194, %v2206
        %2215 = vrot.lane.b32.xlu0 %v2207, 8
        %v2216 = vpop.permute.xlu0 %2215
        %2217 = vrot.lane.b32.xlu0 %v2208, 8
        %v2218 = vpop.permute.xlu0 %2217
        %2219 = vrot.lane.b32.xlu0 %v2209, 8
        %v2220 = vpop.permute.xlu0 %2219
        %2221 = vrot.lane.b32.xlu0 %v2210, 8
        %v2222 = vpop.permute.xlu0 %2221
        %vm2227 = vcmask 130112
        %2228 = vst.msk [vmem:[%s645 + $0x1] sm:$0xff] %vm2227, %v2216
        %2229 = vst.msk [vmem:[%s645 + $0x11] sm:$0xff] %vm2227, %v2218
        %2230 = vst.msk [vmem:[%s645 + $0x21] sm:$0xff] %vm2227, %v2220
        %2231 = vst.msk [vmem:[%s645 + $0x31] sm:$0xff] %vm2227, %v2222
        %s2232 = scalar_lea.vmem [#allocation2], 64
        %v2233 = vld [vmem:[%s2232] sm:$0xff]
        %v2234 = vld [vmem:[%s2232 + $0x10] sm:$0xff]
        %v2235 = vld [vmem:[%s2232 + $0x20] sm:$0xff]
        %v2236 = vld [vmem:[%s2232 + $0x30] sm:$0xff]
        %v2237 = vld [vmem:[%s3] sm:$0xff]
        %v2238 = vld [vmem:[%s3 + $0x8] sm:$0xff]
        %v2239 = vld [vmem:[%s3 + $0x10] sm:$0xff]
        %v2240 = vld [vmem:[%s2232 + $0x1] sm:$0xff]
        %v2241 = vld [vmem:[%s2232 + $0x11] sm:$0xff]
        %v2242 = vld [vmem:[%s2232 + $0x21] sm:$0xff]
        %v2243 = vld [vmem:[%s2232 + $0x31] sm:$0xff]
        %s2244 = scalar_lea.vmem %s3, 24
        %v2245 = vld [vmem:[%s2244] sm:$0xff]
        %v2246 = vld [vmem:[%s2244 + $0x8] sm:$0xff]
        %v2247 = vld [vmem:[%s2244 + $0x10] sm:$0xff]
        %2252 = vrot.lane.b32.xlu0 %v2240, 120
        %v2253 = vpop.permute.xlu0 %2252
        %2254 = vrot.lane.b32.xlu0 %v2241, 120
        %v2255 = vpop.permute.xlu0 %2254
        %2256 = vrot.lane.b32.xlu0 %v2242, 120
        %v2257 = vpop.permute.xlu0 %2256
        %2258 = vrot.lane.b32.xlu0 %v2243, 120
        %v2259 = vpop.permute.xlu0 %2258
        %vm2260 = vcmask 195584
        %v2261 = vsel %vm2260, %v2253, 0
        %v2263 = vsel %vm2260, %v2255, 0
        %v2265 = vsel %vm2260, %v2257, 0
        %v2267 = vsel %vm2260, %v2259, 0
        %2269 = vmatprep.subr.mxu0 0.0
        %2270 = vmatpush1.msra.mxu0 0.0
        %2271 = vmatprep.subr.mxu0 0.0
        %2272 = vmatpush1.msra.mxu0 0.0
        %2273 = vmatprep.subr.mxu0 0.0
        %2274 = vmatpush1.msra.mxu0 0.0
        %2275 = vmatprep.subr.mxu0 0.0
        %2276 = vmatpush1.msra.mxu0 0.0
        %2277 = vmatprep.subr.mxu0 0.0
        %2278 = vmatpush1.msra.mxu0 0.0
        %2279 = vmatprep.subr.mxu0 0.0
        %2280 = vmatpush1.msra.mxu0 0.0
        %2281 = vmatprep.subr.mxu0 0.0
        %2282 = vmatpush1.msra.mxu0 0.0
        %2283 = vmatprep.subr.mxu0 0.0
        %2284 = vmatpush1.msra.mxu0 0.0
        %2285 = vmatprep.subr.mxu0 0.0
        %2286 = vmatpush1.msra.mxu0 0.0
        %2287 = vmatprep.subr.mxu0 0.0
        %2288 = vmatpush1.msra.mxu0 0.0
        %2289 = vmatprep.subr.mxu0 0.0
        %2290 = vmatpush1.msra.mxu0 0.0
        %2291 = vmatprep.subr.mxu0 0.0
        %2292 = vmatpush1.msra.mxu0 0.0
        %2293 = vmatprep.subr.mxu0 0.0
        %2294 = vmatpush1.msra.mxu0 0.0
        %2295 = vmatprep.subr.mxu0 0.0
        %2296 = vmatpush1.msra.mxu0 %v2247
        %2297 = vmatprep.subr.mxu0 0.0
        %2298 = vmatpush1.msra.mxu0 %v2246
        %2299 = vmatprep.subr.mxu0 0.0
        %2300 = vmatpush1.msra.mxu0 %v2245
        %2301 = vmatprep.subr.mxu0 0.0
        %2302 = vmatpush2.msra.mxu0 0.0
        %2303 = vmatprep.subr.mxu0 0.0
        %2304 = vmatpush2.msra.mxu0 0.0
        %2305 = vmatprep.subr.mxu0 0.0
        %2306 = vmatpush2.msra.mxu0 0.0
        %2307 = vmatprep.subr.mxu0 0.0
        %2308 = vmatpush2.msra.mxu0 0.0
        %2309 = vmatprep.subr.mxu0 0.0
        %2310 = vmatpush2.msra.mxu0 0.0
        %2311 = vmatprep.subr.mxu0 0.0
        %2312 = vmatpush2.msra.mxu0 0.0
        %2313 = vmatprep.subr.mxu0 0.0
        %2314 = vmatpush2.msra.mxu0 0.0
        %2315 = vmatprep.subr.mxu0 0.0
        %2316 = vmatpush2.msra.mxu0 0.0
        %2317 = vmatprep.subr.mxu0 0.0
        %2318 = vmatpush2.msra.mxu0 0.0
        %2319 = vmatprep.subr.mxu0 0.0
        %2320 = vmatpush2.msra.mxu0 0.0
        %2321 = vmatprep.subr.mxu0 0.0
        %2322 = vmatpush2.msra.mxu0 0.0
        %2323 = vmatprep.subr.mxu0 0.0
        %2324 = vmatpush2.msra.mxu0 0.0
        %2325 = vmatprep.subr.mxu0 0.0
        %2326 = vmatpush2.msra.mxu0 0.0
        %2327 = vmatprep.subr.mxu0 0.0
        %2328 = vmatpush2.msra.mxu0 0.0
        %2329 = vmatprep.subr.mxu0 0.0
        %2330 = vmatpush2.msra.mxu0 0.0
        %2331 = vmatprep.subr.mxu0 0.0
        %2332 = vmatpush2.msra.mxu0 0.0
        %2333 = vmatprep.mubr.f32.mxu0 0.0
        %2334 = vmatmul.mubr.f32.gmra.mxu0 %v2261
        %v2335 = vpop.f32.mrf.mxu0
        %v2336 = vadd.f32 0.0, %v2335
        %v2337 = vpop.f32.mrf.mxu0
        %2338 = vmatprep.mubr.f32.mxu0 0.0
        %2339 = vmatmul.mubr.f32.gmra.mxu0 %v2263
        %v2340 = vpop.f32.mrf.mxu0
        %v2341 = vadd.f32 0.0, %v2340
        %v2342 = vpop.f32.mrf.mxu0
        %2343 = vmatprep.mubr.f32.mxu0 0.0
        %2344 = vmatmul.mubr.f32.gmra.mxu0 %v2265
        %v2345 = vpop.f32.mrf.mxu0
        %v2346 = vadd.f32 0.0, %v2345
        %v2347 = vpop.f32.mrf.mxu0
        %2348 = vmatprep.mubr.f32.mxu0 0.0
        %2349 = vmatmul.mubr.f32.gmra.mxu0 %v2267
        %v2350 = vpop.f32.mrf.mxu0
        %v2351 = vadd.f32 0.0, %v2350
        %v2352 = vpop.f32.mrf.mxu0
        %2353 = vdwg.mxu0
        %2358 = vrot.lane.b32.xlu0 %v2233, 120
        %v2359 = vpop.permute.xlu0 %2358
        %2360 = vrot.lane.b32.xlu0 %v2234, 120
        %v2361 = vpop.permute.xlu0 %2360
        %2362 = vrot.lane.b32.xlu0 %v2235, 120
        %v2363 = vpop.permute.xlu0 %2362
        %2364 = vrot.lane.b32.xlu0 %v2236, 120
        %v2365 = vpop.permute.xlu0 %2364
        %v2366 = vsel %vm2260, %v2359, 0
        %v2368 = vsel %vm2260, %v2361, 0
        %v2370 = vsel %vm2260, %v2363, 0
        %v2372 = vsel %vm2260, %v2365, 0
        %2374 = vmatprep.subr.mxu0 0.0
        %2375 = vmatpush1.msra.mxu0 0.0
        %2376 = vmatprep.subr.mxu0 0.0
        %2377 = vmatpush1.msra.mxu0 0.0
        %2378 = vmatprep.subr.mxu0 0.0
        %2379 = vmatpush1.msra.mxu0 0.0
        %2380 = vmatprep.subr.mxu0 0.0
        %2381 = vmatpush1.msra.mxu0 0.0
        %2382 = vmatprep.subr.mxu0 0.0
        %2383 = vmatpush1.msra.mxu0 0.0
        %2384 = vmatprep.subr.mxu0 0.0
        %2385 = vmatpush1.msra.mxu0 0.0
        %2386 = vmatprep.subr.mxu0 0.0
        %2387 = vmatpush1.msra.mxu0 0.0
        %2388 = vmatprep.subr.mxu0 0.0
        %2389 = vmatpush1.msra.mxu0 0.0
        %2390 = vmatprep.subr.mxu0 0.0
        %2391 = vmatpush1.msra.mxu0 0.0
        %2392 = vmatprep.subr.mxu0 0.0
        %2393 = vmatpush1.msra.mxu0 0.0
        %2394 = vmatprep.subr.mxu0 0.0
        %2395 = vmatpush1.msra.mxu0 0.0
        %2396 = vmatprep.subr.mxu0 0.0
        %2397 = vmatpush1.msra.mxu0 0.0
        %2398 = vmatprep.subr.mxu0 0.0
        %2399 = vmatpush1.msra.mxu0 0.0
        %2400 = vmatprep.subr.mxu0 0.0
        %2401 = vmatpush1.msra.mxu0 %v2239
        %2402 = vmatprep.subr.mxu0 0.0
        %2403 = vmatpush1.msra.mxu0 %v2238
        %2404 = vmatprep.subr.mxu0 0.0
        %2405 = vmatpush1.msra.mxu0 %v2237
        %2406 = vmatprep.subr.mxu0 0.0
        %2407 = vmatpush2.msra.mxu0 0.0
        %2408 = vmatprep.subr.mxu0 0.0
        %2409 = vmatpush2.msra.mxu0 0.0
        %2410 = vmatprep.subr.mxu0 0.0
        %2411 = vmatpush2.msra.mxu0 0.0
        %2412 = vmatprep.subr.mxu0 0.0
        %2413 = vmatpush2.msra.mxu0 0.0
        %2414 = vmatprep.subr.mxu0 0.0
        %2415 = vmatpush2.msra.mxu0 0.0
        %2416 = vmatprep.subr.mxu0 0.0
        %2417 = vmatpush2.msra.mxu0 0.0
        %2418 = vmatprep.subr.mxu0 0.0
        %2419 = vmatpush2.msra.mxu0 0.0
        %2420 = vmatprep.subr.mxu0 0.0
        %2421 = vmatpush2.msra.mxu0 0.0
        %2422 = vmatprep.subr.mxu0 0.0
        %2423 = vmatpush2.msra.mxu0 0.0
        %2424 = vmatprep.subr.mxu0 0.0
        %2425 = vmatpush2.msra.mxu0 0.0
        %2426 = vmatprep.subr.mxu0 0.0
        %2427 = vmatpush2.msra.mxu0 0.0
        %2428 = vmatprep.subr.mxu0 0.0
        %2429 = vmatpush2.msra.mxu0 0.0
        %2430 = vmatprep.subr.mxu0 0.0
        %2431 = vmatpush2.msra.mxu0 0.0
        %2432 = vmatprep.subr.mxu0 0.0
        %2433 = vmatpush2.msra.mxu0 0.0
        %2434 = vmatprep.subr.mxu0 0.0
        %2435 = vmatpush2.msra.mxu0 0.0
        %2436 = vmatprep.subr.mxu0 0.0
        %2437 = vmatpush2.msra.mxu0 0.0
        %2438 = vmatprep.mubr.f32.mxu0 0.0
        %2439 = vmatmul.mubr.f32.gmra.mxu0 %v2366
        %v2440 = vpop.f32.mrf.mxu0
        %v2441 = vadd.f32 %v2336, %v2440
        %v2442 = vpop.f32.mrf.mxu0
        %2443 = vmatprep.mubr.f32.mxu0 0.0
        %2444 = vmatmul.mubr.f32.gmra.mxu0 %v2368
        %v2445 = vpop.f32.mrf.mxu0
        %v2446 = vadd.f32 %v2341, %v2445
        %v2447 = vpop.f32.mrf.mxu0
        %2448 = vmatprep.mubr.f32.mxu0 0.0
        %2449 = vmatmul.mubr.f32.gmra.mxu0 %v2370
        %v2450 = vpop.f32.mrf.mxu0
        %v2451 = vadd.f32 %v2346, %v2450
        %v2452 = vpop.f32.mrf.mxu0
        %2453 = vmatprep.mubr.f32.mxu0 0.0
        %2454 = vmatmul.mubr.f32.gmra.mxu0 %v2372
        %v2455 = vpop.f32.mrf.mxu0
        %v2456 = vadd.f32 %v2351, %v2455
        %v2457 = vpop.f32.mrf.mxu0
        %2458 = vdwg.mxu0
        %v2459 = vld [vmem:[%s2232 + $0x2] sm:$0xff]
        %v2460 = vld [vmem:[%s2232 + $0x12] sm:$0xff]
        %v2461 = vld [vmem:[%s2232 + $0x22] sm:$0xff]
        %v2462 = vld [vmem:[%s2232 + $0x32] sm:$0xff]
        %s2463 = scalar_lea.vmem %s3, 48
        %v2464 = vld [vmem:[%s2463] sm:$0xff]
        %v2465 = vld [vmem:[%s2463 + $0x8] sm:$0xff]
        %v2466 = vld [vmem:[%s2463 + $0x10] sm:$0xff]
        %2471 = vrot.lane.b32.xlu0 %v2459, 120
        %v2472 = vpop.permute.xlu0 %2471
        %2473 = vrot.lane.b32.xlu0 %v2460, 120
        %v2474 = vpop.permute.xlu0 %2473
        %2475 = vrot.lane.b32.xlu0 %v2461, 120
        %v2476 = vpop.permute.xlu0 %2475
        %2477 = vrot.lane.b32.xlu0 %v2462, 120
        %v2478 = vpop.permute.xlu0 %2477
        %v2479 = vsel %vm2260, %v2472, 0
        %v2481 = vsel %vm2260, %v2474, 0
        %v2483 = vsel %vm2260, %v2476, 0
        %v2485 = vsel %vm2260, %v2478, 0
        %2487 = vmatprep.subr.mxu0 0.0
        %2488 = vmatpush1.msra.mxu0 0.0
        %2489 = vmatprep.subr.mxu0 0.0
        %2490 = vmatpush1.msra.mxu0 0.0
        %2491 = vmatprep.subr.mxu0 0.0
        %2492 = vmatpush1.msra.mxu0 0.0
        %2493 = vmatprep.subr.mxu0 0.0
        %2494 = vmatpush1.msra.mxu0 0.0
        %2495 = vmatprep.subr.mxu0 0.0
        %2496 = vmatpush1.msra.mxu0 0.0
        %2497 = vmatprep.subr.mxu0 0.0
        %2498 = vmatpush1.msra.mxu0 0.0
        %2499 = vmatprep.subr.mxu0 0.0
        %2500 = vmatpush1.msra.mxu0 0.0
        %2501 = vmatprep.subr.mxu0 0.0
        %2502 = vmatpush1.msra.mxu0 0.0
        %2503 = vmatprep.subr.mxu0 0.0
        %2504 = vmatpush1.msra.mxu0 0.0
        %2505 = vmatprep.subr.mxu0 0.0
        %2506 = vmatpush1.msra.mxu0 0.0
        %2507 = vmatprep.subr.mxu0 0.0
        %2508 = vmatpush1.msra.mxu0 0.0
        %2509 = vmatprep.subr.mxu0 0.0
        %2510 = vmatpush1.msra.mxu0 0.0
        %2511 = vmatprep.subr.mxu0 0.0
        %2512 = vmatpush1.msra.mxu0 0.0
        %2513 = vmatprep.subr.mxu0 0.0
        %2514 = vmatpush1.msra.mxu0 %v2466
        %2515 = vmatprep.subr.mxu0 0.0
        %2516 = vmatpush1.msra.mxu0 %v2465
        %2517 = vmatprep.subr.mxu0 0.0
        %2518 = vmatpush1.msra.mxu0 %v2464
        %2519 = vmatprep.subr.mxu0 0.0
        %2520 = vmatpush2.msra.mxu0 0.0
        %2521 = vmatprep.subr.mxu0 0.0
        %2522 = vmatpush2.msra.mxu0 0.0
        %2523 = vmatprep.subr.mxu0 0.0
        %2524 = vmatpush2.msra.mxu0 0.0
        %2525 = vmatprep.subr.mxu0 0.0
        %2526 = vmatpush2.msra.mxu0 0.0
        %2527 = vmatprep.subr.mxu0 0.0
        %2528 = vmatpush2.msra.mxu0 0.0
        %2529 = vmatprep.subr.mxu0 0.0
        %2530 = vmatpush2.msra.mxu0 0.0
        %2531 = vmatprep.subr.mxu0 0.0
        %2532 = vmatpush2.msra.mxu0 0.0
        %2533 = vmatprep.subr.mxu0 0.0
        %2534 = vmatpush2.msra.mxu0 0.0
        %2535 = vmatprep.subr.mxu0 0.0
        %2536 = vmatpush2.msra.mxu0 0.0
        %2537 = vmatprep.subr.mxu0 0.0
        %2538 = vmatpush2.msra.mxu0 0.0
        %2539 = vmatprep.subr.mxu0 0.0
        %2540 = vmatpush2.msra.mxu0 0.0
        %2541 = vmatprep.subr.mxu0 0.0
        %2542 = vmatpush2.msra.mxu0 0.0
        %2543 = vmatprep.subr.mxu0 0.0
        %2544 = vmatpush2.msra.mxu0 0.0
        %2545 = vmatprep.subr.mxu0 0.0
        %2546 = vmatpush2.msra.mxu0 0.0
        %2547 = vmatprep.subr.mxu0 0.0
        %2548 = vmatpush2.msra.mxu0 0.0
        %2549 = vmatprep.subr.mxu0 0.0
        %2550 = vmatpush2.msra.mxu0 0.0
        %2551 = vmatprep.mubr.f32.mxu0 0.0
        %2552 = vmatmul.mubr.f32.gmra.mxu0 %v2479
        %v2553 = vpop.f32.mrf.mxu0
        %v2554 = vadd.f32 0.0, %v2553
        %v2555 = vpop.f32.mrf.mxu0
        %2556 = vmatprep.mubr.f32.mxu0 0.0
        %2557 = vmatmul.mubr.f32.gmra.mxu0 %v2481
        %v2558 = vpop.f32.mrf.mxu0
        %v2559 = vadd.f32 0.0, %v2558
        %v2560 = vpop.f32.mrf.mxu0
        %2561 = vmatprep.mubr.f32.mxu0 0.0
        %2562 = vmatmul.mubr.f32.gmra.mxu0 %v2483
        %v2563 = vpop.f32.mrf.mxu0
        %v2564 = vadd.f32 0.0, %v2563
        %v2565 = vpop.f32.mrf.mxu0
        %2566 = vmatprep.mubr.f32.mxu0 0.0
        %2567 = vmatmul.mubr.f32.gmra.mxu0 %v2485
        %v2568 = vpop.f32.mrf.mxu0
        %v2569 = vadd.f32 0.0, %v2568
        %v2570 = vpop.f32.mrf.mxu0
        %2571 = vdwg.mxu0
        %v2572 = vadd.f32 %v2441, %v2554
        %v2573 = vadd.f32 %v2446, %v2559
        %v2574 = vadd.f32 %v2451, %v2564
        %v2575 = vadd.f32 %v2456, %v2569
        %v2576 = vld [vmem:[%s645] sm:$0xff]
        %v2577 = vld [vmem:[%s645 + $0x10] sm:$0xff]
        %v2578 = vld [vmem:[%s645 + $0x20] sm:$0xff]
        %v2579 = vld [vmem:[%s645 + $0x30] sm:$0xff]
        %s2580 = scalar_lea.vmem %s3, 72
        %v2581 = vld [vmem:[%s2580] sm:$0xff]
        %v2582 = vld [vmem:[%s2580 + $0x8] sm:$0xff]
        %v2583 = vld [vmem:[%s2580 + $0x10] sm:$0xff]
        %2588 = vrot.lane.b32.xlu0 %v2576, 120
        %v2589 = vpop.permute.xlu0 %2588
        %2590 = vrot.lane.b32.xlu0 %v2577, 120
        %v2591 = vpop.permute.xlu0 %2590
        %2592 = vrot.lane.b32.xlu0 %v2578, 120
        %v2593 = vpop.permute.xlu0 %2592
        %2594 = vrot.lane.b32.xlu0 %v2579, 120
        %v2595 = vpop.permute.xlu0 %2594
        %v2596 = vsel %vm2260, %v2589, 0
        %v2598 = vsel %vm2260, %v2591, 0
        %v2600 = vsel %vm2260, %v2593, 0
        %v2602 = vsel %vm2260, %v2595, 0
        %2604 = vmatprep.subr.mxu0 0.0
        %2605 = vmatpush1.msra.mxu0 0.0
        %2606 = vmatprep.subr.mxu0 0.0
        %2607 = vmatpush1.msra.mxu0 0.0
        %2608 = vmatprep.subr.mxu0 0.0
        %2609 = vmatpush1.msra.mxu0 0.0
        %2610 = vmatprep.subr.mxu0 0.0
        %2611 = vmatpush1.msra.mxu0 0.0
        %2612 = vmatprep.subr.mxu0 0.0
        %2613 = vmatpush1.msra.mxu0 0.0
        %2614 = vmatprep.subr.mxu0 0.0
        %2615 = vmatpush1.msra.mxu0 0.0
        %2616 = vmatprep.subr.mxu0 0.0
        %2617 = vmatpush1.msra.mxu0 0.0
        %2618 = vmatprep.subr.mxu0 0.0
        %2619 = vmatpush1.msra.mxu0 0.0
        %2620 = vmatprep.subr.mxu0 0.0
        %2621 = vmatpush1.msra.mxu0 0.0
        %2622 = vmatprep.subr.mxu0 0.0
        %2623 = vmatpush1.msra.mxu0 0.0
        %2624 = vmatprep.subr.mxu0 0.0
        %2625 = vmatpush1.msra.mxu0 0.0
        %2626 = vmatprep.subr.mxu0 0.0
        %2627 = vmatpush1.msra.mxu0 0.0
        %2628 = vmatprep.subr.mxu0 0.0
        %2629 = vmatpush1.msra.mxu0 0.0
        %2630 = vmatprep.subr.mxu0 0.0
        %2631 = vmatpush1.msra.mxu0 %v2583
        %2632 = vmatprep.subr.mxu0 0.0
        %2633 = vmatpush1.msra.mxu0 %v2582
        %2634 = vmatprep.subr.mxu0 0.0
        %2635 = vmatpush1.msra.mxu0 %v2581
        %2636 = vmatprep.subr.mxu0 0.0
        %2637 = vmatpush2.msra.mxu0 0.0
        %2638 = vmatprep.subr.mxu0 0.0
        %2639 = vmatpush2.msra.mxu0 0.0
        %2640 = vmatprep.subr.mxu0 0.0
        %2641 = vmatpush2.msra.mxu0 0.0
        %2642 = vmatprep.subr.mxu0 0.0
        %2643 = vmatpush2.msra.mxu0 0.0
        %2644 = vmatprep.subr.mxu0 0.0
        %2645 = vmatpush2.msra.mxu0 0.0
        %2646 = vmatprep.subr.mxu0 0.0
        %2647 = vmatpush2.msra.mxu0 0.0
        %2648 = vmatprep.subr.mxu0 0.0
        %2649 = vmatpush2.msra.mxu0 0.0
        %2650 = vmatprep.subr.mxu0 0.0
        %2651 = vmatpush2.msra.mxu0 0.0
        %2652 = vmatprep.subr.mxu0 0.0
        %2653 = vmatpush2.msra.mxu0 0.0
        %2654 = vmatprep.subr.mxu0 0.0
        %2655 = vmatpush2.msra.mxu0 0.0
        %2656 = vmatprep.subr.mxu0 0.0
        %2657 = vmatpush2.msra.mxu0 0.0
        %2658 = vmatprep.subr.mxu0 0.0
        %2659 = vmatpush2.msra.mxu0 0.0
        %2660 = vmatprep.subr.mxu0 0.0
        %2661 = vmatpush2.msra.mxu0 0.0
        %2662 = vmatprep.subr.mxu0 0.0
        %2663 = vmatpush2.msra.mxu0 0.0
        %2664 = vmatprep.subr.mxu0 0.0
        %2665 = vmatpush2.msra.mxu0 0.0
        %2666 = vmatprep.subr.mxu0 0.0
        %2667 = vmatpush2.msra.mxu0 0.0
        %2668 = vmatprep.mubr.f32.mxu0 0.0
        %2669 = vmatmul.mubr.f32.gmra.mxu0 %v2596
        %v2670 = vpop.f32.mrf.mxu0
        %v2671 = vadd.f32 0.0, %v2670
        %v2672 = vpop.f32.mrf.mxu0
        %2673 = vmatprep.mubr.f32.mxu0 0.0
        %2674 = vmatmul.mubr.f32.gmra.mxu0 %v2598
        %v2675 = vpop.f32.mrf.mxu0
        %v2676 = vadd.f32 0.0, %v2675
        %v2677 = vpop.f32.mrf.mxu0
        %2678 = vmatprep.mubr.f32.mxu0 0.0
        %2679 = vmatmul.mubr.f32.gmra.mxu0 %v2600
        %v2680 = vpop.f32.mrf.mxu0
        %v2681 = vadd.f32 0.0, %v2680
        %v2682 = vpop.f32.mrf.mxu0
        %2683 = vmatprep.mubr.f32.mxu0 0.0
        %2684 = vmatmul.mubr.f32.gmra.mxu0 %v2602
        %v2685 = vpop.f32.mrf.mxu0
        %v2686 = vadd.f32 0.0, %v2685
        %v2687 = vpop.f32.mrf.mxu0
        %2688 = vdwg.mxu0
        %v2689 = vadd.f32 %v2572, %v2671
        %v2690 = vadd.f32 %v2573, %v2676
        %v2691 = vadd.f32 %v2574, %v2681
        %v2692 = vadd.f32 %v2575, %v2686
        %v2693 = vld [vmem:[%s645 + $0x1] sm:$0xff]
        %v2694 = vld [vmem:[%s645 + $0x11] sm:$0xff]
        %v2695 = vld [vmem:[%s645 + $0x21] sm:$0xff]
        %v2696 = vld [vmem:[%s645 + $0x31] sm:$0xff]
        %s2697 = scalar_lea.vmem %s3, 96
        %v2698 = vld [vmem:[%s2697] sm:$0xff]
        %v2699 = vld [vmem:[%s2697 + $0x8] sm:$0xff]
        %v2700 = vld [vmem:[%s2697 + $0x10] sm:$0xff]
        %2705 = vrot.lane.b32.xlu0 %v2693, 120
        %v2706 = vpop.permute.xlu0 %2705
        %2707 = vrot.lane.b32.xlu0 %v2694, 120
        %v2708 = vpop.permute.xlu0 %2707
        %2709 = vrot.lane.b32.xlu0 %v2695, 120
        %v2710 = vpop.permute.xlu0 %2709
        %2711 = vrot.lane.b32.xlu0 %v2696, 120
        %v2712 = vpop.permute.xlu0 %2711
        %v2713 = vsel %vm2260, %v2706, 0
        %v2715 = vsel %vm2260, %v2708, 0
        %v2717 = vsel %vm2260, %v2710, 0
        %v2719 = vsel %vm2260, %v2712, 0
        %2721 = vmatprep.subr.mxu0 0.0
        %2722 = vmatpush1.msra.mxu0 0.0
        %2723 = vmatprep.subr.mxu0 0.0
        %2724 = vmatpush1.msra.mxu0 0.0
        %2725 = vmatprep.subr.mxu0 0.0
        %2726 = vmatpush1.msra.mxu0 0.0
        %2727 = vmatprep.subr.mxu0 0.0
        %2728 = vmatpush1.msra.mxu0 0.0
        %2729 = vmatprep.subr.mxu0 0.0
        %2730 = vmatpush1.msra.mxu0 0.0
        %2731 = vmatprep.subr.mxu0 0.0
        %2732 = vmatpush1.msra.mxu0 0.0
        %2733 = vmatprep.subr.mxu0 0.0
        %2734 = vmatpush1.msra.mxu0 0.0
        %2735 = vmatprep.subr.mxu0 0.0
        %2736 = vmatpush1.msra.mxu0 0.0
        %2737 = vmatprep.subr.mxu0 0.0
        %2738 = vmatpush1.msra.mxu0 0.0
        %2739 = vmatprep.subr.mxu0 0.0
        %2740 = vmatpush1.msra.mxu0 0.0
        %2741 = vmatprep.subr.mxu0 0.0
        %2742 = vmatpush1.msra.mxu0 0.0
        %2743 = vmatprep.subr.mxu0 0.0
        %2744 = vmatpush1.msra.mxu0 0.0
        %2745 = vmatprep.subr.mxu0 0.0
        %2746 = vmatpush1.msra.mxu0 0.0
        %2747 = vmatprep.subr.mxu0 0.0
        %2748 = vmatpush1.msra.mxu0 %v2700
        %2749 = vmatprep.subr.mxu0 0.0
        %2750 = vmatpush1.msra.mxu0 %v2699
        %2751 = vmatprep.subr.mxu0 0.0
        %2752 = vmatpush1.msra.mxu0 %v2698
        %2753 = vmatprep.subr.mxu0 0.0
        %2754 = vmatpush2.msra.mxu0 0.0
        %2755 = vmatprep.subr.mxu0 0.0
        %2756 = vmatpush2.msra.mxu0 0.0
        %2757 = vmatprep.subr.mxu0 0.0
        %2758 = vmatpush2.msra.mxu0 0.0
        %2759 = vmatprep.subr.mxu0 0.0
        %2760 = vmatpush2.msra.mxu0 0.0
        %2761 = vmatprep.subr.mxu0 0.0
        %2762 = vmatpush2.msra.mxu0 0.0
        %2763 = vmatprep.subr.mxu0 0.0
        %2764 = vmatpush2.msra.mxu0 0.0
        %2765 = vmatprep.subr.mxu0 0.0
        %2766 = vmatpush2.msra.mxu0 0.0
        %2767 = vmatprep.subr.mxu0 0.0
        %2768 = vmatpush2.msra.mxu0 0.0
        %2769 = vmatprep.subr.mxu0 0.0
        %2770 = vmatpush2.msra.mxu0 0.0
        %2771 = vmatprep.subr.mxu0 0.0
        %2772 = vmatpush2.msra.mxu0 0.0
        %2773 = vmatprep.subr.mxu0 0.0
        %2774 = vmatpush2.msra.mxu0 0.0
        %2775 = vmatprep.subr.mxu0 0.0
        %2776 = vmatpush2.msra.mxu0 0.0
        %2777 = vmatprep.subr.mxu0 0.0
        %2778 = vmatpush2.msra.mxu0 0.0
        %2779 = vmatprep.subr.mxu0 0.0
        %2780 = vmatpush2.msra.mxu0 0.0
        %2781 = vmatprep.subr.mxu0 0.0
        %2782 = vmatpush2.msra.mxu0 0.0
        %2783 = vmatprep.subr.mxu0 0.0
        %2784 = vmatpush2.msra.mxu0 0.0
        %2785 = vmatprep.mubr.f32.mxu0 0.0
        %2786 = vmatmul.mubr.f32.gmra.mxu0 %v2713
        %v2787 = vpop.f32.mrf.mxu0
        %v2788 = vadd.f32 0.0, %v2787
        %v2789 = vpop.f32.mrf.mxu0
        %2790 = vmatprep.mubr.f32.mxu0 0.0
        %2791 = vmatmul.mubr.f32.gmra.mxu0 %v2715
        %v2792 = vpop.f32.mrf.mxu0
        %v2793 = vadd.f32 0.0, %v2792
        %v2794 = vpop.f32.mrf.mxu0
        %2795 = vmatprep.mubr.f32.mxu0 0.0
        %2796 = vmatmul.mubr.f32.gmra.mxu0 %v2717
        %v2797 = vpop.f32.mrf.mxu0
        %v2798 = vadd.f32 0.0, %v2797
        %v2799 = vpop.f32.mrf.mxu0
        %2800 = vmatprep.mubr.f32.mxu0 0.0
        %2801 = vmatmul.mubr.f32.gmra.mxu0 %v2719
        %v2802 = vpop.f32.mrf.mxu0
        %v2803 = vadd.f32 0.0, %v2802
        %v2804 = vpop.f32.mrf.mxu0
        %2805 = vdwg.mxu0
        %v2806 = vadd.f32 %v2689, %v2788
        %v2807 = vadd.f32 %v2690, %v2793
        %v2808 = vadd.f32 %v2691, %v2798
        %v2809 = vadd.f32 %v2692, %v2803
        %v2810 = vld [vmem:[%s645 + $0x2] sm:$0xff]
        %v2811 = vld [vmem:[%s645 + $0x12] sm:$0xff]
        %v2812 = vld [vmem:[%s645 + $0x22] sm:$0xff]
        %v2813 = vld [vmem:[%s645 + $0x32] sm:$0xff]
        %s2814 = scalar_lea.vmem %s3, 120
        %v2815 = vld [vmem:[%s2814] sm:$0xff]
        %v2816 = vld [vmem:[%s2814 + $0x8] sm:$0xff]
        %v2817 = vld [vmem:[%s2814 + $0x10] sm:$0xff]
        %2822 = vrot.lane.b32.xlu0 %v2810, 120
        %v2823 = vpop.permute.xlu0 %2822
        %2824 = vrot.lane.b32.xlu0 %v2811, 120
        %v2825 = vpop.permute.xlu0 %2824
        %2826 = vrot.lane.b32.xlu0 %v2812, 120
        %v2827 = vpop.permute.xlu0 %2826
        %2828 = vrot.lane.b32.xlu0 %v2813, 120
        %v2829 = vpop.permute.xlu0 %2828
        %v2830 = vsel %vm2260, %v2823, 0
        %v2832 = vsel %vm2260, %v2825, 0
        %v2834 = vsel %vm2260, %v2827, 0
        %v2836 = vsel %vm2260, %v2829, 0
        %2838 = vmatprep.subr.mxu0 0.0
        %2839 = vmatpush1.msra.mxu0 0.0
        %2840 = vmatprep.subr.mxu0 0.0
        %2841 = vmatpush1.msra.mxu0 0.0
        %2842 = vmatprep.subr.mxu0 0.0
        %2843 = vmatpush1.msra.mxu0 0.0
        %2844 = vmatprep.subr.mxu0 0.0
        %2845 = vmatpush1.msra.mxu0 0.0
        %2846 = vmatprep.subr.mxu0 0.0
        %2847 = vmatpush1.msra.mxu0 0.0
        %2848 = vmatprep.subr.mxu0 0.0
        %2849 = vmatpush1.msra.mxu0 0.0
        %2850 = vmatprep.subr.mxu0 0.0
        %2851 = vmatpush1.msra.mxu0 0.0
        %2852 = vmatprep.subr.mxu0 0.0
        %2853 = vmatpush1.msra.mxu0 0.0
        %2854 = vmatprep.subr.mxu0 0.0
        %2855 = vmatpush1.msra.mxu0 0.0
        %2856 = vmatprep.subr.mxu0 0.0
        %2857 = vmatpush1.msra.mxu0 0.0
        %2858 = vmatprep.subr.mxu0 0.0
        %2859 = vmatpush1.msra.mxu0 0.0
        %2860 = vmatprep.subr.mxu0 0.0
        %2861 = vmatpush1.msra.mxu0 0.0
        %2862 = vmatprep.subr.mxu0 0.0
        %2863 = vmatpush1.msra.mxu0 0.0
        %2864 = vmatprep.subr.mxu0 0.0
        %2865 = vmatpush1.msra.mxu0 %v2817
        %2866 = vmatprep.subr.mxu0 0.0
        %2867 = vmatpush1.msra.mxu0 %v2816
        %2868 = vmatprep.subr.mxu0 0.0
        %2869 = vmatpush1.msra.mxu0 %v2815
        %2870 = vmatprep.subr.mxu0 0.0
        %2871 = vmatpush2.msra.mxu0 0.0
        %2872 = vmatprep.subr.mxu0 0.0
        %2873 = vmatpush2.msra.mxu0 0.0
        %2874 = vmatprep.subr.mxu0 0.0
        %2875 = vmatpush2.msra.mxu0 0.0
        %2876 = vmatprep.subr.mxu0 0.0
        %2877 = vmatpush2.msra.mxu0 0.0
        %2878 = vmatprep.subr.mxu0 0.0
        %2879 = vmatpush2.msra.mxu0 0.0
        %2880 = vmatprep.subr.mxu0 0.0
        %2881 = vmatpush2.msra.mxu0 0.0
        %2882 = vmatprep.subr.mxu0 0.0
        %2883 = vmatpush2.msra.mxu0 0.0
        %2884 = vmatprep.subr.mxu0 0.0
        %2885 = vmatpush2.msra.mxu0 0.0
        %2886 = vmatprep.subr.mxu0 0.0
        %2887 = vmatpush2.msra.mxu0 0.0
        %2888 = vmatprep.subr.mxu0 0.0
        %2889 = vmatpush2.msra.mxu0 0.0
        %2890 = vmatprep.subr.mxu0 0.0
        %2891 = vmatpush2.msra.mxu0 0.0
        %2892 = vmatprep.subr.mxu0 0.0
        %2893 = vmatpush2.msra.mxu0 0.0
        %2894 = vmatprep.subr.mxu0 0.0
        %2895 = vmatpush2.msra.mxu0 0.0
        %2896 = vmatprep.subr.mxu0 0.0
        %2897 = vmatpush2.msra.mxu0 0.0
        %2898 = vmatprep.subr.mxu0 0.0
        %2899 = vmatpush2.msra.mxu0 0.0
        %2900 = vmatprep.subr.mxu0 0.0
        %2901 = vmatpush2.msra.mxu0 0.0
        %2902 = vmatprep.mubr.f32.mxu0 0.0
        %2903 = vmatmul.mubr.f32.gmra.mxu0 %v2830
        %v2904 = vpop.f32.mrf.mxu0
        %v2905 = vadd.f32 0.0, %v2904
        %v2906 = vpop.f32.mrf.mxu0
        %2907 = vmatprep.mubr.f32.mxu0 0.0
        %2908 = vmatmul.mubr.f32.gmra.mxu0 %v2832
        %v2909 = vpop.f32.mrf.mxu0
        %v2910 = vadd.f32 0.0, %v2909
        %v2911 = vpop.f32.mrf.mxu0
        %2912 = vmatprep.mubr.f32.mxu0 0.0
        %2913 = vmatmul.mubr.f32.gmra.mxu0 %v2834
        %v2914 = vpop.f32.mrf.mxu0
        %v2915 = vadd.f32 0.0, %v2914
        %v2916 = vpop.f32.mrf.mxu0
        %2917 = vmatprep.mubr.f32.mxu0 0.0
        %2918 = vmatmul.mubr.f32.gmra.mxu0 %v2836
        %v2919 = vpop.f32.mrf.mxu0
        %v2920 = vadd.f32 0.0, %v2919
        %v2921 = vpop.f32.mrf.mxu0
        %2922 = vdwg.mxu0
        %v2923 = vadd.f32 %v2806, %v2905
        %v2924 = vadd.f32 %v2807, %v2910
        %v2925 = vadd.f32 %v2808, %v2915
        %v2926 = vadd.f32 %v2809, %v2920
        %v2927 = vld [vmem:[#allocation13] sm:$0xf]
        %v2928 = vlaneseq
        %v2929 = vshrl.u32 %v2928, 7
        %v2930 = vsub.s32 0, %v2929
        %v2931 = vrot.slane %v2927, %v2930
        %v2932 = vadd.f32 %v2923, %v2931
        %v2933 = vadd.f32 %v2924, %v2931
        %v2934 = vadd.f32 %v2925, %v2931
        %v2935 = vadd.f32 %v2926, %v2931
        %v2936 = vsel %vm675, %v2932, 0.0
        %v2937 = vsel %vm675, %v2933, 0.0
        %v2938 = vadd.f32 %v2936, %v2937
        %v2939 = vsel %vm675, %v2934, 0.0
        %v2940 = vadd.f32 %v2938, %v2939
        %v2941 = vsel %vm675, %v2935, 0.0
        %v2942 = vadd.f32 %v2940, %v2941
        %v2943 = vrot.slane %v2942, 4
        %v2944 = vadd.f32 %v2942, %v2943
        %v2945 = vrot.slane %v2944, 2
        %v2946 = vadd.f32 %v2944, %v2945
        %v2947 = vrot.slane %v2946, 1
        %v2948 = vadd.f32 %v2946, %v2947
        %v2949 = vmul.f32 %v2948, %v1356
        %v2950 = vsub.f32 %v2932, %v2949
        %v2951 = vsub.f32 %v2933, %v2949
        %v2952 = vsub.f32 %v2934, %v2949
        %v2953 = vsub.f32 %v2935, %v2949
        %v2954 = vmul.f32 %v2950, %v2950
        %v2955 = vmul.f32 %v2951, %v2951
        %v2956 = vmul.f32 %v2952, %v2952
        %v2957 = vmul.f32 %v2953, %v2953
        %v2958 = vsel %vm675, %v2954, 0.0
        %v2959 = vsel %vm675, %v2955, 0.0
        %v2960 = vadd.f32 %v2958, %v2959
        %v2961 = vsel %vm675, %v2956, 0.0
        %v2962 = vadd.f32 %v2960, %v2961
        %v2963 = vsel %vm675, %v2957, 0.0
        %v2964 = vadd.f32 %v2962, %v2963
        %v2965 = vrot.slane %v2964, 4
        %v2966 = vadd.f32 %v2964, %v2965
        %v2967 = vrot.slane %v2966, 2
        %v2968 = vadd.f32 %v2966, %v2967
        %v2969 = vrot.slane %v2968, 1
        %v2970 = vadd.f32 %v2968, %v2969
        %v2971 = vmul.f32 %v2970, %v1356
        %v2972 = vadd.f32 %v2971, 1e-05
        %v2973 = vrsqrt.pop %v2972
        %v2974 = vmul.f32 %v2950, %v2973
        %v2975 = vmul.f32 %v2951, %v2973
        %v2976 = vmul.f32 %v2952, %v2973
        %v2977 = vmul.f32 %v2953, %v2973
        %v2978 = vlaneseq
        %v2979 = vshrl.u32 %v2978, 7
        %v2980 = vsub.s32 1, %v2979
        %v2981 = vrot.slane %v2927, %v2980
        %v2982 = vmul.f32 %v2974, %v2981
        %v2983 = vmul.f32 %v2975, %v2981
        %v2984 = vmul.f32 %v2976, %v2981
        %v2985 = vmul.f32 %v2977, %v2981
        %v2986 = vlaneseq
        %v2987 = vshrl.u32 %v2986, 7
        %v2988 = vsub.s32 2, %v2987
        %v2989 = vrot.slane %v2927, %v2988
        %v2990 = vadd.f32 %v2982, %v2989
        %v2991 = vadd.f32 %v2983, %v2989
        %v2992 = vadd.f32 %v2984, %v2989
        %v2993 = vadd.f32 %v2985, %v2989
        %vm2994 = vcmp.gt.f32.partialorder %v2990, 0.0
        %vm2995 = vcmp.gt.f32.partialorder %v2991, 0.0
        %vm2996 = vcmp.gt.f32.partialorder %v2992, 0.0
        %vm2997 = vcmp.gt.f32.partialorder %v2993, 0.0
        %v2998 = vlaneseq
        %v2999 = vshrl.u32 %v2998, 7
        %v3000 = vsub.s32 3, %v2999
        %v3001 = vrot.slane %v2927, %v3000
        %v3002 = vmul.f32 %v3001, %v2990
        %v3003 = vmul.f32 %v3001, %v2991
        %v3004 = vmul.f32 %v3001, %v2992
        %v3005 = vmul.f32 %v3001, %v2993
        %v3006 = vsel %vm2994, %v2990, %v3002
        %v3007 = vsel %vm2995, %v2991, %v3003
        %v3008 = vsel %vm2996, %v2992, %v3004
        %v3009 = vsel %vm2997, %v2993, %v3005
        %3010 = vst.msk [vmem:[%s645 + $0x1] sm:$0xff] %vm675, %v3006
        %3011 = vst.msk [vmem:[%s645 + $0x11] sm:$0xff] %vm675, %v3007
        %3012 = vst.msk [vmem:[%s645 + $0x21] sm:$0xff] %vm675, %v3008
        %3013 = vst.msk [vmem:[%s645 + $0x31] sm:$0xff] %vm675, %v3009
        %v3014 = vld [vmem:[#allocation2] sm:$0xff]
        %v3015 = vld [vmem:[#allocation2 + $0x10] sm:$0xff]
        %v3016 = vld [vmem:[#allocation2 + $0x20] sm:$0xff]
        %v3017 = vld [vmem:[#allocation2 + $0x30] sm:$0xff]
        %v3018 = vld [vmem:[#allocation9] sm:$0xff]
        %v3019 = vld [vmem:[#allocation9 + $0x8] sm:$0xff]
        %v3020 = vld [vmem:[#allocation9 + $0x10] sm:$0xff]
        %v3021 = vld [vmem:[#allocation9 + $0x18] sm:$0xff]
        %v3022 = vld [vmem:[#allocation2 + $0x1] sm:$0xff]
        %v3023 = vld [vmem:[#allocation2 + $0x11] sm:$0xff]
        %v3024 = vld [vmem:[#allocation2 + $0x21] sm:$0xff]
        %v3025 = vld [vmem:[#allocation2 + $0x31] sm:$0xff]
        %s3026 = scalar_lea.vmem [#allocation9], 32
        %v3027 = vld [vmem:[%s3026] sm:$0xff]
        %v3028 = vld [vmem:[%s3026 + $0x8] sm:$0xff]
        %v3029 = vld [vmem:[%s3026 + $0x10] sm:$0xff]
        %v3030 = vld [vmem:[%s3026 + $0x18] sm:$0xff]
        %v3032 = vsel %vm599, %v3022, 0
        %v3035 = vsel %vm599, %v3023, 0
        %v3038 = vsel %vm599, %v3024, 0
        %v3041 = vsel %vm599, %v3025, 0
        %3043 = vmatprep.subr.mxu0 0.0
        %3044 = vmatpush1.msra.mxu0 0.0
        %3045 = vmatprep.subr.mxu0 0.0
        %3046 = vmatpush1.msra.mxu0 0.0
        %3047 = vmatprep.subr.mxu0 0.0
        %3048 = vmatpush1.msra.mxu0 0.0
        %3049 = vmatprep.subr.mxu0 0.0
        %3050 = vmatpush1.msra.mxu0 0.0
        %3051 = vmatprep.subr.mxu0 0.0
        %3052 = vmatpush1.msra.mxu0 0.0
        %3053 = vmatprep.subr.mxu0 0.0
        %3054 = vmatpush1.msra.mxu0 0.0
        %3055 = vmatprep.subr.mxu0 0.0
        %3056 = vmatpush1.msra.mxu0 0.0
        %3057 = vmatprep.subr.mxu0 0.0
        %3058 = vmatpush1.msra.mxu0 0.0
        %3059 = vmatprep.subr.mxu0 0.0
        %3060 = vmatpush1.msra.mxu0 0.0
        %3061 = vmatprep.subr.mxu0 0.0
        %3062 = vmatpush1.msra.mxu0 0.0
        %3063 = vmatprep.subr.mxu0 0.0
        %3064 = vmatpush1.msra.mxu0 0.0
        %3065 = vmatprep.subr.mxu0 0.0
        %3066 = vmatpush1.msra.mxu0 0.0
        %3067 = vmatprep.subr.mxu0 0.0
        %3068 = vmatpush1.msra.mxu0 %v3030
        %3069 = vmatprep.subr.mxu0 0.0
        %3070 = vmatpush1.msra.mxu0 %v3029
        %3071 = vmatprep.subr.mxu0 0.0
        %3072 = vmatpush1.msra.mxu0 %v3028
        %3073 = vmatprep.subr.mxu0 0.0
        %3074 = vmatpush1.msra.mxu0 %v3027
        %3075 = vmatprep.subr.mxu0 0.0
        %3076 = vmatpush2.msra.mxu0 0.0
        %3077 = vmatprep.subr.mxu0 0.0
        %3078 = vmatpush2.msra.mxu0 0.0
        %3079 = vmatprep.subr.mxu0 0.0
        %3080 = vmatpush2.msra.mxu0 0.0
        %3081 = vmatprep.subr.mxu0 0.0
        %3082 = vmatpush2.msra.mxu0 0.0
        %3083 = vmatprep.subr.mxu0 0.0
        %3084 = vmatpush2.msra.mxu0 0.0
        %3085 = vmatprep.subr.mxu0 0.0
        %3086 = vmatpush2.msra.mxu0 0.0
        %3087 = vmatprep.subr.mxu0 0.0
        %3088 = vmatpush2.msra.mxu0 0.0
        %3089 = vmatprep.subr.mxu0 0.0
        %3090 = vmatpush2.msra.mxu0 0.0
        %3091 = vmatprep.subr.mxu0 0.0
        %3092 = vmatpush2.msra.mxu0 0.0
        %3093 = vmatprep.subr.mxu0 0.0
        %3094 = vmatpush2.msra.mxu0 0.0
        %3095 = vmatprep.subr.mxu0 0.0
        %3096 = vmatpush2.msra.mxu0 0.0
        %3097 = vmatprep.subr.mxu0 0.0
        %3098 = vmatpush2.msra.mxu0 0.0
        %3099 = vmatprep.subr.mxu0 0.0
        %3100 = vmatpush2.msra.mxu0 0.0
        %3101 = vmatprep.subr.mxu0 0.0
        %3102 = vmatpush2.msra.mxu0 0.0
        %3103 = vmatprep.subr.mxu0 0.0
        %3104 = vmatpush2.msra.mxu0 0.0
        %3105 = vmatprep.subr.mxu0 0.0
        %3106 = vmatpush2.msra.mxu0 0.0
        %3107 = vmatprep.mubr.f32.mxu0 0.0
        %3108 = vmatmul.mubr.f32.gmra.mxu0 %v3032
        %v3109 = vpop.f32.mrf.mxu0
        %v3110 = vadd.f32 0.0, %v3109
        %v3111 = vpop.f32.mrf.mxu0
        %3112 = vmatprep.mubr.f32.mxu0 0.0
        %3113 = vmatmul.mubr.f32.gmra.mxu0 %v3035
        %v3114 = vpop.f32.mrf.mxu0
        %v3115 = vadd.f32 0.0, %v3114
        %v3116 = vpop.f32.mrf.mxu0
        %3117 = vmatprep.mubr.f32.mxu0 0.0
        %3118 = vmatmul.mubr.f32.gmra.mxu0 %v3038
        %v3119 = vpop.f32.mrf.mxu0
        %v3120 = vadd.f32 0.0, %v3119
        %v3121 = vpop.f32.mrf.mxu0
        %3122 = vmatprep.mubr.f32.mxu0 0.0
        %3123 = vmatmul.mubr.f32.gmra.mxu0 %v3041
        %v3124 = vpop.f32.mrf.mxu0
        %v3125 = vadd.f32 0.0, %v3124
        %v3126 = vpop.f32.mrf.mxu0
        %3127 = vdwg.mxu0
        %v3129 = vsel %vm599, %v3014, 0
        %v3132 = vsel %vm599, %v3015, 0
        %v3135 = vsel %vm599, %v3016, 0
        %v3138 = vsel %vm599, %v3017, 0
        %3140 = vmatprep.subr.mxu0 0.0
        %3141 = vmatpush1.msra.mxu0 0.0
        %3142 = vmatprep.subr.mxu0 0.0
        %3143 = vmatpush1.msra.mxu0 0.0
        %3144 = vmatprep.subr.mxu0 0.0
        %3145 = vmatpush1.msra.mxu0 0.0
        %3146 = vmatprep.subr.mxu0 0.0
        %3147 = vmatpush1.msra.mxu0 0.0
        %3148 = vmatprep.subr.mxu0 0.0
        %3149 = vmatpush1.msra.mxu0 0.0
        %3150 = vmatprep.subr.mxu0 0.0
        %3151 = vmatpush1.msra.mxu0 0.0
        %3152 = vmatprep.subr.mxu0 0.0
        %3153 = vmatpush1.msra.mxu0 0.0
        %3154 = vmatprep.subr.mxu0 0.0
        %3155 = vmatpush1.msra.mxu0 0.0
        %3156 = vmatprep.subr.mxu0 0.0
        %3157 = vmatpush1.msra.mxu0 0.0
        %3158 = vmatprep.subr.mxu0 0.0
        %3159 = vmatpush1.msra.mxu0 0.0
        %3160 = vmatprep.subr.mxu0 0.0
        %3161 = vmatpush1.msra.mxu0 0.0
        %3162 = vmatprep.subr.mxu0 0.0
        %3163 = vmatpush1.msra.mxu0 0.0
        %3164 = vmatprep.subr.mxu0 0.0
        %3165 = vmatpush1.msra.mxu0 %v3021
        %3166 = vmatprep.subr.mxu0 0.0
        %3167 = vmatpush1.msra.mxu0 %v3020
        %3168 = vmatprep.subr.mxu0 0.0
        %3169 = vmatpush1.msra.mxu0 %v3019
        %3170 = vmatprep.subr.mxu0 0.0
        %3171 = vmatpush1.msra.mxu0 %v3018
        %3172 = vmatprep.subr.mxu0 0.0
        %3173 = vmatpush2.msra.mxu0 0.0
        %3174 = vmatprep.subr.mxu0 0.0
        %3175 = vmatpush2.msra.mxu0 0.0
        %3176 = vmatprep.subr.mxu0 0.0
        %3177 = vmatpush2.msra.mxu0 0.0
        %3178 = vmatprep.subr.mxu0 0.0
        %3179 = vmatpush2.msra.mxu0 0.0
        %3180 = vmatprep.subr.mxu0 0.0
        %3181 = vmatpush2.msra.mxu0 0.0
        %3182 = vmatprep.subr.mxu0 0.0
        %3183 = vmatpush2.msra.mxu0 0.0
        %3184 = vmatprep.subr.mxu0 0.0
        %3185 = vmatpush2.msra.mxu0 0.0
        %3186 = vmatprep.subr.mxu0 0.0
        %3187 = vmatpush2.msra.mxu0 0.0
        %3188 = vmatprep.subr.mxu0 0.0
        %3189 = vmatpush2.msra.mxu0 0.0
        %3190 = vmatprep.subr.mxu0 0.0
        %3191 = vmatpush2.msra.mxu0 0.0
        %3192 = vmatprep.subr.mxu0 0.0
        %3193 = vmatpush2.msra.mxu0 0.0
        %3194 = vmatprep.subr.mxu0 0.0
        %3195 = vmatpush2.msra.mxu0 0.0
        %3196 = vmatprep.subr.mxu0 0.0
        %3197 = vmatpush2.msra.mxu0 0.0
        %3198 = vmatprep.subr.mxu0 0.0
        %3199 = vmatpush2.msra.mxu0 0.0
        %3200 = vmatprep.subr.mxu0 0.0
        %3201 = vmatpush2.msra.mxu0 0.0
        %3202 = vmatprep.subr.mxu0 0.0
        %3203 = vmatpush2.msra.mxu0 0.0
        %3204 = vmatprep.mubr.f32.mxu0 0.0
        %3205 = vmatmul.mubr.f32.gmra.mxu0 %v3129
        %v3206 = vpop.f32.mrf.mxu0
        %v3207 = vadd.f32 %v3110, %v3206
        %v3208 = vpop.f32.mrf.mxu0
        %3209 = vmatprep.mubr.f32.mxu0 0.0
        %3210 = vmatmul.mubr.f32.gmra.mxu0 %v3132
        %v3211 = vpop.f32.mrf.mxu0
        %v3212 = vadd.f32 %v3115, %v3211
        %v3213 = vpop.f32.mrf.mxu0
        %3214 = vmatprep.mubr.f32.mxu0 0.0
        %3215 = vmatmul.mubr.f32.gmra.mxu0 %v3135
        %v3216 = vpop.f32.mrf.mxu0
        %v3217 = vadd.f32 %v3120, %v3216
        %v3218 = vpop.f32.mrf.mxu0
        %3219 = vmatprep.mubr.f32.mxu0 0.0
        %3220 = vmatmul.mubr.f32.gmra.mxu0 %v3138
        %v3221 = vpop.f32.mrf.mxu0
        %v3222 = vadd.f32 %v3125, %v3221
        %v3223 = vpop.f32.mrf.mxu0
        %3224 = vdwg.mxu0
        %v3225 = vld [vmem:[#allocation2 + $0x2] sm:$0xff]
        %v3226 = vld [vmem:[#allocation2 + $0x12] sm:$0xff]
        %v3227 = vld [vmem:[#allocation2 + $0x22] sm:$0xff]
        %v3228 = vld [vmem:[#allocation2 + $0x32] sm:$0xff]
        %s3229 = scalar_lea.vmem [#allocation9], 64
        %v3230 = vld [vmem:[%s3229] sm:$0xff]
        %v3231 = vld [vmem:[%s3229 + $0x8] sm:$0xff]
        %v3232 = vld [vmem:[%s3229 + $0x10] sm:$0xff]
        %v3233 = vld [vmem:[%s3229 + $0x18] sm:$0xff]
        %v3235 = vsel %vm599, %v3225, 0
        %v3238 = vsel %vm599, %v3226, 0
        %v3241 = vsel %vm599, %v3227, 0
        %v3244 = vsel %vm599, %v3228, 0
        %3246 = vmatprep.subr.mxu0 0.0
        %3247 = vmatpush1.msra.mxu0 0.0
        %3248 = vmatprep.subr.mxu0 0.0
        %3249 = vmatpush1.msra.mxu0 0.0
        %3250 = vmatprep.subr.mxu0 0.0
        %3251 = vmatpush1.msra.mxu0 0.0
        %3252 = vmatprep.subr.mxu0 0.0
        %3253 = vmatpush1.msra.mxu0 0.0
        %3254 = vmatprep.subr.mxu0 0.0
        %3255 = vmatpush1.msra.mxu0 0.0
        %3256 = vmatprep.subr.mxu0 0.0
        %3257 = vmatpush1.msra.mxu0 0.0
        %3258 = vmatprep.subr.mxu0 0.0
        %3259 = vmatpush1.msra.mxu0 0.0
        %3260 = vmatprep.subr.mxu0 0.0
        %3261 = vmatpush1.msra.mxu0 0.0
        %3262 = vmatprep.subr.mxu0 0.0
        %3263 = vmatpush1.msra.mxu0 0.0
        %3264 = vmatprep.subr.mxu0 0.0
        %3265 = vmatpush1.msra.mxu0 0.0
        %3266 = vmatprep.subr.mxu0 0.0
        %3267 = vmatpush1.msra.mxu0 0.0
        %3268 = vmatprep.subr.mxu0 0.0
        %3269 = vmatpush1.msra.mxu0 0.0
        %3270 = vmatprep.subr.mxu0 0.0
        %3271 = vmatpush1.msra.mxu0 %v3233
        %3272 = vmatprep.subr.mxu0 0.0
        %3273 = vmatpush1.msra.mxu0 %v3232
        %3274 = vmatprep.subr.mxu0 0.0
        %3275 = vmatpush1.msra.mxu0 %v3231
        %3276 = vmatprep.subr.mxu0 0.0
        %3277 = vmatpush1.msra.mxu0 %v3230
        %3278 = vmatprep.subr.mxu0 0.0
        %3279 = vmatpush2.msra.mxu0 0.0
        %3280 = vmatprep.subr.mxu0 0.0
        %3281 = vmatpush2.msra.mxu0 0.0
        %3282 = vmatprep.subr.mxu0 0.0
        %3283 = vmatpush2.msra.mxu0 0.0
        %3284 = vmatprep.subr.mxu0 0.0
        %3285 = vmatpush2.msra.mxu0 0.0
        %3286 = vmatprep.subr.mxu0 0.0
        %3287 = vmatpush2.msra.mxu0 0.0
        %3288 = vmatprep.subr.mxu0 0.0
        %3289 = vmatpush2.msra.mxu0 0.0
        %3290 = vmatprep.subr.mxu0 0.0
        %3291 = vmatpush2.msra.mxu0 0.0
        %3292 = vmatprep.subr.mxu0 0.0
        %3293 = vmatpush2.msra.mxu0 0.0
        %3294 = vmatprep.subr.mxu0 0.0
        %3295 = vmatpush2.msra.mxu0 0.0
        %3296 = vmatprep.subr.mxu0 0.0
        %3297 = vmatpush2.msra.mxu0 0.0
        %3298 = vmatprep.subr.mxu0 0.0
        %3299 = vmatpush2.msra.mxu0 0.0
        %3300 = vmatprep.subr.mxu0 0.0
        %3301 = vmatpush2.msra.mxu0 0.0
        %3302 = vmatprep.subr.mxu0 0.0
        %3303 = vmatpush2.msra.mxu0 0.0
        %3304 = vmatprep.subr.mxu0 0.0
        %3305 = vmatpush2.msra.mxu0 0.0
        %3306 = vmatprep.subr.mxu0 0.0
        %3307 = vmatpush2.msra.mxu0 0.0
        %3308 = vmatprep.subr.mxu0 0.0
        %3309 = vmatpush2.msra.mxu0 0.0
        %3310 = vmatprep.mubr.f32.mxu0 0.0
        %3311 = vmatmul.mubr.f32.gmra.mxu0 %v3235
        %v3312 = vpop.f32.mrf.mxu0
        %v3313 = vadd.f32 0.0, %v3312
        %v3314 = vpop.f32.mrf.mxu0
        %3315 = vmatprep.mubr.f32.mxu0 0.0
        %3316 = vmatmul.mubr.f32.gmra.mxu0 %v3238
        %v3317 = vpop.f32.mrf.mxu0
        %v3318 = vadd.f32 0.0, %v3317
        %v3319 = vpop.f32.mrf.mxu0
        %3320 = vmatprep.mubr.f32.mxu0 0.0
        %3321 = vmatmul.mubr.f32.gmra.mxu0 %v3241
        %v3322 = vpop.f32.mrf.mxu0
        %v3323 = vadd.f32 0.0, %v3322
        %v3324 = vpop.f32.mrf.mxu0
        %3325 = vmatprep.mubr.f32.mxu0 0.0
        %3326 = vmatmul.mubr.f32.gmra.mxu0 %v3244
        %v3327 = vpop.f32.mrf.mxu0
        %v3328 = vadd.f32 0.0, %v3327
        %v3329 = vpop.f32.mrf.mxu0
        %3330 = vdwg.mxu0
        %v3331 = vadd.f32 %v3207, %v3313
        %v3332 = vadd.f32 %v3212, %v3318
        %v3333 = vadd.f32 %v3217, %v3323
        %v3334 = vadd.f32 %v3222, %v3328
        %v3335 = vld [vmem:[%s645] sm:$0xff]
        %v3336 = vld [vmem:[%s645 + $0x10] sm:$0xff]
        %v3337 = vld [vmem:[%s645 + $0x20] sm:$0xff]
        %v3338 = vld [vmem:[%s645 + $0x30] sm:$0xff]
        %s3339 = scalar_lea.vmem [#allocation9], 96
        %v3340 = vld [vmem:[%s3339] sm:$0xff]
        %v3341 = vld [vmem:[%s3339 + $0x8] sm:$0xff]
        %v3342 = vld [vmem:[%s3339 + $0x10] sm:$0xff]
        %v3343 = vld [vmem:[%s3339 + $0x18] sm:$0xff]
        %v3345 = vsel %vm599, %v3335, 0
        %v3348 = vsel %vm599, %v3336, 0
        %v3351 = vsel %vm599, %v3337, 0
        %v3354 = vsel %vm599, %v3338, 0
        %3356 = vmatprep.subr.mxu0 0.0
        %3357 = vmatpush1.msra.mxu0 0.0
        %3358 = vmatprep.subr.mxu0 0.0
        %3359 = vmatpush1.msra.mxu0 0.0
        %3360 = vmatprep.subr.mxu0 0.0
        %3361 = vmatpush1.msra.mxu0 0.0
        %3362 = vmatprep.subr.mxu0 0.0
        %3363 = vmatpush1.msra.mxu0 0.0
        %3364 = vmatprep.subr.mxu0 0.0
        %3365 = vmatpush1.msra.mxu0 0.0
        %3366 = vmatprep.subr.mxu0 0.0
        %3367 = vmatpush1.msra.mxu0 0.0
        %3368 = vmatprep.subr.mxu0 0.0
        %3369 = vmatpush1.msra.mxu0 0.0
        %3370 = vmatprep.subr.mxu0 0.0
        %3371 = vmatpush1.msra.mxu0 0.0
        %3372 = vmatprep.subr.mxu0 0.0
        %3373 = vmatpush1.msra.mxu0 0.0
        %3374 = vmatprep.subr.mxu0 0.0
        %3375 = vmatpush1.msra.mxu0 0.0
        %3376 = vmatprep.subr.mxu0 0.0
        %3377 = vmatpush1.msra.mxu0 0.0
        %3378 = vmatprep.subr.mxu0 0.0
        %3379 = vmatpush1.msra.mxu0 0.0
        %3380 = vmatprep.subr.mxu0 0.0
        %3381 = vmatpush1.msra.mxu0 %v3343
        %3382 = vmatprep.subr.mxu0 0.0
        %3383 = vmatpush1.msra.mxu0 %v3342
        %3384 = vmatprep.subr.mxu0 0.0
        %3385 = vmatpush1.msra.mxu0 %v3341
        %3386 = vmatprep.subr.mxu0 0.0
        %3387 = vmatpush1.msra.mxu0 %v3340
        %3388 = vmatprep.subr.mxu0 0.0
        %3389 = vmatpush2.msra.mxu0 0.0
        %3390 = vmatprep.subr.mxu0 0.0
        %3391 = vmatpush2.msra.mxu0 0.0
        %3392 = vmatprep.subr.mxu0 0.0
        %3393 = vmatpush2.msra.mxu0 0.0
        %3394 = vmatprep.subr.mxu0 0.0
        %3395 = vmatpush2.msra.mxu0 0.0
        %3396 = vmatprep.subr.mxu0 0.0
        %3397 = vmatpush2.msra.mxu0 0.0
        %3398 = vmatprep.subr.mxu0 0.0
        %3399 = vmatpush2.msra.mxu0 0.0
        %3400 = vmatprep.subr.mxu0 0.0
        %3401 = vmatpush2.msra.mxu0 0.0
        %3402 = vmatprep.subr.mxu0 0.0
        %3403 = vmatpush2.msra.mxu0 0.0
        %3404 = vmatprep.subr.mxu0 0.0
        %3405 = vmatpush2.msra.mxu0 0.0
        %3406 = vmatprep.subr.mxu0 0.0
        %3407 = vmatpush2.msra.mxu0 0.0
        %3408 = vmatprep.subr.mxu0 0.0
        %3409 = vmatpush2.msra.mxu0 0.0
        %3410 = vmatprep.subr.mxu0 0.0
        %3411 = vmatpush2.msra.mxu0 0.0
        %3412 = vmatprep.subr.mxu0 0.0
        %3413 = vmatpush2.msra.mxu0 0.0
        %3414 = vmatprep.subr.mxu0 0.0
        %3415 = vmatpush2.msra.mxu0 0.0
        %3416 = vmatprep.subr.mxu0 0.0
        %3417 = vmatpush2.msra.mxu0 0.0
        %3418 = vmatprep.subr.mxu0 0.0
        %3419 = vmatpush2.msra.mxu0 0.0
        %3420 = vmatprep.mubr.f32.mxu0 0.0
        %3421 = vmatmul.mubr.f32.gmra.mxu0 %v3345
        %v3422 = vpop.f32.mrf.mxu0
        %v3423 = vadd.f32 0.0, %v3422
        %v3424 = vpop.f32.mrf.mxu0
        %3425 = vmatprep.mubr.f32.mxu0 0.0
        %3426 = vmatmul.mubr.f32.gmra.mxu0 %v3348
        %v3427 = vpop.f32.mrf.mxu0
        %v3428 = vadd.f32 0.0, %v3427
        %v3429 = vpop.f32.mrf.mxu0
        %3430 = vmatprep.mubr.f32.mxu0 0.0
        %3431 = vmatmul.mubr.f32.gmra.mxu0 %v3351
        %v3432 = vpop.f32.mrf.mxu0
        %v3433 = vadd.f32 0.0, %v3432
        %v3434 = vpop.f32.mrf.mxu0
        %3435 = vmatprep.mubr.f32.mxu0 0.0
        %3436 = vmatmul.mubr.f32.gmra.mxu0 %v3354
        %v3437 = vpop.f32.mrf.mxu0
        %v3438 = vadd.f32 0.0, %v3437
        %v3439 = vpop.f32.mrf.mxu0
        %3440 = vdwg.mxu0
        %v3441 = vadd.f32 %v3331, %v3423
        %v3442 = vadd.f32 %v3332, %v3428
        %v3443 = vadd.f32 %v3333, %v3433
        %v3444 = vadd.f32 %v3334, %v3438
        %v3445 = vld [vmem:[%s645 + $0x1] sm:$0xff]
        %v3446 = vld [vmem:[%s645 + $0x11] sm:$0xff]
        %v3447 = vld [vmem:[%s645 + $0x21] sm:$0xff]
        %v3448 = vld [vmem:[%s645 + $0x31] sm:$0xff]
        %s3449 = scalar_lea.vmem [#allocation9], 128
        %v3450 = vld [vmem:[%s3449] sm:$0xff]
        %v3451 = vld [vmem:[%s3449 + $0x8] sm:$0xff]
        %v3452 = vld [vmem:[%s3449 + $0x10] sm:$0xff]
        %v3453 = vld [vmem:[%s3449 + $0x18] sm:$0xff]
        %v3455 = vsel %vm599, %v3445, 0
        %v3458 = vsel %vm599, %v3446, 0
        %v3461 = vsel %vm599, %v3447, 0
        %v3464 = vsel %vm599, %v3448, 0
        %3466 = vmatprep.subr.mxu0 0.0
        %3467 = vmatpush1.msra.mxu0 0.0
        %3468 = vmatprep.subr.mxu0 0.0
        %3469 = vmatpush1.msra.mxu0 0.0
        %3470 = vmatprep.subr.mxu0 0.0
        %3471 = vmatpush1.msra.mxu0 0.0
        %3472 = vmatprep.subr.mxu0 0.0
        %3473 = vmatpush1.msra.mxu0 0.0
        %3474 = vmatprep.subr.mxu0 0.0
        %3475 = vmatpush1.msra.mxu0 0.0
        %3476 = vmatprep.subr.mxu0 0.0
        %3477 = vmatpush1.msra.mxu0 0.0
        %3478 = vmatprep.subr.mxu0 0.0
        %3479 = vmatpush1.msra.mxu0 0.0
        %3480 = vmatprep.subr.mxu0 0.0
        %3481 = vmatpush1.msra.mxu0 0.0
        %3482 = vmatprep.subr.mxu0 0.0
        %3483 = vmatpush1.msra.mxu0 0.0
        %3484 = vmatprep.subr.mxu0 0.0
        %3485 = vmatpush1.msra.mxu0 0.0
        %3486 = vmatprep.subr.mxu0 0.0
        %3487 = vmatpush1.msra.mxu0 0.0
        %3488 = vmatprep.subr.mxu0 0.0
        %3489 = vmatpush1.msra.mxu0 0.0
        %3490 = vmatprep.subr.mxu0 0.0
        %3491 = vmatpush1.msra.mxu0 %v3453
        %3492 = vmatprep.subr.mxu0 0.0
        %3493 = vmatpush1.msra.mxu0 %v3452
        %3494 = vmatprep.subr.mxu0 0.0
        %3495 = vmatpush1.msra.mxu0 %v3451
        %3496 = vmatprep.subr.mxu0 0.0
        %3497 = vmatpush1.msra.mxu0 %v3450
        %3498 = vmatprep.subr.mxu0 0.0
        %3499 = vmatpush2.msra.mxu0 0.0
        %3500 = vmatprep.subr.mxu0 0.0
        %3501 = vmatpush2.msra.mxu0 0.0
        %3502 = vmatprep.subr.mxu0 0.0
        %3503 = vmatpush2.msra.mxu0 0.0
        %3504 = vmatprep.subr.mxu0 0.0
        %3505 = vmatpush2.msra.mxu0 0.0
        %3506 = vmatprep.subr.mxu0 0.0
        %3507 = vmatpush2.msra.mxu0 0.0
        %3508 = vmatprep.subr.mxu0 0.0
        %3509 = vmatpush2.msra.mxu0 0.0
        %3510 = vmatprep.subr.mxu0 0.0
        %3511 = vmatpush2.msra.mxu0 0.0
        %3512 = vmatprep.subr.mxu0 0.0
        %3513 = vmatpush2.msra.mxu0 0.0
        %3514 = vmatprep.subr.mxu0 0.0
        %3515 = vmatpush2.msra.mxu0 0.0
        %3516 = vmatprep.subr.mxu0 0.0
        %3517 = vmatpush2.msra.mxu0 0.0
        %3518 = vmatprep.subr.mxu0 0.0
        %3519 = vmatpush2.msra.mxu0 0.0
        %3520 = vmatprep.subr.mxu0 0.0
        %3521 = vmatpush2.msra.mxu0 0.0
        %3522 = vmatprep.subr.mxu0 0.0
        %3523 = vmatpush2.msra.mxu0 0.0
        %3524 = vmatprep.subr.mxu0 0.0
        %3525 = vmatpush2.msra.mxu0 0.0
        %3526 = vmatprep.subr.mxu0 0.0
        %3527 = vmatpush2.msra.mxu0 0.0
        %3528 = vmatprep.subr.mxu0 0.0
        %3529 = vmatpush2.msra.mxu0 0.0
        %3530 = vmatprep.mubr.f32.mxu0 0.0
        %3531 = vmatmul.mubr.f32.gmra.mxu0 %v3455
        %v3532 = vpop.f32.mrf.mxu0
        %v3533 = vadd.f32 0.0, %v3532
        %v3534 = vpop.f32.mrf.mxu0
        %3535 = vmatprep.mubr.f32.mxu0 0.0
        %3536 = vmatmul.mubr.f32.gmra.mxu0 %v3458
        %v3537 = vpop.f32.mrf.mxu0
        %v3538 = vadd.f32 0.0, %v3537
        %v3539 = vpop.f32.mrf.mxu0
        %3540 = vmatprep.mubr.f32.mxu0 0.0
        %3541 = vmatmul.mubr.f32.gmra.mxu0 %v3461
        %v3542 = vpop.f32.mrf.mxu0
        %v3543 = vadd.f32 0.0, %v3542
        %v3544 = vpop.f32.mrf.mxu0
        %3545 = vmatprep.mubr.f32.mxu0 0.0
        %3546 = vmatmul.mubr.f32.gmra.mxu0 %v3464
        %v3547 = vpop.f32.mrf.mxu0
        %v3548 = vadd.f32 0.0, %v3547
        %v3549 = vpop.f32.mrf.mxu0
        %3550 = vdwg.mxu0
        %v3551 = vadd.f32 %v3441, %v3533
        %v3552 = vadd.f32 %v3442, %v3538
        %v3553 = vadd.f32 %v3443, %v3543
        %v3554 = vadd.f32 %v3444, %v3548
        %v3555 = vld [vmem:[%s645 + $0x2] sm:$0xff]
        %v3556 = vld [vmem:[%s645 + $0x12] sm:$0xff]
        %v3557 = vld [vmem:[%s645 + $0x22] sm:$0xff]
        %v3558 = vld [vmem:[%s645 + $0x32] sm:$0xff]
        %s3559 = scalar_lea.vmem [#allocation9], 160
        %v3560 = vld [vmem:[%s3559] sm:$0xff]
        %v3561 = vld [vmem:[%s3559 + $0x8] sm:$0xff]
        %v3562 = vld [vmem:[%s3559 + $0x10] sm:$0xff]
        %v3563 = vld [vmem:[%s3559 + $0x18] sm:$0xff]
        %v3565 = vsel %vm599, %v3555, 0
        %v3568 = vsel %vm599, %v3556, 0
        %v3571 = vsel %vm599, %v3557, 0
        %v3574 = vsel %vm599, %v3558, 0
        %3576 = vmatprep.subr.mxu0 0.0
        %3577 = vmatpush1.msra.mxu0 0.0
        %3578 = vmatprep.subr.mxu0 0.0
        %3579 = vmatpush1.msra.mxu0 0.0
        %3580 = vmatprep.subr.mxu0 0.0
        %3581 = vmatpush1.msra.mxu0 0.0
        %3582 = vmatprep.subr.mxu0 0.0
        %3583 = vmatpush1.msra.mxu0 0.0
        %3584 = vmatprep.subr.mxu0 0.0
        %3585 = vmatpush1.msra.mxu0 0.0
        %3586 = vmatprep.subr.mxu0 0.0
        %3587 = vmatpush1.msra.mxu0 0.0
        %3588 = vmatprep.subr.mxu0 0.0
        %3589 = vmatpush1.msra.mxu0 0.0
        %3590 = vmatprep.subr.mxu0 0.0
        %3591 = vmatpush1.msra.mxu0 0.0
        %3592 = vmatprep.subr.mxu0 0.0
        %3593 = vmatpush1.msra.mxu0 0.0
        %3594 = vmatprep.subr.mxu0 0.0
        %3595 = vmatpush1.msra.mxu0 0.0
        %3596 = vmatprep.subr.mxu0 0.0
        %3597 = vmatpush1.msra.mxu0 0.0
        %3598 = vmatprep.subr.mxu0 0.0
        %3599 = vmatpush1.msra.mxu0 0.0
        %3600 = vmatprep.subr.mxu0 0.0
        %3601 = vmatpush1.msra.mxu0 %v3563
        %3602 = vmatprep.subr.mxu0 0.0
        %3603 = vmatpush1.msra.mxu0 %v3562
        %3604 = vmatprep.subr.mxu0 0.0
        %3605 = vmatpush1.msra.mxu0 %v3561
        %3606 = vmatprep.subr.mxu0 0.0
        %3607 = vmatpush1.msra.mxu0 %v3560
        %3608 = vmatprep.subr.mxu0 0.0
        %3609 = vmatpush2.msra.mxu0 0.0
        %3610 = vmatprep.subr.mxu0 0.0
        %3611 = vmatpush2.msra.mxu0 0.0
        %3612 = vmatprep.subr.mxu0 0.0
        %3613 = vmatpush2.msra.mxu0 0.0
        %3614 = vmatprep.subr.mxu0 0.0
        %3615 = vmatpush2.msra.mxu0 0.0
        %3616 = vmatprep.subr.mxu0 0.0
        %3617 = vmatpush2.msra.mxu0 0.0
        %3618 = vmatprep.subr.mxu0 0.0
        %3619 = vmatpush2.msra.mxu0 0.0
        %3620 = vmatprep.subr.mxu0 0.0
        %3621 = vmatpush2.msra.mxu0 0.0
        %3622 = vmatprep.subr.mxu0 0.0
        %3623 = vmatpush2.msra.mxu0 0.0
        %3624 = vmatprep.subr.mxu0 0.0
        %3625 = vmatpush2.msra.mxu0 0.0
        %3626 = vmatprep.subr.mxu0 0.0
        %3627 = vmatpush2.msra.mxu0 0.0
        %3628 = vmatprep.subr.mxu0 0.0
        %3629 = vmatpush2.msra.mxu0 0.0
        %3630 = vmatprep.subr.mxu0 0.0
        %3631 = vmatpush2.msra.mxu0 0.0
        %3632 = vmatprep.subr.mxu0 0.0
        %3633 = vmatpush2.msra.mxu0 0.0
        %3634 = vmatprep.subr.mxu0 0.0
        %3635 = vmatpush2.msra.mxu0 0.0
        %3636 = vmatprep.subr.mxu0 0.0
        %3637 = vmatpush2.msra.mxu0 0.0
        %3638 = vmatprep.subr.mxu0 0.0
        %3639 = vmatpush2.msra.mxu0 0.0
        %3640 = vmatprep.mubr.f32.mxu0 0.0
        %3641 = vmatmul.mubr.f32.gmra.mxu0 %v3565
        %v3642 = vpop.f32.mrf.mxu0
        %v3643 = vadd.f32 0.0, %v3642
        %v3644 = vpop.f32.mrf.mxu0
        %3645 = vmatprep.mubr.f32.mxu0 0.0
        %3646 = vmatmul.mubr.f32.gmra.mxu0 %v3568
        %v3647 = vpop.f32.mrf.mxu0
        %v3648 = vadd.f32 0.0, %v3647
        %v3649 = vpop.f32.mrf.mxu0
        %3650 = vmatprep.mubr.f32.mxu0 0.0
        %3651 = vmatmul.mubr.f32.gmra.mxu0 %v3571
        %v3652 = vpop.f32.mrf.mxu0
        %v3653 = vadd.f32 0.0, %v3652
        %v3654 = vpop.f32.mrf.mxu0
        %3655 = vmatprep.mubr.f32.mxu0 0.0
        %3656 = vmatmul.mubr.f32.gmra.mxu0 %v3574
        %v3657 = vpop.f32.mrf.mxu0
        %v3658 = vadd.f32 0.0, %v3657
        %v3659 = vpop.f32.mrf.mxu0
        %3660 = vdwg.mxu0
        %v3661 = vadd.f32 %v3551, %v3643
        %v3662 = vadd.f32 %v3552, %v3648
        %v3663 = vadd.f32 %v3553, %v3653
        %v3664 = vadd.f32 %v3554, %v3658
        %v3665 = vld [vmem:[#allocation15] sm:$0xf]
        %v3666 = vlaneseq
        %v3667 = vshrl.u32 %v3666, 7
        %v3668 = vsub.s32 0, %v3667
        %v3669 = vrot.slane %v3665, %v3668
        %v3670 = vadd.f32 %v3661, %v3669
        %v3671 = vadd.f32 %v3662, %v3669
        %v3672 = vadd.f32 %v3663, %v3669
        %v3673 = vadd.f32 %v3664, %v3669
        %v3674 = vsel %vm675, %v3670, 0.0
        %v3675 = vsel %vm675, %v3671, 0.0
        %v3676 = vadd.f32 %v3674, %v3675
        %v3677 = vsel %vm675, %v3672, 0.0
        %v3678 = vadd.f32 %v3676, %v3677
        %v3679 = vsel %vm675, %v3673, 0.0
        %v3680 = vadd.f32 %v3678, %v3679
        %v3681 = vrot.slane %v3680, 4
        %v3682 = vadd.f32 %v3680, %v3681
        %v3683 = vrot.slane %v3682, 2
        %v3684 = vadd.f32 %v3682, %v3683
        %v3685 = vrot.slane %v3684, 1
        %v3686 = vadd.f32 %v3684, %v3685
        %v3687 = vmul.f32 %v3686, %v1356
        %v3688 = vsub.f32 %v3670, %v3687
        %v3689 = vsub.f32 %v3671, %v3687
        %v3690 = vsub.f32 %v3672, %v3687
        %v3691 = vsub.f32 %v3673, %v3687
        %v3692 = vmul.f32 %v3688, %v3688
        %v3693 = vmul.f32 %v3689, %v3689
        %v3694 = vmul.f32 %v3690, %v3690
        %v3695 = vmul.f32 %v3691, %v3691
        %v3696 = vsel %vm675, %v3692, 0.0
        %v3697 = vsel %vm675, %v3693, 0.0
        %v3698 = vadd.f32 %v3696, %v3697
        %v3699 = vsel %vm675, %v3694, 0.0
        %v3700 = vadd.f32 %v3698, %v3699
        %v3701 = vsel %vm675, %v3695, 0.0
        %v3702 = vadd.f32 %v3700, %v3701
        %v3703 = vrot.slane %v3702, 4
        %v3704 = vadd.f32 %v3702, %v3703
        %v3705 = vrot.slane %v3704, 2
        %v3706 = vadd.f32 %v3704, %v3705
        %v3707 = vrot.slane %v3706, 1
        %v3708 = vadd.f32 %v3706, %v3707
        %v3709 = vmul.f32 %v3708, %v1356
        %v3710 = vadd.f32 %v3709, 1e-05
        %v3711 = vrsqrt.pop %v3710
        %v3712 = vmul.f32 %v3688, %v3711
        %v3713 = vmul.f32 %v3689, %v3711
        %v3714 = vmul.f32 %v3690, %v3711
        %v3715 = vmul.f32 %v3691, %v3711
        %v3716 = vlaneseq
        %v3717 = vshrl.u32 %v3716, 7
        %v3718 = vsub.s32 1, %v3717
        %v3719 = vrot.slane %v3665, %v3718
        %v3720 = vmul.f32 %v3712, %v3719
        %v3721 = vmul.f32 %v3713, %v3719
        %v3722 = vmul.f32 %v3714, %v3719
        %v3723 = vmul.f32 %v3715, %v3719
        %v3724 = vlaneseq
        %v3725 = vshrl.u32 %v3724, 7
        %v3726 = vsub.s32 2, %v3725
        %v3727 = vrot.slane %v3665, %v3726
        %v3728 = vadd.f32 %v3720, %v3727
        %v3729 = vadd.f32 %v3721, %v3727
        %v3730 = vadd.f32 %v3722, %v3727
        %v3731 = vadd.f32 %v3723, %v3727
        %vm3732 = vcmp.gt.f32.partialorder %v3728, 0.0
        %vm3733 = vcmp.gt.f32.partialorder %v3729, 0.0
        %vm3734 = vcmp.gt.f32.partialorder %v3730, 0.0
        %vm3735 = vcmp.gt.f32.partialorder %v3731, 0.0
        %v3736 = vlaneseq
        %v3737 = vshrl.u32 %v3736, 7
        %v3738 = vsub.s32 3, %v3737
        %v3739 = vrot.slane %v3665, %v3738
        %v3740 = vmul.f32 %v3739, %v3728
        %v3741 = vmul.f32 %v3739, %v3729
        %v3742 = vmul.f32 %v3739, %v3730
        %v3743 = vmul.f32 %v3739, %v3731
        %v3744 = vsel %vm3732, %v3728, %v3740
        %v3745 = vsel %vm3733, %v3729, %v3741
        %v3746 = vsel %vm3734, %v3730, %v3742
        %v3747 = vsel %vm3735, %v3731, %v3743
        %3748 = vst.msk [vmem:[%s645 + $0x1] sm:$0xff] %vm675, %v3744
        %3749 = vst.msk [vmem:[%s645 + $0x11] sm:$0xff] %vm675, %v3745
        %3750 = vst.msk [vmem:[%s645 + $0x21] sm:$0xff] %vm675, %v3746
        %3751 = vst.msk [vmem:[%s645 + $0x31] sm:$0xff] %vm675, %v3747
        %v3752 = vld [vmem:[%s645] sm:$0xff]
        %v3753 = vld [vmem:[%s645 + $0x10] sm:$0xff]
        %v3754 = vld [vmem:[%s645 + $0x20] sm:$0xff]
        %v3755 = vld [vmem:[%s645 + $0x30] sm:$0xff]
        %v3756 = vld [vmem:[%s9] sm:$0xff]
        %v3757 = vld [vmem:[%s645 + $0x1] sm:$0xff]
        %v3758 = vld [vmem:[%s645 + $0x11] sm:$0xff]
        %v3759 = vld [vmem:[%s645 + $0x21] sm:$0xff]
        %v3760 = vld [vmem:[%s645 + $0x31] sm:$0xff]
        %s3761 = scalar_lea.vmem %s9, 8
        %v3762 = vld [vmem:[%s3761] sm:$0xff]
        %v3764 = vsel %vm675, %v3757, 0
        %v3767 = vsel %vm675, %v3758, 0
        %v3770 = vsel %vm675, %v3759, 0
        %v3773 = vsel %vm675, %v3760, 0
        %3775 = vmatprep.subr.mxu0 0.0
        %3776 = vmatpush1.msra.mxu0 0.0
        %3777 = vmatprep.subr.mxu0 0.0
        %3778 = vmatpush1.msra.mxu0 0.0
        %3779 = vmatprep.subr.mxu0 0.0
        %3780 = vmatpush1.msra.mxu0 0.0
        %3781 = vmatprep.subr.mxu0 0.0
        %3782 = vmatpush1.msra.mxu0 0.0
        %3783 = vmatprep.subr.mxu0 0.0
        %3784 = vmatpush1.msra.mxu0 0.0
        %3785 = vmatprep.subr.mxu0 0.0
        %3786 = vmatpush1.msra.mxu0 0.0
        %3787 = vmatprep.subr.mxu0 0.0
        %3788 = vmatpush1.msra.mxu0 0.0
        %3789 = vmatprep.subr.mxu0 0.0
        %3790 = vmatpush1.msra.mxu0 0.0
        %3791 = vmatprep.subr.mxu0 0.0
        %3792 = vmatpush1.msra.mxu0 0.0
        %3793 = vmatprep.subr.mxu0 0.0
        %3794 = vmatpush1.msra.mxu0 0.0
        %3795 = vmatprep.subr.mxu0 0.0
        %3796 = vmatpush1.msra.mxu0 0.0
        %3797 = vmatprep.subr.mxu0 0.0
        %3798 = vmatpush1.msra.mxu0 0.0
        %3799 = vmatprep.subr.mxu0 0.0
        %3800 = vmatpush1.msra.mxu0 0.0
        %3801 = vmatprep.subr.mxu0 0.0
        %3802 = vmatpush1.msra.mxu0 0.0
        %3803 = vmatprep.subr.mxu0 0.0
        %3804 = vmatpush1.msra.mxu0 0.0
        %3805 = vmatprep.subr.mxu0 0.0
        %3806 = vmatpush1.msra.mxu0 %v3762
        %3807 = vmatprep.subr.mxu0 0.0
        %3808 = vmatpush2.msra.mxu0 0.0
        %3809 = vmatprep.subr.mxu0 0.0
        %3810 = vmatpush2.msra.mxu0 0.0
        %3811 = vmatprep.subr.mxu0 0.0
        %3812 = vmatpush2.msra.mxu0 0.0
        %3813 = vmatprep.subr.mxu0 0.0
        %3814 = vmatpush2.msra.mxu0 0.0
        %3815 = vmatprep.subr.mxu0 0.0
        %3816 = vmatpush2.msra.mxu0 0.0
        %3817 = vmatprep.subr.mxu0 0.0
        %3818 = vmatpush2.msra.mxu0 0.0
        %3819 = vmatprep.subr.mxu0 0.0
        %3820 = vmatpush2.msra.mxu0 0.0
        %3821 = vmatprep.subr.mxu0 0.0
        %3822 = vmatpush2.msra.mxu0 0.0
        %3823 = vmatprep.subr.mxu0 0.0
        %3824 = vmatpush2.msra.mxu0 0.0
        %3825 = vmatprep.subr.mxu0 0.0
        %3826 = vmatpush2.msra.mxu0 0.0
        %3827 = vmatprep.subr.mxu0 0.0
        %3828 = vmatpush2.msra.mxu0 0.0
        %3829 = vmatprep.subr.mxu0 0.0
        %3830 = vmatpush2.msra.mxu0 0.0
        %3831 = vmatprep.subr.mxu0 0.0
        %3832 = vmatpush2.msra.mxu0 0.0
        %3833 = vmatprep.subr.mxu0 0.0
        %3834 = vmatpush2.msra.mxu0 0.0
        %3835 = vmatprep.subr.mxu0 0.0
        %3836 = vmatpush2.msra.mxu0 0.0
        %3837 = vmatprep.subr.mxu0 0.0
        %3838 = vmatpush2.msra.mxu0 0.0
        %3839 = vmatprep.mubr.f32.mxu0 0.0
        %3840 = vmatmul.mubr.f32.gmra.mxu0 %v3764
        %v3841 = vpop.f32.mrf.mxu0
        %v3842 = vadd.f32 0.0, %v3841
        %v3843 = vpop.f32.mrf.mxu0
        %3844 = vmatprep.mubr.f32.mxu0 0.0
        %3845 = vmatmul.mubr.f32.gmra.mxu0 %v3767
        %v3846 = vpop.f32.mrf.mxu0
        %v3847 = vadd.f32 0.0, %v3846
        %v3848 = vpop.f32.mrf.mxu0
        %3849 = vmatprep.mubr.f32.mxu0 0.0
        %3850 = vmatmul.mubr.f32.gmra.mxu0 %v3770
        %v3851 = vpop.f32.mrf.mxu0
        %v3852 = vadd.f32 0.0, %v3851
        %v3853 = vpop.f32.mrf.mxu0
        %3854 = vmatprep.mubr.f32.mxu0 0.0
        %3855 = vmatmul.mubr.f32.gmra.mxu0 %v3773
        %v3856 = vpop.f32.mrf.mxu0
        %v3857 = vadd.f32 0.0, %v3856
        %v3858 = vpop.f32.mrf.mxu0
        %3859 = vdwg.mxu0
        %v3861 = vsel %vm675, %v3752, 0
        %v3864 = vsel %vm675, %v3753, 0
        %v3867 = vsel %vm675, %v3754, 0
        %v3870 = vsel %vm675, %v3755, 0
        %3872 = vmatprep.subr.mxu0 0.0
        %3873 = vmatpush1.msra.mxu0 0.0
        %3874 = vmatprep.subr.mxu0 0.0
        %3875 = vmatpush1.msra.mxu0 0.0
        %3876 = vmatprep.subr.mxu0 0.0
        %3877 = vmatpush1.msra.mxu0 0.0
        %3878 = vmatprep.subr.mxu0 0.0
        %3879 = vmatpush1.msra.mxu0 0.0
        %3880 = vmatprep.subr.mxu0 0.0
        %3881 = vmatpush1.msra.mxu0 0.0
        %3882 = vmatprep.subr.mxu0 0.0
        %3883 = vmatpush1.msra.mxu0 0.0
        %3884 = vmatprep.subr.mxu0 0.0
        %3885 = vmatpush1.msra.mxu0 0.0
        %3886 = vmatprep.subr.mxu0 0.0
        %3887 = vmatpush1.msra.mxu0 0.0
        %3888 = vmatprep.subr.mxu0 0.0
        %3889 = vmatpush1.msra.mxu0 0.0
        %3890 = vmatprep.subr.mxu0 0.0
        %3891 = vmatpush1.msra.mxu0 0.0
        %3892 = vmatprep.subr.mxu0 0.0
        %3893 = vmatpush1.msra.mxu0 0.0
        %3894 = vmatprep.subr.mxu0 0.0
        %3895 = vmatpush1.msra.mxu0 0.0
        %3896 = vmatprep.subr.mxu0 0.0
        %3897 = vmatpush1.msra.mxu0 0.0
        %3898 = vmatprep.subr.mxu0 0.0
        %3899 = vmatpush1.msra.mxu0 0.0
        %3900 = vmatprep.subr.mxu0 0.0
        %3901 = vmatpush1.msra.mxu0 0.0
        %3902 = vmatprep.subr.mxu0 0.0
        %3903 = vmatpush1.msra.mxu0 %v3756
        %3904 = vmatprep.subr.mxu0 0.0
        %3905 = vmatpush2.msra.mxu0 0.0
        %3906 = vmatprep.subr.mxu0 0.0
        %3907 = vmatpush2.msra.mxu0 0.0
        %3908 = vmatprep.subr.mxu0 0.0
        %3909 = vmatpush2.msra.mxu0 0.0
        %3910 = vmatprep.subr.mxu0 0.0
        %3911 = vmatpush2.msra.mxu0 0.0
        %3912 = vmatprep.subr.mxu0 0.0
        %3913 = vmatpush2.msra.mxu0 0.0
        %3914 = vmatprep.subr.mxu0 0.0
        %3915 = vmatpush2.msra.mxu0 0.0
        %3916 = vmatprep.subr.mxu0 0.0
        %3917 = vmatpush2.msra.mxu0 0.0
        %3918 = vmatprep.subr.mxu0 0.0
        %3919 = vmatpush2.msra.mxu0 0.0
        %3920 = vmatprep.subr.mxu0 0.0
        %3921 = vmatpush2.msra.mxu0 0.0
        %3922 = vmatprep.subr.mxu0 0.0
        %3923 = vmatpush2.msra.mxu0 0.0
        %3924 = vmatprep.subr.mxu0 0.0
        %3925 = vmatpush2.msra.mxu0 0.0
        %3926 = vmatprep.subr.mxu0 0.0
        %3927 = vmatpush2.msra.mxu0 0.0
        %3928 = vmatprep.subr.mxu0 0.0
        %3929 = vmatpush2.msra.mxu0 0.0
        %3930 = vmatprep.subr.mxu0 0.0
        %3931 = vmatpush2.msra.mxu0 0.0
        %3932 = vmatprep.subr.mxu0 0.0
        %3933 = vmatpush2.msra.mxu0 0.0
        %3934 = vmatprep.subr.mxu0 0.0
        %3935 = vmatpush2.msra.mxu0 0.0
        %3936 = vmatprep.mubr.f32.mxu0 0.0
        %3937 = vmatmul.mubr.f32.gmra.mxu0 %v3861
        %v3938 = vpop.f32.mrf.mxu0
        %v3939 = vadd.f32 %v3842, %v3938
        %v3940 = vpop.f32.mrf.mxu0
        %3941 = vmatprep.mubr.f32.mxu0 0.0
        %3942 = vmatmul.mubr.f32.gmra.mxu0 %v3864
        %v3943 = vpop.f32.mrf.mxu0
        %v3944 = vadd.f32 %v3847, %v3943
        %v3945 = vpop.f32.mrf.mxu0
        %3946 = vmatprep.mubr.f32.mxu0 0.0
        %3947 = vmatmul.mubr.f32.gmra.mxu0 %v3867
        %v3948 = vpop.f32.mrf.mxu0
        %v3949 = vadd.f32 %v3852, %v3948
        %v3950 = vpop.f32.mrf.mxu0
        %3951 = vmatprep.mubr.f32.mxu0 0.0
        %3952 = vmatmul.mubr.f32.gmra.mxu0 %v3870
        %v3953 = vpop.f32.mrf.mxu0
        %v3954 = vadd.f32 %v3857, %v3953
        %v3955 = vpop.f32.mrf.mxu0
        %3956 = vdwg.mxu0
        %v3957 = vld [vmem:[%s645 + $0x2] sm:$0xff]
        %v3958 = vld [vmem:[%s645 + $0x12] sm:$0xff]
        %v3959 = vld [vmem:[%s645 + $0x22] sm:$0xff]
        %v3960 = vld [vmem:[%s645 + $0x32] sm:$0xff]
        %s3961 = scalar_lea.vmem %s9, 16
        %v3962 = vld [vmem:[%s3961] sm:$0xff]
        %v3964 = vsel %vm675, %v3957, 0
        %v3967 = vsel %vm675, %v3958, 0
        %v3970 = vsel %vm675, %v3959, 0
        %v3973 = vsel %vm675, %v3960, 0
        %3975 = vmatprep.subr.mxu0 0.0
        %3976 = vmatpush1.msra.mxu0 0.0
        %3977 = vmatprep.subr.mxu0 0.0
        %3978 = vmatpush1.msra.mxu0 0.0
        %3979 = vmatprep.subr.mxu0 0.0
        %3980 = vmatpush1.msra.mxu0 0.0
        %3981 = vmatprep.subr.mxu0 0.0
        %3982 = vmatpush1.msra.mxu0 0.0
        %3983 = vmatprep.subr.mxu0 0.0
        %3984 = vmatpush1.msra.mxu0 0.0
        %3985 = vmatprep.subr.mxu0 0.0
        %3986 = vmatpush1.msra.mxu0 0.0
        %3987 = vmatprep.subr.mxu0 0.0
        %3988 = vmatpush1.msra.mxu0 0.0
        %3989 = vmatprep.subr.mxu0 0.0
        %3990 = vmatpush1.msra.mxu0 0.0
        %3991 = vmatprep.subr.mxu0 0.0
        %3992 = vmatpush1.msra.mxu0 0.0
        %3993 = vmatprep.subr.mxu0 0.0
        %3994 = vmatpush1.msra.mxu0 0.0
        %3995 = vmatprep.subr.mxu0 0.0
        %3996 = vmatpush1.msra.mxu0 0.0
        %3997 = vmatprep.subr.mxu0 0.0
        %3998 = vmatpush1.msra.mxu0 0.0
        %3999 = vmatprep.subr.mxu0 0.0
        %4000 = vmatpush1.msra.mxu0 0.0
        %4001 = vmatprep.subr.mxu0 0.0
        %4002 = vmatpush1.msra.mxu0 0.0
        %4003 = vmatprep.subr.mxu0 0.0
        %4004 = vmatpush1.msra.mxu0 0.0
        %4005 = vmatprep.subr.mxu0 0.0
        %4006 = vmatpush1.msra.mxu0 %v3962
        %4007 = vmatprep.subr.mxu0 0.0
        %4008 = vmatpush2.msra.mxu0 0.0
        %4009 = vmatprep.subr.mxu0 0.0
        %4010 = vmatpush2.msra.mxu0 0.0
        %4011 = vmatprep.subr.mxu0 0.0
        %4012 = vmatpush2.msra.mxu0 0.0
        %4013 = vmatprep.subr.mxu0 0.0
        %4014 = vmatpush2.msra.mxu0 0.0
        %4015 = vmatprep.subr.mxu0 0.0
        %4016 = vmatpush2.msra.mxu0 0.0
        %4017 = vmatprep.subr.mxu0 0.0
        %4018 = vmatpush2.msra.mxu0 0.0
        %4019 = vmatprep.subr.mxu0 0.0
        %4020 = vmatpush2.msra.mxu0 0.0
        %4021 = vmatprep.subr.mxu0 0.0
        %4022 = vmatpush2.msra.mxu0 0.0
        %4023 = vmatprep.subr.mxu0 0.0
        %4024 = vmatpush2.msra.mxu0 0.0
        %4025 = vmatprep.subr.mxu0 0.0
        %4026 = vmatpush2.msra.mxu0 0.0
        %4027 = vmatprep.subr.mxu0 0.0
        %4028 = vmatpush2.msra.mxu0 0.0
        %4029 = vmatprep.subr.mxu0 0.0
        %4030 = vmatpush2.msra.mxu0 0.0
        %4031 = vmatprep.subr.mxu0 0.0
        %4032 = vmatpush2.msra.mxu0 0.0
        %4033 = vmatprep.subr.mxu0 0.0
        %4034 = vmatpush2.msra.mxu0 0.0
        %4035 = vmatprep.subr.mxu0 0.0
        %4036 = vmatpush2.msra.mxu0 0.0
        %4037 = vmatprep.subr.mxu0 0.0
        %4038 = vmatpush2.msra.mxu0 0.0
        %4039 = vmatprep.mubr.f32.mxu0 0.0
        %4040 = vmatmul.mubr.f32.gmra.mxu0 %v3964
        %v4041 = vpop.f32.mrf.mxu0
        %v4042 = vadd.f32 0.0, %v4041
        %v4043 = vpop.f32.mrf.mxu0
        %4044 = vmatprep.mubr.f32.mxu0 0.0
        %4045 = vmatmul.mubr.f32.gmra.mxu0 %v3967
        %v4046 = vpop.f32.mrf.mxu0
        %v4047 = vadd.f32 0.0, %v4046
        %v4048 = vpop.f32.mrf.mxu0
        %4049 = vmatprep.mubr.f32.mxu0 0.0
        %4050 = vmatmul.mubr.f32.gmra.mxu0 %v3970
        %v4051 = vpop.f32.mrf.mxu0
        %v4052 = vadd.f32 0.0, %v4051
        %v4053 = vpop.f32.mrf.mxu0
        %4054 = vmatprep.mubr.f32.mxu0 0.0
        %4055 = vmatmul.mubr.f32.gmra.mxu0 %v3973
        %v4056 = vpop.f32.mrf.mxu0
        %v4057 = vadd.f32 0.0, %v4056
        %v4058 = vpop.f32.mrf.mxu0
        %4059 = vdwg.mxu0
        %v4060 = vadd.f32 %v3939, %v4042
        %v4061 = vadd.f32 %v3944, %v4047
        %v4062 = vadd.f32 %v3949, %v4052
        %v4063 = vadd.f32 %v3954, %v4057
        %v4064 = vld [vmem:[%s10] sm:$0x1]
        %v4066 = vlaneseq
        %v4067 = vshrl.u32 %v4066, 7
        %v4068 = vsub.s32 0, %v4067
        %v4069 = vrot.slane %v4064, %v4068
        %v4071 = vadd.f32 %v4060, %v4069
        %v4072 = vadd.f32 %v4061, %v4069
        %v4073 = vadd.f32 %v4062, %v4069
        %v4074 = vadd.f32 %v4063, %v4069
        %v4075 = vld [vmem:[%s11] sm:$0xff]
        %v4076 = vld [vmem:[%s11 + $0x8] sm:$0xff]
        %4079 = vset.pattern.permute.xlu0 0
        %4080 = vperm.xlu0 %4079, %v4075
        %v4081 = vpop.permute.xlu0 %4080
        %4082 = vset.pattern.permute.xlu0 0
        %4083 = vperm.xlu0 %4082, %v4076
        %v4084 = vpop.permute.xlu0 %4083
        %v4085 = vlaneseq
        %v4086 = vand.u32 %v4085, 127
        %v4087 = vlaneseq
        %v4088 = vshrl.u32 %v4087, 7
        %v4089 = vsub.s32 %v4086, %v4088
        %v4090 = vrot.slane %v4081, %v4089
        %v4091 = vadd.s32 %v4086, 4294967288
        %v4092 = vlaneseq
        %v4093 = vshrl.u32 %v4092, 7
        %v4094 = vsub.s32 %v4091, %v4093
        %v4095 = vrot.slane %v4084, %v4094
        %v4096 = vsel %vm2227, %v4095, %v4090
        %vm4097 = vcmask 1041409
        %vm4098 = vcmask 1042434
        %v4099 = vsel %vm4098, %v4096, %v4096
        %vm4100 = vcmask 1043459
        %v4101 = vsel %vm4100, %v4096, %v4099
        %vm4102 = vcmask 1044484
        %v4103 = vsel %vm4102, %v4096, %v4101
        %vm4104 = vcmask 1045509
        %v4105 = vsel %vm4104, %v4096, %v4103
        %vm4106 = vcmask 1046534
        %v4107 = vsel %vm4106, %v4096, %v4105
        %vm4108 = vcmask 1047559
        %v4109 = vsel %vm4108, %v4096, %v4107
        %v4111 = vmul.f32 %v4071, %v4109
        %v4112 = vmul.f32 %v4072, %v4109
        %v4113 = vmul.f32 %v4073, %v4109
        %v4114 = vmul.f32 %v4074, %v4109
        %v4115 = vsel %vm1465, %v4111, 0.0
        %4116 = vadd.xlane.f32.xlu0 %v4115
        %v4117 = vpop.xlane.xlu0 %4116
        %v4118 = vsel %vm1465, %v4112, 0.0
        %4119 = vadd.xlane.f32.xlu0 %v4118
        %v4120 = vpop.xlane.xlu0 %4119
        %v4121 = vsel %vm1465, %v4113, 0.0
        %4122 = vadd.xlane.f32.xlu0 %v4121
        %v4123 = vpop.xlane.xlu0 %4122
        %v4124 = vsel %vm1465, %v4114, 0.0
        %4125 = vadd.xlane.f32.xlu0 %v4124
        %v4126 = vpop.xlane.xlu0 %4125
        %v4131 = vrot.slane %v4071, 7
        %v4132 = vrot.slane %v4072, 7
        %v4133 = vrot.slane %v4073, 7
        %v4134 = vrot.slane %v4074, 7
        %v4139 = vsel %vm675, %v4071, %v4131
        %v4140 = vsel %vm675, %v4072, %v4132
        %v4141 = vsel %vm675, %v4073, %v4133
        %v4142 = vsel %vm675, %v4074, %v4134
        %4143 = vset.pattern.permute.xlu0 1
        %4144 = vperm.xlu0 %4143, %v4075
        %v4145 = vpop.permute.xlu0 %4144
        %4146 = vset.pattern.permute.xlu0 1
        %4147 = vperm.xlu0 %4146, %v4076
        %v4148 = vpop.permute.xlu0 %4147
        %v4149 = vlaneseq
        %v4150 = vshrl.u32 %v4149, 7
        %v4151 = vsub.s32 %v4086, %v4150
        %v4152 = vrot.slane %v4145, %v4151
        %v4153 = vlaneseq
        %v4154 = vshrl.u32 %v4153, 7
        %v4155 = vsub.s32 %v4091, %v4154
        %v4156 = vrot.slane %v4148, %v4155
        %v4157 = vsel %vm2227, %v4156, %v4152
        %v4158 = vsel %vm4100, %v4157, %v4157
        %v4159 = vsel %vm4102, %v4157, %v4158
        %v4160 = vsel %vm4104, %v4157, %v4159
        %v4161 = vsel %vm4106, %v4157, %v4160
        %v4162 = vsel %vm4108, %v4157, %v4161
        %v4164 = vmul.f32 %v4139, %v4162
        %v4165 = vmul.f32 %v4140, %v4162
        %v4166 = vmul.f32 %v4141, %v4162
        %v4167 = vmul.f32 %v4142, %v4162
        %vm4168 = vcmask 130049
        %v4169 = vsel %vm4168, %v4164, 0.0
        %4170 = vadd.xlane.f32.xlu0 %v4169
        %v4171 = vpop.xlane.xlu0 %4170
        %v4172 = vsel %vm4168, %v4165, 0.0
        %4173 = vadd.xlane.f32.xlu0 %v4172
        %v4174 = vpop.xlane.xlu0 %4173
        %v4175 = vsel %vm4168, %v4166, 0.0
        %4176 = vadd.xlane.f32.xlu0 %v4175
        %v4177 = vpop.xlane.xlu0 %4176
        %v4178 = vsel %vm4168, %v4167, 0.0
        %4179 = vadd.xlane.f32.xlu0 %v4178
        %v4180 = vpop.xlane.xlu0 %4179
        %v4185 = vadd.s32 %v4086, 1
        %v4186 = vlaneseq
        %v4187 = vshrl.u32 %v4186, 7
        %v4188 = vsub.s32 %v4185, %v4187
        %v4189 = vrot.slane %v4171, %v4188
        %v4190 = vlaneseq
        %v4191 = vshrl.u32 %v4190, 7
        %v4192 = vsub.s32 %v4185, %v4191
        %v4193 = vrot.slane %v4174, %v4192
        %v4194 = vlaneseq
        %v4195 = vshrl.u32 %v4194, 7
        %v4196 = vsub.s32 %v4185, %v4195
        %v4197 = vrot.slane %v4177, %v4196
        %v4198 = vlaneseq
        %v4199 = vshrl.u32 %v4198, 7
        %v4200 = vsub.s32 %v4185, %v4199
        %v4201 = vrot.slane %v4180, %v4200
        %v4202 = vsel %vm4098, %v4193, %v4189
        %v4203 = vsel %vm4100, %v4197, %v4202
        %v4204 = vsel %vm4102, %v4201, %v4203
        %vm4206 = vcmask 56320
        %v4207 = vsel %vm4206, %v4204, 0.0
        %v4212 = vlaneseq
        %v4213 = vshrl.u32 %v4212, 7
        %v4214 = vsub.s32 %v4086, %v4213
        %v4215 = vrot.slane %v4117, %v4214
        %v4216 = vlaneseq
        %v4217 = vshrl.u32 %v4216, 7
        %v4218 = vsub.s32 %v4086, %v4217
        %v4219 = vrot.slane %v4120, %v4218
        %v4220 = vlaneseq
        %v4221 = vshrl.u32 %v4220, 7
        %v4222 = vsub.s32 %v4086, %v4221
        %v4223 = vrot.slane %v4123, %v4222
        %v4224 = vlaneseq
        %v4225 = vshrl.u32 %v4224, 7
        %v4226 = vsub.s32 %v4086, %v4225
        %v4227 = vrot.slane %v4126, %v4226
        %v4228 = vsel %vm4097, %v4219, %v4215
        %v4229 = vsel %vm4098, %v4223, %v4228
        %v4230 = vsel %vm4100, %v4227, %v4229
        %v4233 = vrot.slane %v4207, 1
        %4234 = vrot.lane.b32.xlu0 %v4233, 8
        %v4235 = vpop.permute.xlu0 %4234
        %v4237 = vsel %vm675, %v4230, %v4235
        %v4238 = vld [vmem:[%s12] sm:$0xff]
        %v4239 = vld [vmem:[%s12 + $0x8] sm:$0xff]
        %s4240 = sld [smem:[#allocation16]]
        %v4241 = vstv %s4240
        %v4243 = vsel %vm1465, %v4237, 0
        %4245 = vmatprep.subr.mxu0 0.0
        %4246 = vmatpush1.msra.mxu0 0.0
        %4247 = vmatprep.subr.mxu0 0.0
        %4248 = vmatpush1.msra.mxu0 0.0
        %4249 = vmatprep.subr.mxu0 0.0
        %4250 = vmatpush1.msra.mxu0 0.0
        %4251 = vmatprep.subr.mxu0 0.0
        %4252 = vmatpush1.msra.mxu0 0.0
        %4253 = vmatprep.subr.mxu0 0.0
        %4254 = vmatpush1.msra.mxu0 0.0
        %4255 = vmatprep.subr.mxu0 0.0
        %4256 = vmatpush1.msra.mxu0 0.0
        %4257 = vmatprep.subr.mxu0 0.0
        %4258 = vmatpush1.msra.mxu0 0.0
        %4259 = vmatprep.subr.mxu0 0.0
        %4260 = vmatpush1.msra.mxu0 0.0
        %4261 = vmatprep.subr.mxu0 0.0
        %4262 = vmatpush1.msra.mxu0 0.0
        %4263 = vmatprep.subr.mxu0 0.0
        %4264 = vmatpush1.msra.mxu0 0.0
        %4265 = vmatprep.subr.mxu0 0.0
        %4266 = vmatpush1.msra.mxu0 0.0
        %4267 = vmatprep.subr.mxu0 0.0
        %4268 = vmatpush1.msra.mxu0 0.0
        %4269 = vmatprep.subr.mxu0 0.0
        %4270 = vmatpush1.msra.mxu0 0.0
        %4271 = vmatprep.subr.mxu0 0.0
        %4272 = vmatpush1.msra.mxu0 0.0
        %4273 = vmatprep.subr.mxu0 0.0
        %4274 = vmatpush1.msra.mxu0 %v4239
        %4275 = vmatprep.subr.mxu0 0.0
        %4276 = vmatpush1.msra.mxu0 %v4238
        %4277 = vmatprep.subr.mxu0 0.0
        %4278 = vmatpush2.msra.mxu0 0.0
        %4279 = vmatprep.subr.mxu0 0.0
        %4280 = vmatpush2.msra.mxu0 0.0
        %4281 = vmatprep.subr.mxu0 0.0
        %4282 = vmatpush2.msra.mxu0 0.0
        %4283 = vmatprep.subr.mxu0 0.0
        %4284 = vmatpush2.msra.mxu0 0.0
        %4285 = vmatprep.subr.mxu0 0.0
        %4286 = vmatpush2.msra.mxu0 0.0
        %4287 = vmatprep.subr.mxu0 0.0
        %4288 = vmatpush2.msra.mxu0 0.0
        %4289 = vmatprep.subr.mxu0 0.0
        %4290 = vmatpush2.msra.mxu0 0.0
        %4291 = vmatprep.subr.mxu0 0.0
        %4292 = vmatpush2.msra.mxu0 0.0
        %4293 = vmatprep.subr.mxu0 0.0
        %4294 = vmatpush2.msra.mxu0 0.0
        %4295 = vmatprep.subr.mxu0 0.0
        %4296 = vmatpush2.msra.mxu0 0.0
        %4297 = vmatprep.subr.mxu0 0.0
        %4298 = vmatpush2.msra.mxu0 0.0
        %4299 = vmatprep.subr.mxu0 0.0
        %4300 = vmatpush2.msra.mxu0 0.0
        %4301 = vmatprep.subr.mxu0 0.0
        %4302 = vmatpush2.msra.mxu0 0.0
        %4303 = vmatprep.subr.mxu0 0.0
        %4304 = vmatpush2.msra.mxu0 0.0
        %4305 = vmatprep.subr.mxu0 0.0
        %4306 = vmatpush2.msra.mxu0 0.0
        %4307 = vmatprep.subr.mxu0 0.0
        %4308 = vmatpush2.msra.mxu0 0.0
        %4309 = vmatprep.mubr.f32.mxu0 0.0
        %4310 = vmatmul.mubr.f32.gmra.mxu0 %v4243
        %v4311 = vpop.f32.mrf.mxu0
        %v4312 = vadd.f32 %v4241, %v4311
        %v4313 = vpop.f32.mrf.mxu0
        %4314 = vdwg.mxu0
        %vm4315 = vcmask 117760
        %v4316 = vsel %vm4315, %v4312, 0.0
        %4317 = vadd.xlane.f32.xlu0 %v4316
        %v4318 = vpop.xlane.xlu0 %4317
        %v4319 = vrot.slane %v4318, 4
        %v4320 = vadd.f32 %v4318, %v4319
        %v4321 = vrot.slane %v4320, 2
        %v4322 = vadd.f32 %v4320, %v4321
        %v4323 = vrot.slane %v4322, 1
        %v4324 = vadd.f32 %v4322, %v4323
        %s4325 = vtos %v4324
        %v4326 = vstv %s4325
        %v4327 = vrcp.pop 60.0
        %v4328 = vmul.f32 %v4326, %v4327
        %v4329 = vsub.f32 %v4312, %v4328
        %v4330 = vmul.f32 %v4329, %v4329
        %v4331 = vsel %vm4315, %v4330, 0.0
        %4332 = vadd.xlane.f32.xlu0 %v4331
        %v4333 = vpop.xlane.xlu0 %4332
        %v4334 = vrot.slane %v4333, 4
        %v4335 = vadd.f32 %v4333, %v4334
        %v4336 = vrot.slane %v4335, 2
        %v4337 = vadd.f32 %v4335, %v4336
        %v4338 = vrot.slane %v4337, 1
        %v4339 = vadd.f32 %v4337, %v4338
        %s4340 = vtos %v4339
        %v4341 = vstv %s4340
        %v4342 = vmul.f32 %v4341, %v4327
        %v4343 = vadd.f32 %v4342, 1e-05
        %v4344 = vrsqrt.pop %v4343
        %v4345 = vmul.f32 %v4329, %v4344
        %s4346 = sld [smem:[#allocation16 + $0x1]]
        %v4347 = vstv %s4346
        %v4348 = vmul.f32 %v4345, %v4347
        %s4349 = sld [smem:[#allocation16 + $0x2]]
        %v4350 = vstv %s4349
        %v4351 = vadd.f32 %v4348, %v4350
        %vm4352 = vcmp.gt.f32.partialorder %v4351, 0.0
        %s4353 = sld [smem:[#allocation16 + $0x3]]
        %v4354 = vstv %s4353
        %v4355 = vmul.f32 %v4354, %v4351
        %v4356 = vsel %vm4352, %v4351, %v4355
        %s4357 = sld [smem:[#allocation16 + $0x4]]
        %v4358 = vstv %s4357
        %v4359 = vmul.f32 %v4356, %v4358
        %s4360 = sld [smem:[#allocation16 + $0x5]]
        %v4361 = vstv %s4360
        %v4362 = vadd.f32 %v4359, %v4361
        %vm4363 = vcmp.gt.f32.partialorder %v4362, 0.0
        %v4364 = vld [vmem:[%s13] sm:$0x1]
        %v4366 = vlaneseq
        %v4367 = vshrl.u32 %v4366, 7
        %v4368 = vsub.s32 0, %v4367
        %v4369 = vrot.slane %v4364, %v4368
        %v4371 = vmul.f32 %v4369, %v4362
        %v4372 = vsel %vm4363, %v4362, %v4371
        %4373 = vst.msk [vmem:[%s593] sm:$0xf] %vm4315, %v4372
        %s4374 = sand.u32 %s362, 1
        %s4375 = scalar_lea.sflag [#allocation5], %s4374
        %s4376 = sand.u32 %s362, 1
        %s4377 = smul.addr %s4376, 4
        %s4378 = scalar_lea.vmem [#allocation17], %s4377
        // Predicated region
        $region113: #{_lambda_.1} parent=79 // pred_check
          %p4379 = pneg %p372
        $region114: #{_lambda_.1} parent=79 // pred_check_branch
          %4381 = sbr.rel (%p4379) target = $region116
        $region115: #{_lambda_.1} parent=79 // pred_region
          %s4383 = ssub.s32 64, 64
          %4384 = vsyncadd %s4375, %s4383
          %s4385 = smul.addr %s34, 64
          %s4386 = scalar_lea.hbm %s15, %s4385
          %s4388 = sshll.u32 %s4378, 4
          %s4389 = int_to_ptr.vmem [resolvable:$true] %s4388
          %4391 = dma.vmem_to_hbm [thread:$0]  %s4389, 64, %s4386, %s4375
        $region116: #{_lambda_.1} parent=79 // pred_fallthru
          _
      $region80: #{_lambda_.1} parent=5 // pred_fallthru
        _
      %p4392 = scmp.le.s32.totalorder 2, %s29
      // Predicated region
      $region117: #{_lambda_.1} parent=5 // pred_check
        %p4393 = pneg %p4392
      $region118: #{_lambda_.1} parent=5 // pred_check_branch
        %4395 = sbr.rel (%p4393) target = $region120
      $region119: #{_lambda_.1} parent=5 // pred_region
        %s4396 = ssub.s32 %s29, 2
        // Predicated region
        $region121: #{_lambda_.1} parent=119 // pred_check
          %p4397 = pneg %p378
        $region122: #{_lambda_.1} parent=119 // pred_check_branch
          %4399 = sbr.rel (%p4397) target = $region124
        $region123: #{_lambda_.1} parent=119 // pred_region
          %s4400 = sand.u32 %s363, 1
          %s4401 = scalar_lea.sflag [#allocation5], %s4400
          %s4402 = sand.u32 %s363, 1
          %s4403 = smul.addr %s4402, 4
          %s4404 = scalar_lea.vmem [#allocation17], %s4403
          %4405 = dma.done %s4401, 64
        $region124: #{_lambda_.1} parent=119 // pred_fallthru
          _
      $region120: #{_lambda_.1} parent=5 // pred_fallthru
        _
    $region6: #{_lambda_.1} parent=1 // loop_footer
      %s33 = sadd.s32 1, %s29
    $region7: #{_lambda_.1} parent=1 // loop_footer_branch
      %28 = sbr.rel target = $region3
    $region8: #{_lambda_.1} parent=1 // loop_exit
      _
    %4406 = vsyncpa [#allocation4], 1
    %s4407 = scalar_lea.sflag [#allocation4], 1
    %4408 = vsyncpa %s4407, 1
    %4409 = vsyncpa [#allocation8], 1
    %4410 = vsyncpa [#allocation11], 1
    %4411 = vsyncpa [#allocation14], 1
    %4412 = vsyncpa [#allocation5], 1
    %s4413 = scalar_lea.sflag [#allocation5], 1
    %4414 = vsyncpa %s4413, 1
    %4415 = vsyncpa [#allocation6], 1
    %s4416 = scalar_lea.sflag [#allocation6], 1
    %4417 = vsyncpa %s4416, 1

</llo_original>
